<compile_context>
chip_gen: v5e
topology: v5e:2x2
jax: 0.10.0
libtpu: 0.0.40
codegen_flags: <defaults>
</compile_context>

<pallas_src>
import jax
import jax.numpy as jnp
from jax.experimental import pallas as pl
from jax.experimental.pallas import tpu as pltpu

LEAKY_SLOPE = 0.01   # nn.LeakyReLU() default negative_slope
BN_EPS = 1e-5        # nn.BatchNorm2d default eps


def _conv_block_kernel(x_ref, w1_ref, s1_ref, b1_ref, w2_ref, s2_ref, b2_ref,
                       o_ref, pad_ref):
    """One batch element: two fused (conv3x3 + folded-BN + LeakyReLU) stages.

    x_ref  : (1, H, W, CK)   input, channels padded only to CK = max(Cin, Cout)
    w1_ref : (9, CK, CK)     bf16 taps (kh*3+kw); zero-padded rows/cols
    w2_ref : (9, CK, Cout)   bf16 taps; zero-padded rows
    s*_ref : (1, CK)/(1, Cout) folded BN scale (f32)
    b*_ref : (1, CK)/(1, Cout) folded BN bias  (f32)
    o_ref  : (1, H, W, Cout) exact-channel output (no 128-lane slab)
    pad_ref: (H+2, W+2, CK)  f32 halo scratch shared by BOTH stages
    """
    H = o_ref.shape[1]
    W = o_ref.shape[2]
    CK = pad_ref.shape[2]

    # Zero only the 1-pixel halo border; the interior is fully overwritten
    # below before it is read.  Done every step (not only on program_id==0) so
    # that megacore "parallel" partitioning of the batch axis — where a core's
    # program_id range may not include 0 — cannot leave a stale border.
    zrow = jnp.zeros((1, W + 2, CK), jnp.float32)
    zcol = jnp.zeros((H + 2, 1, CK), jnp.float32)
    pad_ref[0:1, :, :] = zrow
    pad_ref[H + 1:H + 2, :, :] = zrow
    pad_ref[:, 0:1, :] = zcol
    pad_ref[:, W + 1:W + 2, :] = zcol

    def conv_bn_lrelu(w_ref, s_ref, b_ref):
        co = w_ref.shape[2]
        acc = jnp.zeros((H * W, co), jnp.float32)
        # 9 shifted taps; bf16 operands, f32 accumulation on the MXU.
        # TODO(synk): collapse the 9 taps into a single K=9*CK im2col dot to
        # cut the MXU push count ~9x, and process H in 8-row strips so the
        # accumulator stays inside the 64-vreg file for large H*W.
        for kh in range(3):
            for kw in range(3):
                patch = pad_ref[kh:kh + H, kw:kw + W, :].reshape(H * W, CK)
                acc = acc + jnp.dot(patch.astype(jnp.bfloat16),
                                    w_ref[kh * 3 + kw],
                                    preferred_element_type=jnp.float32)
        y = acc * s_ref[...] + b_ref[...]
        return jnp.where(y >= 0, y, LEAKY_SLOPE * y)

    # ---- stage 1: conv + folded BN + LeakyReLU ----
    pad_ref[1:H + 1, 1:W + 1, :] = x_ref[0]
    y1 = conv_bn_lrelu(w1_ref, s1_ref, b1_ref)            # (H*W, CK)

    # Dropout(p) in eval mode is identity.
    # TODO(synk): stochastic Dropout / training-mode (batch-stats) BN.

    # ---- stage 2: intermediate never leaves VMEM; same halo scratch reused ----
    pad_ref[1:H + 1, 1:W + 1, :] = y1.reshape(H, W, CK)
    y2 = conv_bn_lrelu(w2_ref, s2_ref, b2_ref)             # (H*W, Cout)

    o_ref[...] = y2.reshape(1, H, W, o_ref.shape[3]).astype(o_ref.dtype)


def _fold_bn(conv_bias, gamma, beta, mean, var, eps=BN_EPS):
    """Fold conv bias + eval-mode BatchNorm into per-channel scale/bias."""
    scale = gamma / jnp.sqrt(var + eps)
    bias = beta + scale * (conv_bias - mean)
    return scale, bias


def _prep_weight(w_hwio, ck_in, co_out):
    """(3,3,Ci,Co) -> zero-pad Ci->ck_in, Co->co_out -> (9, ck_in, co_out) bf16."""
    kh, kw, ci, co = w_hwio.shape
    w = jnp.pad(w_hwio, ((0, 0), (0, 0), (0, ck_in - ci), (0, co_out - co)))
    return w.reshape(kh * kw, ck_in, co_out).astype(jnp.bfloat16)


def _prep_vec(v, n):
    """(C,) -> zero-pad to n -> (1, n) f32."""
    return jnp.pad(v, (0, n - v.shape[0])).reshape(1, n).astype(jnp.float32)


def conv_block_forward(x_nchw, params):
    """Full ConvBlock forward (eval mode). x_nchw: (N,Cin,H,W) -> (N,Cout,H,W)."""
    N, Cin, H, W = x_nchw.shape
    Cout = params["w1"].shape[-1]
    CK = max(Cin, Cout)          # shared working channel width (NOT 128)

    # NCHW -> NHWC once at the module boundary; pad channels only up to CK
    # (4 -> 8 here), never to 128 lanes.
    x = jnp.transpose(x_nchw, (0, 2, 3, 1)).astype(jnp.float32)
    if Cin < CK:
        x = jnp.pad(x, ((0, 0), (0, 0), (0, 0), (0, CK - Cin)))

    w1 = _prep_weight(params["w1"], CK, CK)      # zero pad rows/cols -> safe
    w2 = _prep_weight(params["w2"], CK, Cout)
    s1, b1 = _fold_bn(params["b1"], params["gamma1"], params["beta1"],
                      params["mean1"], params["var1"])
    s2, b2 = _fold_bn(params["b2"], params["gamma2"], params["beta2"],
                      params["mean2"], params["var2"])
    s1, b1 = _prep_vec(s1, CK), _prep_vec(b1, CK)
    s2, b2 = _prep_vec(s2, Cout), _prep_vec(b2, Cout)

    # Rough per-step VMEM footprint (lane dim is physically padded to 128):
    # halo scratch + double-buffered input/output blocks.  Only raise the
    # scoped limit when it is actually needed.
    def _rnd(a, m):
        return (a + m - 1) // m * m
    vmem_est = 4 * ((H + 2) * _rnd(W + 2, 8) * 128      # halo scratch
                    + 2 * H * _rnd(W, 8) * 128          # input double-buffer
                    + 2 * H * _rnd(W, 8) * 128)         # output double-buffer
    cp = dict(dimension_semantics=("parallel",))
    if vmem_est > 24 * 1024 * 1024:
        # TODO(synk): for large H*W, switch to an H-strip grid axis with a
        # 2-row halo (and per-generation strip sizing for v7x's 64 MiB VMEM)
        # instead of only raising the limit.
        cp["vmem_limit_bytes"] = int(min(vmem_est * 2, 96 * 1024 * 1024))

    out = pl.pallas_call(
        _conv_block_kernel,
        out_shape=jax.ShapeDtypeStruct((N, H, W, Cout), jnp.float32),
        grid_spec=pltpu.PrefetchScalarGridSpec(
            num_scalar_prefetch=0,
            grid=(N,),
            in_specs=[
                pl.BlockSpec((1, H, W, CK), lambda n: (n, 0, 0, 0)),
                # weights / folded-BN params: tiny, grid-invariant
                pl.BlockSpec((9, CK, CK), lambda n: (0, 0, 0)),
                pl.BlockSpec((1, CK), lambda n: (0, 0)),
                pl.BlockSpec((1, CK), lambda n: (0, 0)),
                pl.BlockSpec((9, CK, Cout), lambda n: (0, 0, 0)),
                pl.BlockSpec((1, Cout), lambda n: (0, 0)),
                pl.BlockSpec((1, Cout), lambda n: (0, 0)),
            ],
            out_specs=pl.BlockSpec((1, H, W, Cout), lambda n: (n, 0, 0, 0)),
            scratch_shapes=[
                pltpu.VMEM((H + 2, W + 2, CK), jnp.float32),  # shared halo
            ],
        ),
        compiler_params=pltpu.CompilerParams(**cp),
    )(x, w1, s1, b1, w2, s2, b2)

    # Back to NCHW at the module boundary (no padded-lane slice pass anymore).
    return jnp.transpose(out, (0, 3, 1, 2))


def _reference_forward(x_nchw, params):
    """Plain-JAX reference.  Conv operands are rounded to bf16 to mirror the
    kernel's MXU dtype (accumulation stays f32); everything else is f32."""
    def conv_bn_lrelu_ref(x, w_hwio, conv_b, gamma, beta, mean, var):
        xb = x.astype(jnp.bfloat16).astype(jnp.float32)
        wb = w_hwio.astype(jnp.bfloat16).astype(jnp.float32)
        y = jax.lax.conv_general_dilated(
            xb, wb, window_strides=(1, 1), padding="SAME",
            dimension_numbers=("NCHW", "HWIO", "NCHW"))
        y = y + conv_b[None, :, None, None]
        y = gamma[None, :, None, None] * (y - mean[None, :, None, None]) / \
            jnp.sqrt(var[None, :, None, None] + BN_EPS) + beta[None, :, None, None]
        return jnp.where(y >= 0, y, LEAKY_SLOPE * y)

    y = conv_bn_lrelu_ref(x_nchw, params["w1"], params["b1"], params["gamma1"],
                          params["beta1"], params["mean1"], params["var1"])
    y = conv_bn_lrelu_ref(y, params["w2"], params["b2"], params["gamma2"],
                          params["beta2"], params["mean2"], params["var2"])
    return y


def make_params(key, in_channels, out_channels):
    ks = jax.random.split(key, 8)
    fan1 = in_channels * 9
    fan2 = out_channels * 9
    return {
        # conv weights in HWIO layout
        "w1": jax.random.normal(ks[0], (3, 3, in_channels, out_channels),
                                jnp.float32) / jnp.sqrt(fan1),
        "b1": jax.random.normal(ks[1], (out_channels,), jnp.float32) * 0.05,
        "gamma1": 1.0 + 0.1 * jax.random.normal(ks[2], (out_channels,), jnp.float32),
        "beta1": 0.1 * jax.random.normal(ks[3], (out_channels,), jnp.float32),
        "mean1": jnp.zeros((out_channels,), jnp.float32),
        "var1": jnp.ones((out_channels,), jnp.float32),
        "w2": jax.random.normal(ks[4], (3, 3, out_channels, out_channels),
                                jnp.float32) / jnp.sqrt(fan2),
        "b2": jax.random.normal(ks[5], (out_channels,), jnp.float32) * 0.05,
        "gamma2": 1.0 + 0.1 * jax.random.normal(ks[6], (out_channels,), jnp.float32),
        "beta2": 0.1 * jax.random.normal(ks[7], (out_channels,), jnp.float32),
        "mean2": jnp.zeros((out_channels,), jnp.float32),
        "var2": jnp.ones((out_channels,), jnp.float32),
    }


if __name__ == "__main__":
    key = jax.random.PRNGKey(0)
    k_x, k_p = jax.random.split(key)

    N, Cin, H, W = 2, 4, 16, 16
    Cout = 8
    dropout_p = 0.1  # eval mode -> identity

    x = jax.random.normal(k_x, (N, Cin, H, W), jnp.float32)
    params = make_params(k_p, Cin, Cout)

    out = jax.block_until_ready(conv_block_forward(x, params))
    ref = jax.block_until_ready(_reference_forward(x, params))

    assert out.shape == (N, Cout, H, W)
    # bf16 MXU operands -> tolerance loosened vs. the pure-f32 check.
    assert jnp.allclose(out, ref, atol=1e-2, rtol=1e-2), \
        float(jnp.max(jnp.abs(out - ref)))

    print("KERNEL_OK")
</pallas_src>

<mosaic_0001>
module attributes {stable_mosaic.version = 11 : i64} {
  func.func @_conv_block_kernel(%arg0: i32, %arg1: memref<1x16x16x8xf32, #tpu.memory_space<vmem>>, %arg2: memref<9x8x8xbf16, #tpu.memory_space<vmem>>, %arg3: memref<1x8xf32, #tpu.memory_space<vmem>>, %arg4: memref<1x8xf32, #tpu.memory_space<vmem>>, %arg5: memref<9x8x8xbf16, #tpu.memory_space<vmem>>, %arg6: memref<1x8xf32, #tpu.memory_space<vmem>>, %arg7: memref<1x8xf32, #tpu.memory_space<vmem>>, %arg8: memref<1x16x16x8xf32, #tpu.memory_space<vmem>>, %arg9: memref<18x18x8xf32, #tpu.memory_space<vmem>>) attributes {dimension_semantics = [#tpu.dimension_semantics<parallel>], iteration_bounds = array<i64: 2>, scalar_prefetch = 0 : i64, scratch_operands = 1 : i64, tpu.core_type = #tpu.core_type<tc>, window_params = [{transform_indices = @transform_0, window_bounds = array<i64: 1, 16, 16, 8>}, {pipeline_mode = #tpu.pipeline_mode<synchronous>, transform_indices = @transform_1, window_bounds = array<i64: 9, 8, 8>}, {pipeline_mode = #tpu.pipeline_mode<synchronous>, transform_indices = @transform_2, window_bounds = array<i64: 1, 8>}, {pipeline_mode = #tpu.pipeline_mode<synchronous>, transform_indices = @transform_3, window_bounds = array<i64: 1, 8>}, {pipeline_mode = #tpu.pipeline_mode<synchronous>, transform_indices = @transform_4, window_bounds = array<i64: 9, 8, 8>}, {pipeline_mode = #tpu.pipeline_mode<synchronous>, transform_indices = @transform_5, window_bounds = array<i64: 1, 8>}, {pipeline_mode = #tpu.pipeline_mode<synchronous>, transform_indices = @transform_6, window_bounds = array<i64: 1, 8>}, {transform_indices = @transform_7, window_bounds = array<i64: 1, 16, 16, 8>}]} {
    %cst = arith.constant 0.000000e+00 : f32
    %0 = vector.broadcast %cst : f32 to vector<1x18x8xf32>
    %cst_0 = arith.constant 0.000000e+00 : f32
    %1 = vector.broadcast %cst_0 : f32 to vector<18x1x8xf32>
    %c0 = arith.constant 0 : index
    %c0_1 = arith.constant 0 : index
    %c0_2 = arith.constant 0 : index
    %2 = vector.load %arg9[%c0, %c0_1, %c0_2] : memref<18x18x8xf32, #tpu.memory_space<vmem>>, vector<1x18x8xf32>
    tpu.vector_store %arg9[%c0, %c0_1, %c0_2], %0 {strides = array<i32>} : memref<18x18x8xf32, #tpu.memory_space<vmem>>, vector<1x18x8xf32>,
    %c17 = arith.constant 17 : index
    %c0_3 = arith.constant 0 : index
    %c0_4 = arith.constant 0 : index
    %3 = vector.load %arg9[%c17, %c0_3, %c0_4] : memref<18x18x8xf32, #tpu.memory_space<vmem>>, vector<1x18x8xf32>
    tpu.vector_store %arg9[%c17, %c0_3, %c0_4], %0 {strides = array<i32>} : memref<18x18x8xf32, #tpu.memory_space<vmem>>, vector<1x18x8xf32>,
    %c0_5 = arith.constant 0 : index
    %c0_6 = arith.constant 0 : index
    %c0_7 = arith.constant 0 : index
    %4 = vector.load %arg9[%c0_5, %c0_6, %c0_7] : memref<18x18x8xf32, #tpu.memory_space<vmem>>, vector<18x1x8xf32>
    tpu.vector_store %arg9[%c0_5, %c0_6, %c0_7], %1 {strides = array<i32>} : memref<18x18x8xf32, #tpu.memory_space<vmem>>, vector<18x1x8xf32>,
    %c0_8 = arith.constant 0 : index
    %c17_9 = arith.constant 17 : index
    %c0_10 = arith.constant 0 : index
    %5 = vector.load %arg9[%c0_8, %c17_9, %c0_10] : memref<18x18x8xf32, #tpu.memory_space<vmem>>, vector<18x1x8xf32>
    tpu.vector_store %arg9[%c0_8, %c17_9, %c0_10], %1 {strides = array<i32>} : memref<18x18x8xf32, #tpu.memory_space<vmem>>, vector<18x1x8xf32>,
    %c0_11 = arith.constant 0 : index
    %c0_12 = arith.constant 0 : index
    %c0_13 = arith.constant 0 : index
    %c0_14 = arith.constant 0 : index
    %6 = vector.load %arg1[%c0_11, %c0_12, %c0_13, %c0_14] : memref<1x16x16x8xf32, #tpu.memory_space<vmem>>, vector<1x16x16x8xf32>
    %7 = vector.shape_cast %6 : vector<1x16x16x8xf32> to vector<16x16x8xf32>
    %c1 = arith.constant 1 : index
    %c1_15 = arith.constant 1 : index
    %c0_16 = arith.constant 0 : index
    %8 = vector.load %arg9[%c1, %c1_15, %c0_16] : memref<18x18x8xf32, #tpu.memory_space<vmem>>, vector<16x16x8xf32>
    tpu.vector_store %arg9[%c1, %c1_15, %c0_16], %7 {strides = array<i32>} : memref<18x18x8xf32, #tpu.memory_space<vmem>>, vector<16x16x8xf32>,
    %cst_17 = arith.constant 0.000000e+00 : f32
    %9 = vector.broadcast %cst_17 : f32 to vector<256x8xf32>
    %c0_18 = arith.constant 0 : index
    %c0_19 = arith.constant 0 : index
    %c0_20 = arith.constant 0 : index
    %10 = vector.load %arg9[%c0_18, %c0_19, %c0_20] : memref<18x18x8xf32, #tpu.memory_space<vmem>>, vector<16x16x8xf32>
    %11 = vector.shape_cast %10 : vector<16x16x8xf32> to vector<256x8xf32>
    %12 = arith.truncf %11 : vector<256x8xf32> to vector<256x8xbf16>
    %c0_21 = arith.constant 0 : index
    %c0_22 = arith.constant 0 : index
    %c0_23 = arith.constant 0 : index
    %13 = vector.load %arg2[%c0_21, %c0_22, %c0_23] : memref<9x8x8xbf16, #tpu.memory_space<vmem>>, vector<1x8x8xbf16>
    %14 = vector.shape_cast %13 : vector<1x8x8xbf16> to vector<8x8xbf16>
    %cst_24 = arith.constant dense<0.000000e+00> : vector<256x8xf32>
    %15 = tpu.matmul %12, %14, %cst_24 {dimension_numbers = #tpu.dot_dimension_numbers<[1], [0], [0], [1], [0, 0, 1, 1], [], []>} : vector<256x8xbf16>, vector<8x8xbf16>, vector<256x8xf32> -> vector<256x8xf32>
    %16 = arith.addf %9, %15 : vector<256x8xf32>
    %c0_25 = arith.constant 0 : index
    %c1_26 = arith.constant 1 : index
    %c0_27 = arith.constant 0 : index
    %17 = vector.load %arg9[%c0_25, %c1_26, %c0_27] : memref<18x18x8xf32, #tpu.memory_space<vmem>>, vector<16x16x8xf32>
    %18 = vector.shape_cast %17 : vector<16x16x8xf32> to vector<256x8xf32>
    %19 = arith.truncf %18 : vector<256x8xf32> to vector<256x8xbf16>
    %c1_28 = arith.constant 1 : index
    %c0_29 = arith.constant 0 : index
    %c0_30 = arith.constant 0 : index
    %20 = vector.load %arg2[%c1_28, %c0_29, %c0_30] : memref<9x8x8xbf16, #tpu.memory_space<vmem>>, vector<1x8x8xbf16>
    %21 = vector.shape_cast %20 : vector<1x8x8xbf16> to vector<8x8xbf16>
    %cst_31 = arith.constant dense<0.000000e+00> : vector<256x8xf32>
    %22 = tpu.matmul %19, %21, %cst_31 {dimension_numbers = #tpu.dot_dimension_numbers<[1], [0], [0], [1], [0, 0, 1, 1], [], []>} : vector<256x8xbf16>, vector<8x8xbf16>, vector<256x8xf32> -> vector<256x8xf32>
    %23 = arith.addf %16, %22 : vector<256x8xf32>
    %c0_32 = arith.constant 0 : index
    %c2 = arith.constant 2 : index
    %c0_33 = arith.constant 0 : index
    %24 = vector.load %arg9[%c0_32, %c2, %c0_33] : memref<18x18x8xf32, #tpu.memory_space<vmem>>, vector<16x16x8xf32>
    %25 = vector.shape_cast %24 : vector<16x16x8xf32> to vector<256x8xf32>
    %26 = arith.truncf %25 : vector<256x8xf32> to vector<256x8xbf16>
    %c2_34 = arith.constant 2 : index
    %c0_35 = arith.constant 0 : index
    %c0_36 = arith.constant 0 : index
    %27 = vector.load %arg2[%c2_34, %c0_35, %c0_36] : memref<9x8x8xbf16, #tpu.memory_space<vmem>>, vector<1x8x8xbf16>
    %28 = vector.shape_cast %27 : vector<1x8x8xbf16> to vector<8x8xbf16>
    %cst_37 = arith.constant dense<0.000000e+00> : vector<256x8xf32>
    %29 = tpu.matmul %26, %28, %cst_37 {dimension_numbers = #tpu.dot_dimension_numbers<[1], [0], [0], [1], [0, 0, 1, 1], [], []>} : vector<256x8xbf16>, vector<8x8xbf16>, vector<256x8xf32> -> vector<256x8xf32>
    %30 = arith.addf %23, %29 : vector<256x8xf32>
    %c1_38 = arith.constant 1 : index
    %c0_39 = arith.constant 0 : index
    %c0_40 = arith.constant 0 : index
    %31 = vector.load %arg9[%c1_38, %c0_39, %c0_40] : memref<18x18x8xf32, #tpu.memory_space<vmem>>, vector<16x16x8xf32>
    %32 = vector.shape_cast %31 : vector<16x16x8xf32> to vector<256x8xf32>
    %33 = arith.truncf %32 : vector<256x8xf32> to vector<256x8xbf16>
    %c3 = arith.constant 3 : index
    %c0_41 = arith.constant 0 : index
    %c0_42 = arith.constant 0 : index
    %34 = vector.load %arg2[%c3, %c0_41, %c0_42] : memref<9x8x8xbf16, #tpu.memory_space<vmem>>, vector<1x8x8xbf16>
    %35 = vector.shape_cast %34 : vector<1x8x8xbf16> to vector<8x8xbf16>
    %cst_43 = arith.constant dense<0.000000e+00> : vector<256x8xf32>
    %36 = tpu.matmul %33, %35, %cst_43 {dimension_numbers = #tpu.dot_dimension_numbers<[1], [0], [0], [1], [0, 0, 1, 1], [], []>} : vector<256x8xbf16>, vector<8x8xbf16>, vector<256x8xf32> -> vector<256x8xf32>
    %37 = arith.addf %30, %36 : vector<256x8xf32>
    %c1_44 = arith.constant 1 : index
    %c1_45 = arith.constant 1 : index
    %c0_46 = arith.constant 0 : index
    %38 = vector.load %arg9[%c1_44, %c1_45, %c0_46] : memref<18x18x8xf32, #tpu.memory_space<vmem>>, vector<16x16x8xf32>
    %39 = vector.shape_cast %38 : vector<16x16x8xf32> to vector<256x8xf32>
    %40 = arith.truncf %39 : vector<256x8xf32> to vector<256x8xbf16>
    %c4 = arith.constant 4 : index
    %c0_47 = arith.constant 0 : index
    %c0_48 = arith.constant 0 : index
    %41 = vector.load %arg2[%c4, %c0_47, %c0_48] : memref<9x8x8xbf16, #tpu.memory_space<vmem>>, vector<1x8x8xbf16>
    %42 = vector.shape_cast %41 : vector<1x8x8xbf16> to vector<8x8xbf16>
    %cst_49 = arith.constant dense<0.000000e+00> : vector<256x8xf32>
    %43 = tpu.matmul %40, %42, %cst_49 {dimension_numbers = #tpu.dot_dimension_numbers<[1], [0], [0], [1], [0, 0, 1, 1], [], []>} : vector<256x8xbf16>, vector<8x8xbf16>, vector<256x8xf32> -> vector<256x8xf32>
    %44 = arith.addf %37, %43 : vector<256x8xf32>
    %c1_50 = arith.constant 1 : index
    %c2_51 = arith.constant 2 : index
    %c0_52 = arith.constant 0 : index
    %45 = vector.load %arg9[%c1_50, %c2_51, %c0_52] : memref<18x18x8xf32, #tpu.memory_space<vmem>>, vector<16x16x8xf32>
    %46 = vector.shape_cast %45 : vector<16x16x8xf32> to vector<256x8xf32>
    %47 = arith.truncf %46 : vector<256x8xf32> to vector<256x8xbf16>
    %c5 = arith.constant 5 : index
    %c0_53 = arith.constant 0 : index
    %c0_54 = arith.constant 0 : index
    %48 = vector.load %arg2[%c5, %c0_53, %c0_54] : memref<9x8x8xbf16, #tpu.memory_space<vmem>>, vector<1x8x8xbf16>
    %49 = vector.shape_cast %48 : vector<1x8x8xbf16> to vector<8x8xbf16>
    %cst_55 = arith.constant dense<0.000000e+00> : vector<256x8xf32>
    %50 = tpu.matmul %47, %49, %cst_55 {dimension_numbers = #tpu.dot_dimension_numbers<[1], [0], [0], [1], [0, 0, 1, 1], [], []>} : vector<256x8xbf16>, vector<8x8xbf16>, vector<256x8xf32> -> vector<256x8xf32>
    %51 = arith.addf %44, %50 : vector<256x8xf32>
    %c2_56 = arith.constant 2 : index
    %c0_57 = arith.constant 0 : index
    %c0_58 = arith.constant 0 : index
    %52 = vector.load %arg9[%c2_56, %c0_57, %c0_58] : memref<18x18x8xf32, #tpu.memory_space<vmem>>, vector<16x16x8xf32>
    %53 = vector.shape_cast %52 : vector<16x16x8xf32> to vector<256x8xf32>
    %54 = arith.truncf %53 : vector<256x8xf32> to vector<256x8xbf16>
    %c6 = arith.constant 6 : index
    %c0_59 = arith.constant 0 : index
    %c0_60 = arith.constant 0 : index
    %55 = vector.load %arg2[%c6, %c0_59, %c0_60] : memref<9x8x8xbf16, #tpu.memory_space<vmem>>, vector<1x8x8xbf16>
    %56 = vector.shape_cast %55 : vector<1x8x8xbf16> to vector<8x8xbf16>
    %cst_61 = arith.constant dense<0.000000e+00> : vector<256x8xf32>
    %57 = tpu.matmul %54, %56, %cst_61 {dimension_numbers = #tpu.dot_dimension_numbers<[1], [0], [0], [1], [0, 0, 1, 1], [], []>} : vector<256x8xbf16>, vector<8x8xbf16>, vector<256x8xf32> -> vector<256x8xf32>
    %58 = arith.addf %51, %57 : vector<256x8xf32>
    %c2_62 = arith.constant 2 : index
    %c1_63 = arith.constant 1 : index
    %c0_64 = arith.constant 0 : index
    %59 = vector.load %arg9[%c2_62, %c1_63, %c0_64] : memref<18x18x8xf32, #tpu.memory_space<vmem>>, vector<16x16x8xf32>
    %60 = vector.shape_cast %59 : vector<16x16x8xf32> to vector<256x8xf32>
    %61 = arith.truncf %60 : vector<256x8xf32> to vector<256x8xbf16>
    %c7 = arith.constant 7 : index
    %c0_65 = arith.constant 0 : index
    %c0_66 = arith.constant 0 : index
    %62 = vector.load %arg2[%c7, %c0_65, %c0_66] : memref<9x8x8xbf16, #tpu.memory_space<vmem>>, vector<1x8x8xbf16>
    %63 = vector.shape_cast %62 : vector<1x8x8xbf16> to vector<8x8xbf16>
    %cst_67 = arith.constant dense<0.000000e+00> : vector<256x8xf32>
    %64 = tpu.matmul %61, %63, %cst_67 {dimension_numbers = #tpu.dot_dimension_numbers<[1], [0], [0], [1], [0, 0, 1, 1], [], []>} : vector<256x8xbf16>, vector<8x8xbf16>, vector<256x8xf32> -> vector<256x8xf32>
    %65 = arith.addf %58, %64 : vector<256x8xf32>
    %c2_68 = arith.constant 2 : index
    %c2_69 = arith.constant 2 : index
    %c0_70 = arith.constant 0 : index
    %66 = vector.load %arg9[%c2_68, %c2_69, %c0_70] : memref<18x18x8xf32, #tpu.memory_space<vmem>>, vector<16x16x8xf32>
    %67 = vector.shape_cast %66 : vector<16x16x8xf32> to vector<256x8xf32>
    %68 = arith.truncf %67 : vector<256x8xf32> to vector<256x8xbf16>
    %c8 = arith.constant 8 : index
    %c0_71 = arith.constant 0 : index
    %c0_72 = arith.constant 0 : index
    %69 = vector.load %arg2[%c8, %c0_71, %c0_72] : memref<9x8x8xbf16, #tpu.memory_space<vmem>>, vector<1x8x8xbf16>
    %70 = vector.shape_cast %69 : vector<1x8x8xbf16> to vector<8x8xbf16>
    %cst_73 = arith.constant dense<0.000000e+00> : vector<256x8xf32>
    %71 = tpu.matmul %68, %70, %cst_73 {dimension_numbers = #tpu.dot_dimension_numbers<[1], [0], [0], [1], [0, 0, 1, 1], [], []>} : vector<256x8xbf16>, vector<8x8xbf16>, vector<256x8xf32> -> vector<256x8xf32>
    %72 = arith.addf %65, %71 : vector<256x8xf32>
    %c0_74 = arith.constant 0 : index
    %c0_75 = arith.constant 0 : index
    %73 = vector.load %arg3[%c0_74, %c0_75] : memref<1x8xf32, #tpu.memory_space<vmem>>, vector<1x8xf32>
    %74 = vector.broadcast %73 : vector<1x8xf32> to vector<256x8xf32>
    %75 = arith.mulf %72, %74 : vector<256x8xf32>
    %c0_76 = arith.constant 0 : index
    %c0_77 = arith.constant 0 : index
    %76 = vector.load %arg4[%c0_76, %c0_77] : memref<1x8xf32, #tpu.memory_space<vmem>>, vector<1x8xf32>
    %77 = vector.broadcast %76 : vector<1x8xf32> to vector<256x8xf32>
    %78 = arith.addf %75, %77 : vector<256x8xf32>
    %cst_78 = arith.constant 0.000000e+00 : f32
    %79 = vector.broadcast %cst_78 : f32 to vector<256x8xf32>
    %80 = arith.cmpf oge, %78, %79 : vector<256x8xf32>
    %cst_79 = arith.constant 0.00999999977 : f32
    %81 = vector.broadcast %cst_79 : f32 to vector<256x8xf32>
    %82 = arith.mulf %81, %78 : vector<256x8xf32>
    %83 = arith.select %80, %78, %82 : vector<256x8xi1>, vector<256x8xf32>
    %84 = vector.shape_cast %83 : vector<256x8xf32> to vector<16x16x8xf32>
    %c1_80 = arith.constant 1 : index
    %c1_81 = arith.constant 1 : index
    %c0_82 = arith.constant 0 : index
    %85 = vector.load %arg9[%c1_80, %c1_81, %c0_82] : memref<18x18x8xf32, #tpu.memory_space<vmem>>, vector<16x16x8xf32>
    tpu.vector_store %arg9[%c1_80, %c1_81, %c0_82], %84 {strides = array<i32>} : memref<18x18x8xf32, #tpu.memory_space<vmem>>, vector<16x16x8xf32>,
    %cst_83 = arith.constant 0.000000e+00 : f32
    %86 = vector.broadcast %cst_83 : f32 to vector<256x8xf32>
    %c0_84 = arith.constant 0 : index
    %c0_85 = arith.constant 0 : index
    %c0_86 = arith.constant 0 : index
    %87 = vector.load %arg9[%c0_84, %c0_85, %c0_86] : memref<18x18x8xf32, #tpu.memory_space<vmem>>, vector<16x16x8xf32>
    %88 = vector.shape_cast %87 : vector<16x16x8xf32> to vector<256x8xf32>
    %89 = arith.truncf %88 : vector<256x8xf32> to vector<256x8xbf16>
    %c0_87 = arith.constant 0 : index
    %c0_88 = arith.constant 0 : index
    %c0_89 = arith.constant 0 : index
    %90 = vector.load %arg5[%c0_87, %c0_88, %c0_89] : memref<9x8x8xbf16, #tpu.memory_space<vmem>>, vector<1x8x8xbf16>
    %91 = vector.shape_cast %90 : vector<1x8x8xbf16> to vector<8x8xbf16>
    %cst_90 = arith.constant dense<0.000000e+00> : vector<256x8xf32>
    %92 = tpu.matmul %89, %91, %cst_90 {dimension_numbers = #tpu.dot_dimension_numbers<[1], [0], [0], [1], [0, 0, 1, 1], [], []>} : vector<256x8xbf16>, vector<8x8xbf16>, vector<256x8xf32> -> vector<256x8xf32>
    %93 = arith.addf %86, %92 : vector<256x8xf32>
    %c0_91 = arith.constant 0 : index
    %c1_92 = arith.constant 1 : index
    %c0_93 = arith.constant 0 : index
    %94 = vector.load %arg9[%c0_91, %c1_92, %c0_93] : memref<18x18x8xf32, #tpu.memory_space<vmem>>, vector<16x16x8xf32>
    %95 = vector.shape_cast %94 : vector<16x16x8xf32> to vector<256x8xf32>
    %96 = arith.truncf %95 : vector<256x8xf32> to vector<256x8xbf16>
    %c1_94 = arith.constant 1 : index
    %c0_95 = arith.constant 0 : index
    %c0_96 = arith.constant 0 : index
    %97 = vector.load %arg5[%c1_94, %c0_95, %c0_96] : memref<9x8x8xbf16, #tpu.memory_space<vmem>>, vector<1x8x8xbf16>
    %98 = vector.shape_cast %97 : vector<1x8x8xbf16> to vector<8x8xbf16>
    %cst_97 = arith.constant dense<0.000000e+00> : vector<256x8xf32>
    %99 = tpu.matmul %96, %98, %cst_97 {dimension_numbers = #tpu.dot_dimension_numbers<[1], [0], [0], [1], [0, 0, 1, 1], [], []>} : vector<256x8xbf16>, vector<8x8xbf16>, vector<256x8xf32> -> vector<256x8xf32>
    %100 = arith.addf %93, %99 : vector<256x8xf32>
    %c0_98 = arith.constant 0 : index
    %c2_99 = arith.constant 2 : index
    %c0_100 = arith.constant 0 : index
    %101 = vector.load %arg9[%c0_98, %c2_99, %c0_100] : memref<18x18x8xf32, #tpu.memory_space<vmem>>, vector<16x16x8xf32>
    %102 = vector.shape_cast %101 : vector<16x16x8xf32> to vector<256x8xf32>
    %103 = arith.truncf %102 : vector<256x8xf32> to vector<256x8xbf16>
    %c2_101 = arith.constant 2 : index
    %c0_102 = arith.constant 0 : index
    %c0_103 = arith.constant 0 : index
    %104 = vector.load %arg5[%c2_101, %c0_102, %c0_103] : memref<9x8x8xbf16, #tpu.memory_space<vmem>>, vector<1x8x8xbf16>
    %105 = vector.shape_cast %104 : vector<1x8x8xbf16> to vector<8x8xbf16>
    %cst_104 = arith.constant dense<0.000000e+00> : vector<256x8xf32>
    %106 = tpu.matmul %103, %105, %cst_104 {dimension_numbers = #tpu.dot_dimension_numbers<[1], [0], [0], [1], [0, 0, 1, 1], [], []>} : vector<256x8xbf16>, vector<8x8xbf16>, vector<256x8xf32> -> vector<256x8xf32>
    %107 = arith.addf %100, %106 : vector<256x8xf32>
    %c1_105 = arith.constant 1 : index
    %c0_106 = arith.constant 0 : index
    %c0_107 = arith.constant 0 : index
    %108 = vector.load %arg9[%c1_105, %c0_106, %c0_107] : memref<18x18x8xf32, #tpu.memory_space<vmem>>, vector<16x16x8xf32>
    %109 = vector.shape_cast %108 : vector<16x16x8xf32> to vector<256x8xf32>
    %110 = arith.truncf %109 : vector<256x8xf32> to vector<256x8xbf16>
    %c3_108 = arith.constant 3 : index
    %c0_109 = arith.constant 0 : index
    %c0_110 = arith.constant 0 : index
    %111 = vector.load %arg5[%c3_108, %c0_109, %c0_110] : memref<9x8x8xbf16, #tpu.memory_space<vmem>>, vector<1x8x8xbf16>
    %112 = vector.shape_cast %111 : vector<1x8x8xbf16> to vector<8x8xbf16>
    %cst_111 = arith.constant dense<0.000000e+00> : vector<256x8xf32>
    %113 = tpu.matmul %110, %112, %cst_111 {dimension_numbers = #tpu.dot_dimension_numbers<[1], [0], [0], [1], [0, 0, 1, 1], [], []>} : vector<256x8xbf16>, vector<8x8xbf16>, vector<256x8xf32> -> vector<256x8xf32>
    %114 = arith.addf %107, %113 : vector<256x8xf32>
    %c1_112 = arith.constant 1 : index
    %c1_113 = arith.constant 1 : index
    %c0_114 = arith.constant 0 : index
    %115 = vector.load %arg9[%c1_112, %c1_113, %c0_114] : memref<18x18x8xf32, #tpu.memory_space<vmem>>, vector<16x16x8xf32>
    %116 = vector.shape_cast %115 : vector<16x16x8xf32> to vector<256x8xf32>
    %117 = arith.truncf %116 : vector<256x8xf32> to vector<256x8xbf16>
    %c4_115 = arith.constant 4 : index
    %c0_116 = arith.constant 0 : index
    %c0_117 = arith.constant 0 : index
    %118 = vector.load %arg5[%c4_115, %c0_116, %c0_117] : memref<9x8x8xbf16, #tpu.memory_space<vmem>>, vector<1x8x8xbf16>
    %119 = vector.shape_cast %118 : vector<1x8x8xbf16> to vector<8x8xbf16>
    %cst_118 = arith.constant dense<0.000000e+00> : vector<256x8xf32>
    %120 = tpu.matmul %117, %119, %cst_118 {dimension_numbers = #tpu.dot_dimension_numbers<[1], [0], [0], [1], [0, 0, 1, 1], [], []>} : vector<256x8xbf16>, vector<8x8xbf16>, vector<256x8xf32> -> vector<256x8xf32>
    %121 = arith.addf %114, %120 : vector<256x8xf32>
    %c1_119 = arith.constant 1 : index
    %c2_120 = arith.constant 2 : index
    %c0_121 = arith.constant 0 : index
    %122 = vector.load %arg9[%c1_119, %c2_120, %c0_121] : memref<18x18x8xf32, #tpu.memory_space<vmem>>, vector<16x16x8xf32>
    %123 = vector.shape_cast %122 : vector<16x16x8xf32> to vector<256x8xf32>
    %124 = arith.truncf %123 : vector<256x8xf32> to vector<256x8xbf16>
    %c5_122 = arith.constant 5 : index
    %c0_123 = arith.constant 0 : index
    %c0_124 = arith.constant 0 : index
    %125 = vector.load %arg5[%c5_122, %c0_123, %c0_124] : memref<9x8x8xbf16, #tpu.memory_space<vmem>>, vector<1x8x8xbf16>
    %126 = vector.shape_cast %125 : vector<1x8x8xbf16> to vector<8x8xbf16>
    %cst_125 = arith.constant dense<0.000000e+00> : vector<256x8xf32>
    %127 = tpu.matmul %124, %126, %cst_125 {dimension_numbers = #tpu.dot_dimension_numbers<[1], [0], [0], [1], [0, 0, 1, 1], [], []>} : vector<256x8xbf16>, vector<8x8xbf16>, vector<256x8xf32> -> vector<256x8xf32>
    %128 = arith.addf %121, %127 : vector<256x8xf32>
    %c2_126 = arith.constant 2 : index
    %c0_127 = arith.constant 0 : index
    %c0_128 = arith.constant 0 : index
    %129 = vector.load %arg9[%c2_126, %c0_127, %c0_128] : memref<18x18x8xf32, #tpu.memory_space<vmem>>, vector<16x16x8xf32>
    %130 = vector.shape_cast %129 : vector<16x16x8xf32> to vector<256x8xf32>
    %131 = arith.truncf %130 : vector<256x8xf32> to vector<256x8xbf16>
    %c6_129 = arith.constant 6 : index
    %c0_130 = arith.constant 0 : index
    %c0_131 = arith.constant 0 : index
    %132 = vector.load %arg5[%c6_129, %c0_130, %c0_131] : memref<9x8x8xbf16, #tpu.memory_space<vmem>>, vector<1x8x8xbf16>
    %133 = vector.shape_cast %132 : vector<1x8x8xbf16> to vector<8x8xbf16>
    %cst_132 = arith.constant dense<0.000000e+00> : vector<256x8xf32>
    %134 = tpu.matmul %131, %133, %cst_132 {dimension_numbers = #tpu.dot_dimension_numbers<[1], [0], [0], [1], [0, 0, 1, 1], [], []>} : vector<256x8xbf16>, vector<8x8xbf16>, vector<256x8xf32> -> vector<256x8xf32>
    %135 = arith.addf %128, %134 : vector<256x8xf32>
    %c2_133 = arith.constant 2 : index
    %c1_134 = arith.constant 1 : index
    %c0_135 = arith.constant 0 : index
    %136 = vector.load %arg9[%c2_133, %c1_134, %c0_135] : memref<18x18x8xf32, #tpu.memory_space<vmem>>, vector<16x16x8xf32>
    %137 = vector.shape_cast %136 : vector<16x16x8xf32> to vector<256x8xf32>
    %138 = arith.truncf %137 : vector<256x8xf32> to vector<256x8xbf16>
    %c7_136 = arith.constant 7 : index
    %c0_137 = arith.constant 0 : index
    %c0_138 = arith.constant 0 : index
    %139 = vector.load %arg5[%c7_136, %c0_137, %c0_138] : memref<9x8x8xbf16, #tpu.memory_space<vmem>>, vector<1x8x8xbf16>
    %140 = vector.shape_cast %139 : vector<1x8x8xbf16> to vector<8x8xbf16>
    %cst_139 = arith.constant dense<0.000000e+00> : vector<256x8xf32>
    %141 = tpu.matmul %138, %140, %cst_139 {dimension_numbers = #tpu.dot_dimension_numbers<[1], [0], [0], [1], [0, 0, 1, 1], [], []>} : vector<256x8xbf16>, vector<8x8xbf16>, vector<256x8xf32> -> vector<256x8xf32>
    %142 = arith.addf %135, %141 : vector<256x8xf32>
    %c2_140 = arith.constant 2 : index
    %c2_141 = arith.constant 2 : index
    %c0_142 = arith.constant 0 : index
    %143 = vector.load %arg9[%c2_140, %c2_141, %c0_142] : memref<18x18x8xf32, #tpu.memory_space<vmem>>, vector<16x16x8xf32>
    %144 = vector.shape_cast %143 : vector<16x16x8xf32> to vector<256x8xf32>
    %145 = arith.truncf %144 : vector<256x8xf32> to vector<256x8xbf16>
    %c8_143 = arith.constant 8 : index
    %c0_144 = arith.constant 0 : index
    %c0_145 = arith.constant 0 : index
    %146 = vector.load %arg5[%c8_143, %c0_144, %c0_145] : memref<9x8x8xbf16, #tpu.memory_space<vmem>>, vector<1x8x8xbf16>
    %147 = vector.shape_cast %146 : vector<1x8x8xbf16> to vector<8x8xbf16>
    %cst_146 = arith.constant dense<0.000000e+00> : vector<256x8xf32>
    %148 = tpu.matmul %145, %147, %cst_146 {dimension_numbers = #tpu.dot_dimension_numbers<[1], [0], [0], [1], [0, 0, 1, 1], [], []>} : vector<256x8xbf16>, vector<8x8xbf16>, vector<256x8xf32> -> vector<256x8xf32>
    %149 = arith.addf %142, %148 : vector<256x8xf32>
    %c0_147 = arith.constant 0 : index
    %c0_148 = arith.constant 0 : index
    %150 = vector.load %arg6[%c0_147, %c0_148] : memref<1x8xf32, #tpu.memory_space<vmem>>, vector<1x8xf32>
    %151 = vector.broadcast %150 : vector<1x8xf32> to vector<256x8xf32>
    %152 = arith.mulf %149, %151 : vector<256x8xf32>
    %c0_149 = arith.constant 0 : index
    %c0_150 = arith.constant 0 : index
    %153 = vector.load %arg7[%c0_149, %c0_150] : memref<1x8xf32, #tpu.memory_space<vmem>>, vector<1x8xf32>
    %154 = vector.broadcast %153 : vector<1x8xf32> to vector<256x8xf32>
    %155 = arith.addf %152, %154 : vector<256x8xf32>
    %cst_151 = arith.constant 0.000000e+00 : f32
    %156 = vector.broadcast %cst_151 : f32 to vector<256x8xf32>
    %157 = arith.cmpf oge, %155, %156 : vector<256x8xf32>
    %cst_152 = arith.constant 0.00999999977 : f32
    %158 = vector.broadcast %cst_152 : f32 to vector<256x8xf32>
    %159 = arith.mulf %158, %155 : vector<256x8xf32>
    %160 = arith.select %157, %155, %159 : vector<256x8xi1>, vector<256x8xf32>
    %161 = vector.shape_cast %160 : vector<256x8xf32> to vector<1x16x16x8xf32>
    %c0_153 = arith.constant 0 : index
    %c0_154 = arith.constant 0 : index
    %c0_155 = arith.constant 0 : index
    %c0_156 = arith.constant 0 : index
    %162 = vector.load %arg8[%c0_153, %c0_154, %c0_155, %c0_156] : memref<1x16x16x8xf32, #tpu.memory_space<vmem>>, vector<1x16x16x8xf32>
    tpu.vector_store %arg8[%c0_153, %c0_154, %c0_155, %c0_156], %161 {strides = array<i32>} : memref<1x16x16x8xf32, #tpu.memory_space<vmem>>, vector<1x16x16x8xf32>,
    return
  }
  func.func @transform_0(%arg0: i32) -> (i32, i32, i32, i32) {
    %c0_i32 = arith.constant 0 : i32
    %c0_i32_0 = arith.constant 0 : i32
    %c0_i32_1 = arith.constant 0 : i32
    %c0_i32_2 = arith.constant 0 : i32
    return %arg0, %c0_i32, %c0_i32_0, %c0_i32_1 : i32, i32, i32, i32
  }
  func.func @transform_1(%arg0: i32) -> (i32, i32, i32) {
    %c0_i32 = arith.constant 0 : i32
    %c0_i32_0 = arith.constant 0 : i32
    %c0_i32_1 = arith.constant 0 : i32
    %c0_i32_2 = arith.constant 0 : i32
    return %c0_i32, %c0_i32_0, %c0_i32_1 : i32, i32, i32
  }
  func.func @transform_2(%arg0: i32) -> (i32, i32) {
    %c0_i32 = arith.constant 0 : i32
    %c0_i32_0 = arith.constant 0 : i32
    %c0_i32_1 = arith.constant 0 : i32
    return %c0_i32, %c0_i32_0 : i32, i32
  }
  func.func @transform_3(%arg0: i32) -> (i32, i32) {
    %c0_i32 = arith.constant 0 : i32
    %c0_i32_0 = arith.constant 0 : i32
    %c0_i32_1 = arith.constant 0 : i32
    return %c0_i32, %c0_i32_0 : i32, i32
  }
  func.func @transform_4(%arg0: i32) -> (i32, i32, i32) {
    %c0_i32 = arith.constant 0 : i32
    %c0_i32_0 = arith.constant 0 : i32
    %c0_i32_1 = arith.constant 0 : i32
    %c0_i32_2 = arith.constant 0 : i32
    return %c0_i32, %c0_i32_0, %c0_i32_1 : i32, i32, i32
  }
  func.func @transform_5(%arg0: i32) -> (i32, i32) {
    %c0_i32 = arith.constant 0 : i32
    %c0_i32_0 = arith.constant 0 : i32
    %c0_i32_1 = arith.constant 0 : i32
    return %c0_i32, %c0_i32_0 : i32, i32
  }
  func.func @transform_6(%arg0: i32) -> (i32, i32) {
    %c0_i32 = arith.constant 0 : i32
    %c0_i32_0 = arith.constant 0 : i32
    %c0_i32_1 = arith.constant 0 : i32
    return %c0_i32, %c0_i32_0 : i32, i32
  }
  func.func @transform_7(%arg0: i32) -> (i32, i32, i32, i32) {
    %c0_i32 = arith.constant 0 : i32
    %c0_i32_0 = arith.constant 0 : i32
    %c0_i32_1 = arith.constant 0 : i32
    %c0_i32_2 = arith.constant 0 : i32
    return %arg0, %c0_i32, %c0_i32_0, %c0_i32_1 : i32, i32, i32, i32
  }
}

</mosaic_0001>

<llo_original>
// kernel: tpu_custom_call.1
$region0: #{tpu_custom_call.1}
  #allocation0 [shape = 'u32[]', space=smem, size = 0x4, offset = 0x4, fixed_abs, tag = 'smem constant byte address 0x4 - core index']
  #allocation1 [shape = 'u32[72,128]{1,0:T(1,128)}', space=vmem, size = 0x9000, scoped, tag = 'internal scratch']
  #allocation2 [shape = 'f32[18,18,8]{2,1,0:T(8,128)}', space=vmem, size = 0x36000, scoped, tag = 'scratch operand']
  %s0 = inlined_call_operand.vmem [shape: f32[2,16,16,8], index: 0, kind: input, shape index: {}]
  %s1 = inlined_call_operand.vmem [shape: bf16[9,8,8], index: 1, kind: input, shape index: {}]
  %s2 = inlined_call_operand.vmem [shape: f32[1,8], index: 2, kind: input, shape index: {}]
  %s3 = inlined_call_operand.vmem [shape: f32[1,8], index: 3, kind: input, shape index: {}]
  %s4 = inlined_call_operand.vmem [shape: bf16[9,8,8], index: 4, kind: input, shape index: {}]
  %s5 = inlined_call_operand.vmem [shape: f32[1,8], index: 5, kind: input, shape index: {}]
  %s6 = inlined_call_operand.vmem [shape: f32[1,8], index: 6, kind: input, shape index: {}]
  %s7 = inlined_call_operand.vmem [shape: f32[2,16,16,8], index: 7, kind: output, shape index: {}]
  %s8 = sld [smem:[#allocation0]]
  $region61: #{tpu_custom_call.1} parent=0
    _
  %s10 = ssub.s32 1, %s8
  %s11 = scalar_select 0, %s10, %s8
  loop: start=0, step=1, limit=4
  $region2: #{tpu_custom_call.1} parent=0 // loop_pre_header
    _
  $region3: #{tpu_custom_call.1} parent=0 // loop_header
    %s13 = sphi 0, %s17
    %p14 = scmp.ge.s32.totalorder %s13, 4
    %s23 = sphi 0, %s25
    %s26 = sphi 0, %s23
    %s27 = sphi 0, %s26
    %s43 = sphi 0, %s27
    %s47 = sphi 0, %s47
    %s49 = sphi 0, %s47
    %s50 = sphi 0, %s49
    %s64 = sphi 0, %s50
    %s68 = sphi 0, %s68
    %s70 = sphi 0, %s68
    %s71 = sphi 0, %s70
    %s85 = sphi 0, %s71
    %s89 = sphi 0, %s89
    %s91 = sphi 0, %s89
    %s92 = sphi 0, %s91
    %s106 = sphi 0, %s92
    %s110 = sphi 0, %s110
    %s112 = sphi 0, %s110
    %s113 = sphi 0, %s112
    %s127 = sphi 0, %s113
    %s131 = sphi 0, %s131
    %s133 = sphi 0, %s131
    %s134 = sphi 0, %s133
    %s148 = sphi 0, %s134
    %s152 = sphi 0, %s152
    %s154 = sphi 0, %s152
    %s155 = sphi 0, %s154
    %s169 = sphi 0, %s155
    %s175 = sphi 0, %s177
    %s178 = sphi 0, %s175
    %s179 = sphi 0, %s178
    %s195 = sphi 0, %s179
  $region4: #{tpu_custom_call.1} parent=0 // loop_header_branch
    %16 = sbr.rel (%p14) target = $region8
  $region5: #{tpu_custom_call.1} parent=0 // loop_body
    %s18 = ssub.s32 %s13, 1
    %s19 = ssub.s32 %s13, 2
    %s20 = sadd.s32 %s13, 1
    %s21 = ssub.s32 %s13, %s20
    %p22 = scmp.eq.s32.totalorder %s21, 0
    %s24 = sadd.s32 %s23, 1
    %s25 = scalar_select %p22, %s23, %s24
    %p28 = pneg %p22
    %p29 = scmp.eq.s32.totalorder %s13, 1
    %p30 = por %p28, %p29
    %p31 = scmp.ne.s32.totalorder %s23, %s26
    %p32 = scmp.eq.s32.totalorder %s13, 0
    %p33 = por %p31, %p32
    %p34 = scmp.ne.s32.totalorder %s23, %s26
    %p35 = scmp.eq.s32.totalorder %s18, 1
    %p36 = por %p34, %p35
    %p37 = scmp.ne.s32.totalorder %s26, %s27
    %p38 = scmp.eq.s32.totalorder %s18, 0
    %p39 = por %p37, %p38
    %p40 = scmp.ne.s32.totalorder %s26, %s27
    %p41 = scmp.eq.s32.totalorder %s19, 1
    %p42 = por %p40, %p41
    %p44 = scmp.ne.s32.totalorder %s27, %s43
    %p45 = scmp.eq.s32.totalorder %s19, 0
    %p46 = por %p44, %p45
    %s48 = sadd.s32 %s47, 1
    %p51 = scmp.eq.s32.totalorder %s13, 1
    %p52 = scmp.ne.s32.totalorder %s47, %s49
    %p53 = scmp.eq.s32.totalorder %s13, 0
    %p54 = por %p52, %p53
    %p55 = scmp.ne.s32.totalorder %s47, %s49
    %p56 = scmp.eq.s32.totalorder %s18, 1
    %p57 = por %p55, %p56
    %p58 = scmp.ne.s32.totalorder %s49, %s50
    %p59 = scmp.eq.s32.totalorder %s18, 0
    %p60 = por %p58, %p59
    %p61 = scmp.ne.s32.totalorder %s49, %s50
    %p62 = scmp.eq.s32.totalorder %s19, 1
    %p63 = por %p61, %p62
    %p65 = scmp.ne.s32.totalorder %s50, %s64
    %p66 = scmp.eq.s32.totalorder %s19, 0
    %p67 = por %p65, %p66
    %s69 = sadd.s32 %s68, 1
    %p72 = scmp.eq.s32.totalorder %s13, 1
    %p73 = scmp.ne.s32.totalorder %s68, %s70
    %p74 = scmp.eq.s32.totalorder %s13, 0
    %p75 = por %p73, %p74
    %p76 = scmp.ne.s32.totalorder %s68, %s70
    %p77 = scmp.eq.s32.totalorder %s18, 1
    %p78 = por %p76, %p77
    %p79 = scmp.ne.s32.totalorder %s70, %s71
    %p80 = scmp.eq.s32.totalorder %s18, 0
    %p81 = por %p79, %p80
    %p82 = scmp.ne.s32.totalorder %s70, %s71
    %p83 = scmp.eq.s32.totalorder %s19, 1
    %p84 = por %p82, %p83
    %p86 = scmp.ne.s32.totalorder %s71, %s85
    %p87 = scmp.eq.s32.totalorder %s19, 0
    %p88 = por %p86, %p87
    %s90 = sadd.s32 %s89, 1
    %p93 = scmp.eq.s32.totalorder %s13, 1
    %p94 = scmp.ne.s32.totalorder %s89, %s91
    %p95 = scmp.eq.s32.totalorder %s13, 0
    %p96 = por %p94, %p95
    %p97 = scmp.ne.s32.totalorder %s89, %s91
    %p98 = scmp.eq.s32.totalorder %s18, 1
    %p99 = por %p97, %p98
    %p100 = scmp.ne.s32.totalorder %s91, %s92
    %p101 = scmp.eq.s32.totalorder %s18, 0
    %p102 = por %p100, %p101
    %p103 = scmp.ne.s32.totalorder %s91, %s92
    %p104 = scmp.eq.s32.totalorder %s19, 1
    %p105 = por %p103, %p104
    %p107 = scmp.ne.s32.totalorder %s92, %s106
    %p108 = scmp.eq.s32.totalorder %s19, 0
    %p109 = por %p107, %p108
    %s111 = sadd.s32 %s110, 1
    %p114 = scmp.eq.s32.totalorder %s13, 1
    %p115 = scmp.ne.s32.totalorder %s110, %s112
    %p116 = scmp.eq.s32.totalorder %s13, 0
    %p117 = por %p115, %p116
    %p118 = scmp.ne.s32.totalorder %s110, %s112
    %p119 = scmp.eq.s32.totalorder %s18, 1
    %p120 = por %p118, %p119
    %p121 = scmp.ne.s32.totalorder %s112, %s113
    %p122 = scmp.eq.s32.totalorder %s18, 0
    %p123 = por %p121, %p122
    %p124 = scmp.ne.s32.totalorder %s112, %s113
    %p125 = scmp.eq.s32.totalorder %s19, 1
    %p126 = por %p124, %p125
    %p128 = scmp.ne.s32.totalorder %s113, %s127
    %p129 = scmp.eq.s32.totalorder %s19, 0
    %p130 = por %p128, %p129
    %s132 = sadd.s32 %s131, 1
    %p135 = scmp.eq.s32.totalorder %s13, 1
    %p136 = scmp.ne.s32.totalorder %s131, %s133
    %p137 = scmp.eq.s32.totalorder %s13, 0
    %p138 = por %p136, %p137
    %p139 = scmp.ne.s32.totalorder %s131, %s133
    %p140 = scmp.eq.s32.totalorder %s18, 1
    %p141 = por %p139, %p140
    %p142 = scmp.ne.s32.totalorder %s133, %s134
    %p143 = scmp.eq.s32.totalorder %s18, 0
    %p144 = por %p142, %p143
    %p145 = scmp.ne.s32.totalorder %s133, %s134
    %p146 = scmp.eq.s32.totalorder %s19, 1
    %p147 = por %p145, %p146
    %p149 = scmp.ne.s32.totalorder %s134, %s148
    %p150 = scmp.eq.s32.totalorder %s19, 0
    %p151 = por %p149, %p150
    %s153 = sadd.s32 %s152, 1
    %p156 = scmp.eq.s32.totalorder %s13, 1
    %p157 = scmp.ne.s32.totalorder %s152, %s154
    %p158 = scmp.eq.s32.totalorder %s13, 0
    %p159 = por %p157, %p158
    %p160 = scmp.ne.s32.totalorder %s152, %s154
    %p161 = scmp.eq.s32.totalorder %s18, 1
    %p162 = por %p160, %p161
    %p163 = scmp.ne.s32.totalorder %s154, %s155
    %p164 = scmp.eq.s32.totalorder %s18, 0
    %p165 = por %p163, %p164
    %p166 = scmp.ne.s32.totalorder %s154, %s155
    %p167 = scmp.eq.s32.totalorder %s19, 1
    %p168 = por %p166, %p167
    %p170 = scmp.ne.s32.totalorder %s155, %s169
    %p171 = scmp.eq.s32.totalorder %s19, 0
    %p172 = por %p170, %p171
    %s173 = ssub.s32 %s13, %s20
    %p174 = scmp.eq.s32.totalorder %s173, 0
    %s176 = sadd.s32 %s175, 1
    %s177 = scalar_select %p174, %s175, %s176
    %p180 = pneg %p174
    %p181 = scmp.eq.s32.totalorder %s13, 1
    %p182 = por %p180, %p181
    %p183 = scmp.ne.s32.totalorder %s175, %s178
    %p184 = scmp.eq.s32.totalorder %s13, 0
    %p185 = por %p183, %p184
    %p186 = scmp.ne.s32.totalorder %s175, %s178
    %p187 = scmp.eq.s32.totalorder %s18, 1
    %p188 = por %p186, %p187
    %p189 = scmp.ne.s32.totalorder %s178, %s179
    %p190 = scmp.eq.s32.totalorder %s18, 0
    %p191 = por %p189, %p190
    %p192 = scmp.ne.s32.totalorder %s178, %s179
    %p193 = scmp.eq.s32.totalorder %s19, 1
    %p194 = por %p192, %p193
    %p196 = scmp.ne.s32.totalorder %s179, %s195
    %p197 = scmp.eq.s32.totalorder %s19, 0
    %p198 = por %p196, %p197
    %p199 = scmp.le.s32.totalorder 1, %s13
    %p200 = scmp.lt.s32.totalorder %s13, 3
    %p201 = pnand %p199, %p200
    %p202 = pneg %p201
    // Predicated region
    $region9: #{tpu_custom_call.1} parent=5 // pred_check
      _
    $region10: #{tpu_custom_call.1} parent=5 // pred_check_branch
      %204 = sbr.rel (%p201) target = $region12
    $region11: #{tpu_custom_call.1} parent=5 // pred_region
      %s205 = ssub.s32 %s13, 1
      // Predicated region
      $region13: #{tpu_custom_call.1} parent=11 // pred_check
        %p206 = pneg %p60
      $region14: #{tpu_custom_call.1} parent=11 // pred_check_branch
        %208 = sbr.rel (%p206) target = $region16
      $region15: #{tpu_custom_call.1} parent=11 // pred_region
        _
      $region16: #{tpu_custom_call.1} parent=11 // pred_fallthru
        _
      // Predicated region
      $region17: #{tpu_custom_call.1} parent=11 // pred_check
        %p209 = pneg %p81
      $region18: #{tpu_custom_call.1} parent=11 // pred_check_branch
        %211 = sbr.rel (%p209) target = $region20
      $region19: #{tpu_custom_call.1} parent=11 // pred_region
        _
      $region20: #{tpu_custom_call.1} parent=11 // pred_fallthru
        _
      // Predicated region
      $region21: #{tpu_custom_call.1} parent=11 // pred_check
        %p212 = pneg %p102
      $region22: #{tpu_custom_call.1} parent=11 // pred_check_branch
        %214 = sbr.rel (%p212) target = $region24
      $region23: #{tpu_custom_call.1} parent=11 // pred_region
        _
      $region24: #{tpu_custom_call.1} parent=11 // pred_fallthru
        _
      // Predicated region
      $region25: #{tpu_custom_call.1} parent=11 // pred_check
        %p215 = pneg %p123
      $region26: #{tpu_custom_call.1} parent=11 // pred_check_branch
        %217 = sbr.rel (%p215) target = $region28
      $region27: #{tpu_custom_call.1} parent=11 // pred_region
        _
      $region28: #{tpu_custom_call.1} parent=11 // pred_fallthru
        _
      // Predicated region
      $region29: #{tpu_custom_call.1} parent=11 // pred_check
        %p218 = pneg %p144
      $region30: #{tpu_custom_call.1} parent=11 // pred_check_branch
        %220 = sbr.rel (%p218) target = $region32
      $region31: #{tpu_custom_call.1} parent=11 // pred_region
        _
      $region32: #{tpu_custom_call.1} parent=11 // pred_fallthru
        _
      // Predicated region
      $region33: #{tpu_custom_call.1} parent=11 // pred_check
        %p221 = pneg %p165
      $region34: #{tpu_custom_call.1} parent=11 // pred_check_branch
        %223 = sbr.rel (%p221) target = $region36
      $region35: #{tpu_custom_call.1} parent=11 // pred_region
        _
      $region36: #{tpu_custom_call.1} parent=11 // pred_fallthru
        _
    $region12: #{tpu_custom_call.1} parent=5 // pred_fallthru
      _
    %p224 = scmp.lt.s32.totalorder %s13, 2
    // Predicated region
    $region37: #{tpu_custom_call.1} parent=5 // pred_check
      %p225 = pneg %p224
    $region38: #{tpu_custom_call.1} parent=5 // pred_check_branch
      %227 = sbr.rel (%p225) target = $region40
    $region39: #{tpu_custom_call.1} parent=5 // pred_region
      // Predicated region
      $region41: #{tpu_custom_call.1} parent=39 // pred_check
        %p228 = pneg %p33
      $region42: #{tpu_custom_call.1} parent=39 // pred_check_branch
        %230 = sbr.rel (%p228) target = $region44
      $region43: #{tpu_custom_call.1} parent=39 // pred_region
        %p231 = scmp.lt.s32.totalorder %s13, 1
        %s232 = scalar_select %p231, %s13, 1
        %s233 = smul.addr %s232, 32
        %s234 = smul.addr %s233, 8
        %s235 = scalar_lea.vmem %s0, %s234
      $region44: #{tpu_custom_call.1} parent=39 // pred_fallthru
        _
    $region40: #{tpu_custom_call.1} parent=5 // pred_fallthru
      _
    %p236 = scmp.le.s32.totalorder 1, %s13
    %p237 = scmp.lt.s32.totalorder %s13, 3
    %p238 = pnand %p236, %p237
    %p239 = pneg %p238
    // Predicated region
    $region45: #{tpu_custom_call.1} parent=5 // pred_check
      _
    $region46: #{tpu_custom_call.1} parent=5 // pred_check_branch
      %241 = sbr.rel (%p238) target = $region48
    $region47: #{tpu_custom_call.1} parent=5 // pred_region
      %s242 = ssub.s32 %s13, 1
      %p243 = scmp.lt.s32.totalorder %s18, 1
      %s244 = scalar_select %p243, %s18, 1
      %s245 = smul.addr %s244, 32
      %s246 = smul.addr %s245, 8
      %s247 = scalar_lea.vmem %s0, %s246
      %p248 = pneg %p39
      %p249 = pneg %p36
      %p250 = pneg %p60
      %p251 = pneg %p57
      %p252 = pneg %p81
      %p253 = pneg %p78
      %p254 = pneg %p102
      %p255 = pneg %p99
      %p256 = pneg %p123
      %p257 = pneg %p120
      %p258 = pneg %p144
      %p259 = pneg %p141
      %p260 = pneg %p165
      %p261 = pneg %p162
      %p262 = pneg %p191
      %p263 = pneg %p188
      %p264 = scmp.lt.s32.totalorder %s18, 1
      %s265 = scalar_select %p264, %s18, 1
      %s266 = smul.addr %s265, 32
      %s267 = smul.addr %s266, 8
      %s268 = scalar_lea.vmem %s7, %s267
      %p269 = scmp.lt.s32.totalorder %s18, 1
      %s270 = scalar_select %p269, %s18, 1
      %s271 = smul.addr %s270, 32
      %s272 = smul.addr %s271, 8
      %s273 = scalar_lea.vmem %s0, %s272
      %p274 = scmp.lt.s32.totalorder %s18, 1
      %s275 = scalar_select %p274, %s18, 1
      %s276 = smul.addr %s275, 32
      %s277 = smul.addr %s276, 8
      %s278 = scalar_lea.vmem %s7, %s277
      %vm280 = vcmask 64512
      %281 = vst.msk [vmem:[#allocation2] sm:$0xff] %vm280, 0.0
      %282 = vst.msk [vmem:[#allocation2 + $0x8] sm:$0xff] %vm280, 0.0
      %vm283 = vcmask 58368
      %284 = vst.msk [vmem:[#allocation2 + $0x10] sm:$0x3] %vm283, 0.0
      %s285 = scalar_lea.vmem [#allocation2], 408
      %286 = vst.msk [vmem:[%s285] sm:$0xff] %vm280, 0.0
      %287 = vst.msk [vmem:[%s285 + $0x8] sm:$0xff] %vm280, 0.0
      %288 = vst.msk [vmem:[%s285 + $0x10] sm:$0x3] %vm283, 0.0
      %vm289 = vcmask 57344
      %290 = vst.msk [vmem:[#allocation2] sm:$0x1] %vm289, 0.0
      %291 = vst.msk [vmem:[#allocation2 + $0x18] sm:$0x1] %vm289, 0.0
      %292 = vst.msk [vmem:[#allocation2 + $0x30] sm:$0x1] %vm289, 0.0
      %293 = vst.msk [vmem:[#allocation2 + $0x48] sm:$0x1] %vm289, 0.0
      %294 = vst.msk [vmem:[#allocation2 + $0x60] sm:$0x1] %vm289, 0.0
      %295 = vst.msk [vmem:[#allocation2 + $0x78] sm:$0x1] %vm289, 0.0
      %296 = vst.msk [vmem:[#allocation2 + $0x90] sm:$0x1] %vm289, 0.0
      %297 = vst.msk [vmem:[#allocation2 + $0xa8] sm:$0x1] %vm289, 0.0
      %298 = vst.msk [vmem:[#allocation2 + $0xc0] sm:$0x1] %vm289, 0.0
      %299 = vst.msk [vmem:[#allocation2 + $0xd8] sm:$0x1] %vm289, 0.0
      %300 = vst.msk [vmem:[#allocation2 + $0xf0] sm:$0x1] %vm289, 0.0
      %301 = vst.msk [vmem:[#allocation2 + $0x108] sm:$0x1] %vm289, 0.0
      %302 = vst.msk [vmem:[#allocation2 + $0x120] sm:$0x1] %vm289, 0.0
      %303 = vst.msk [vmem:[#allocation2 + $0x138] sm:$0x1] %vm289, 0.0
      %304 = vst.msk [vmem:[#allocation2 + $0x150] sm:$0x1] %vm289, 0.0
      %305 = vst.msk [vmem:[#allocation2 + $0x168] sm:$0x1] %vm289, 0.0
      %306 = vst.msk [vmem:[#allocation2 + $0x180] sm:$0x1] %vm289, 0.0
      %307 = vst.msk [vmem:[#allocation2 + $0x198] sm:$0x1] %vm289, 0.0
      %308 = vst.msk [vmem:[#allocation2 + $0x11] sm:$0x1] %vm289, 0.0
      %309 = vst.msk [vmem:[#allocation2 + $0x29] sm:$0x1] %vm289, 0.0
      %310 = vst.msk [vmem:[#allocation2 + $0x41] sm:$0x1] %vm289, 0.0
      %311 = vst.msk [vmem:[#allocation2 + $0x59] sm:$0x1] %vm289, 0.0
      %312 = vst.msk [vmem:[#allocation2 + $0x71] sm:$0x1] %vm289, 0.0
      %313 = vst.msk [vmem:[#allocation2 + $0x89] sm:$0x1] %vm289, 0.0
      %314 = vst.msk [vmem:[#allocation2 + $0xa1] sm:$0x1] %vm289, 0.0
      %315 = vst.msk [vmem:[#allocation2 + $0xb9] sm:$0x1] %vm289, 0.0
      %316 = vst.msk [vmem:[#allocation2 + $0xd1] sm:$0x1] %vm289, 0.0
      %317 = vst.msk [vmem:[#allocation2 + $0xe9] sm:$0x1] %vm289, 0.0
      %318 = vst.msk [vmem:[#allocation2 + $0x101] sm:$0x1] %vm289, 0.0
      %319 = vst.msk [vmem:[#allocation2 + $0x119] sm:$0x1] %vm289, 0.0
      %320 = vst.msk [vmem:[#allocation2 + $0x131] sm:$0x1] %vm289, 0.0
      %321 = vst.msk [vmem:[#allocation2 + $0x149] sm:$0x1] %vm289, 0.0
      %322 = vst.msk [vmem:[#allocation2 + $0x161] sm:$0x1] %vm289, 0.0
      %323 = vst.msk [vmem:[#allocation2 + $0x179] sm:$0x1] %vm289, 0.0
      %324 = vst.msk [vmem:[#allocation2 + $0x191] sm:$0x1] %vm289, 0.0
      %325 = vst.msk [vmem:[#allocation2 + $0x1a9] sm:$0x1] %vm289, 0.0
      %v326 = vld [vmem:[%s273] sm:$0xff]
      %v327 = vld [vmem:[%s273 + $0x8] sm:$0xff]
      %v328 = vld [vmem:[%s273 + $0x10] sm:$0xff]
      %v329 = vld [vmem:[%s273 + $0x18] sm:$0xff]
      %v330 = vld [vmem:[%s273 + $0x20] sm:$0xff]
      %v331 = vld [vmem:[%s273 + $0x28] sm:$0xff]
      %v332 = vld [vmem:[%s273 + $0x30] sm:$0xff]
      %v333 = vld [vmem:[%s273 + $0x38] sm:$0xff]
      %v334 = vld [vmem:[%s273 + $0x40] sm:$0xff]
      %v335 = vld [vmem:[%s273 + $0x48] sm:$0xff]
      %v336 = vld [vmem:[%s273 + $0x50] sm:$0xff]
      %v337 = vld [vmem:[%s273 + $0x58] sm:$0xff]
      %v338 = vld [vmem:[%s273 + $0x60] sm:$0xff]
      %v339 = vld [vmem:[%s273 + $0x68] sm:$0xff]
      %v340 = vld [vmem:[%s273 + $0x70] sm:$0xff]
      %v341 = vld [vmem:[%s273 + $0x78] sm:$0xff]
      %v342 = vld [vmem:[%s273 + $0x80] sm:$0xff]
      %v343 = vld [vmem:[%s273 + $0x88] sm:$0xff]
      %v344 = vld [vmem:[%s273 + $0x90] sm:$0xff]
      %v345 = vld [vmem:[%s273 + $0x98] sm:$0xff]
      %v346 = vld [vmem:[%s273 + $0xa0] sm:$0xff]
      %v347 = vld [vmem:[%s273 + $0xa8] sm:$0xff]
      %v348 = vld [vmem:[%s273 + $0xb0] sm:$0xff]
      %v349 = vld [vmem:[%s273 + $0xb8] sm:$0xff]
      %v350 = vld [vmem:[%s273 + $0xc0] sm:$0xff]
      %v351 = vld [vmem:[%s273 + $0xc8] sm:$0xff]
      %v352 = vld [vmem:[%s273 + $0xd0] sm:$0xff]
      %v353 = vld [vmem:[%s273 + $0xd8] sm:$0xff]
      %v354 = vld [vmem:[%s273 + $0xe0] sm:$0xff]
      %v355 = vld [vmem:[%s273 + $0xe8] sm:$0xff]
      %v356 = vld [vmem:[%s273 + $0xf0] sm:$0xff]
      %v357 = vld [vmem:[%s273 + $0xf8] sm:$0xff]
      %s358 = scalar_lea.vmem [#allocation2], 24
      %359 = vst.msk [vmem:[%s358 + $0x1] sm:$0xff] %vm280, %v326
      %360 = vst.msk [vmem:[%s358 + $0x9] sm:$0xff] %vm280, %v327
      %361 = vst.msk [vmem:[%s358 + $0x19] sm:$0xff] %vm280, %v328
      %362 = vst.msk [vmem:[%s358 + $0x21] sm:$0xff] %vm280, %v329
      %363 = vst.msk [vmem:[%s358 + $0x31] sm:$0xff] %vm280, %v330
      %364 = vst.msk [vmem:[%s358 + $0x39] sm:$0xff] %vm280, %v331
      %365 = vst.msk [vmem:[%s358 + $0x49] sm:$0xff] %vm280, %v332
      %366 = vst.msk [vmem:[%s358 + $0x51] sm:$0xff] %vm280, %v333
      %367 = vst.msk [vmem:[%s358 + $0x61] sm:$0xff] %vm280, %v334
      %368 = vst.msk [vmem:[%s358 + $0x69] sm:$0xff] %vm280, %v335
      %369 = vst.msk [vmem:[%s358 + $0x79] sm:$0xff] %vm280, %v336
      %370 = vst.msk [vmem:[%s358 + $0x81] sm:$0xff] %vm280, %v337
      %371 = vst.msk [vmem:[%s358 + $0x91] sm:$0xff] %vm280, %v338
      %372 = vst.msk [vmem:[%s358 + $0x99] sm:$0xff] %vm280, %v339
      %373 = vst.msk [vmem:[%s358 + $0xa9] sm:$0xff] %vm280, %v340
      %374 = vst.msk [vmem:[%s358 + $0xb1] sm:$0xff] %vm280, %v341
      %375 = vst.msk [vmem:[%s358 + $0xc1] sm:$0xff] %vm280, %v342
      %376 = vst.msk [vmem:[%s358 + $0xc9] sm:$0xff] %vm280, %v343
      %377 = vst.msk [vmem:[%s358 + $0xd9] sm:$0xff] %vm280, %v344
      %378 = vst.msk [vmem:[%s358 + $0xe1] sm:$0xff] %vm280, %v345
      %379 = vst.msk [vmem:[%s358 + $0xf1] sm:$0xff] %vm280, %v346
      %380 = vst.msk [vmem:[%s358 + $0xf9] sm:$0xff] %vm280, %v347
      %381 = vst.msk [vmem:[%s358 + $0x109] sm:$0xff] %vm280, %v348
      %382 = vst.msk [vmem:[%s358 + $0x111] sm:$0xff] %vm280, %v349
      %383 = vst.msk [vmem:[%s358 + $0x121] sm:$0xff] %vm280, %v350
      %384 = vst.msk [vmem:[%s358 + $0x129] sm:$0xff] %vm280, %v351
      %385 = vst.msk [vmem:[%s358 + $0x139] sm:$0xff] %vm280, %v352
      %386 = vst.msk [vmem:[%s358 + $0x141] sm:$0xff] %vm280, %v353
      %387 = vst.msk [vmem:[%s358 + $0x151] sm:$0xff] %vm280, %v354
      %388 = vst.msk [vmem:[%s358 + $0x159] sm:$0xff] %vm280, %v355
      %389 = vst.msk [vmem:[%s358 + $0x169] sm:$0xff] %vm280, %v356
      %390 = vst.msk [vmem:[%s358 + $0x171] sm:$0xff] %vm280, %v357
      %v391 = vld [vmem:[#allocation2] sm:$0xff]
      %v392 = vld [vmem:[#allocation2 + $0x8] sm:$0xff]
      %v393 = vld [vmem:[#allocation2 + $0x18] sm:$0xff]
      %v394 = vld [vmem:[#allocation2 + $0x20] sm:$0xff]
      %v395 = vld [vmem:[#allocation2 + $0x30] sm:$0xff]
      %v396 = vld [vmem:[#allocation2 + $0x38] sm:$0xff]
      %v397 = vld [vmem:[#allocation2 + $0x48] sm:$0xff]
      %v398 = vld [vmem:[#allocation2 + $0x50] sm:$0xff]
      %v399 = vld [vmem:[#allocation2 + $0x60] sm:$0xff]
      %v400 = vld [vmem:[#allocation2 + $0x68] sm:$0xff]
      %v401 = vld [vmem:[#allocation2 + $0x78] sm:$0xff]
      %v402 = vld [vmem:[#allocation2 + $0x80] sm:$0xff]
      %v403 = vld [vmem:[#allocation2 + $0x90] sm:$0xff]
      %v404 = vld [vmem:[#allocation2 + $0x98] sm:$0xff]
      %v405 = vld [vmem:[#allocation2 + $0xa8] sm:$0xff]
      %v406 = vld [vmem:[#allocation2 + $0xb0] sm:$0xff]
      %v407 = vld [vmem:[#allocation2 + $0xc0] sm:$0xff]
      %v408 = vld [vmem:[#allocation2 + $0xc8] sm:$0xff]
      %v409 = vld [vmem:[#allocation2 + $0xd8] sm:$0xff]
      %v410 = vld [vmem:[#allocation2 + $0xe0] sm:$0xff]
      %v411 = vld [vmem:[#allocation2 + $0xf0] sm:$0xff]
      %v412 = vld [vmem:[#allocation2 + $0xf8] sm:$0xff]
      %v413 = vld [vmem:[#allocation2 + $0x108] sm:$0xff]
      %v414 = vld [vmem:[#allocation2 + $0x110] sm:$0xff]
      %v415 = vld [vmem:[#allocation2 + $0x120] sm:$0xff]
      %v416 = vld [vmem:[#allocation2 + $0x128] sm:$0xff]
      %v417 = vld [vmem:[#allocation2 + $0x138] sm:$0xff]
      %v418 = vld [vmem:[#allocation2 + $0x140] sm:$0xff]
      %v419 = vld [vmem:[#allocation2 + $0x150] sm:$0xff]
      %v420 = vld [vmem:[#allocation2 + $0x158] sm:$0xff]
      %v421 = vld [vmem:[#allocation2 + $0x168] sm:$0xff]
      %v422 = vld [vmem:[#allocation2 + $0x170] sm:$0xff]
      %v423 = vpack.c.bf16 %v392, %v391
      %v424 = vpack.c.bf16 %v394, %v393
      %v425 = vpack.c.bf16 %v396, %v395
      %v426 = vpack.c.bf16 %v398, %v397
      %v427 = vpack.c.bf16 %v400, %v399
      %v428 = vpack.c.bf16 %v402, %v401
      %v429 = vpack.c.bf16 %v404, %v403
      %v430 = vpack.c.bf16 %v406, %v405
      %v431 = vpack.c.bf16 %v408, %v407
      %v432 = vpack.c.bf16 %v410, %v409
      %v433 = vpack.c.bf16 %v412, %v411
      %v434 = vpack.c.bf16 %v414, %v413
      %v435 = vpack.c.bf16 %v416, %v415
      %v436 = vpack.c.bf16 %v418, %v417
      %v437 = vpack.c.bf16 %v420, %v419
      %v438 = vpack.c.bf16 %v422, %v421
      %v439 = vld [vmem:[%s1] sm:$0xf]
      %v440 = vld [vmem:[#allocation2 + $0x1] sm:$0xff]
      %v441 = vld [vmem:[#allocation2 + $0x9] sm:$0xff]
      %v442 = vld [vmem:[#allocation2 + $0x19] sm:$0xff]
      %v443 = vld [vmem:[#allocation2 + $0x21] sm:$0xff]
      %v444 = vld [vmem:[#allocation2 + $0x31] sm:$0xff]
      %v445 = vld [vmem:[#allocation2 + $0x39] sm:$0xff]
      %v446 = vld [vmem:[#allocation2 + $0x49] sm:$0xff]
      %v447 = vld [vmem:[#allocation2 + $0x51] sm:$0xff]
      %v448 = vld [vmem:[#allocation2 + $0x61] sm:$0xff]
      %v449 = vld [vmem:[#allocation2 + $0x69] sm:$0xff]
      %v450 = vld [vmem:[#allocation2 + $0x79] sm:$0xff]
      %v451 = vld [vmem:[#allocation2 + $0x81] sm:$0xff]
      %v452 = vld [vmem:[#allocation2 + $0x91] sm:$0xff]
      %v453 = vld [vmem:[#allocation2 + $0x99] sm:$0xff]
      %v454 = vld [vmem:[#allocation2 + $0xa9] sm:$0xff]
      %v455 = vld [vmem:[#allocation2 + $0xb1] sm:$0xff]
      %v456 = vld [vmem:[#allocation2 + $0xc1] sm:$0xff]
      %v457 = vld [vmem:[#allocation2 + $0xc9] sm:$0xff]
      %v458 = vld [vmem:[#allocation2 + $0xd9] sm:$0xff]
      %v459 = vld [vmem:[#allocation2 + $0xe1] sm:$0xff]
      %v460 = vld [vmem:[#allocation2 + $0xf1] sm:$0xff]
      %v461 = vld [vmem:[#allocation2 + $0xf9] sm:$0xff]
      %v462 = vld [vmem:[#allocation2 + $0x109] sm:$0xff]
      %v463 = vld [vmem:[#allocation2 + $0x111] sm:$0xff]
      %v464 = vld [vmem:[#allocation2 + $0x121] sm:$0xff]
      %v465 = vld [vmem:[#allocation2 + $0x129] sm:$0xff]
      %v466 = vld [vmem:[#allocation2 + $0x139] sm:$0xff]
      %v467 = vld [vmem:[#allocation2 + $0x141] sm:$0xff]
      %v468 = vld [vmem:[#allocation2 + $0x151] sm:$0xff]
      %v469 = vld [vmem:[#allocation2 + $0x159] sm:$0xff]
      %v470 = vld [vmem:[#allocation2 + $0x169] sm:$0xff]
      %v471 = vld [vmem:[#allocation2 + $0x171] sm:$0xff]
      %v472 = vpack.c.bf16 %v441, %v440
      %v473 = vpack.c.bf16 %v443, %v442
      %v474 = vpack.c.bf16 %v445, %v444
      %v475 = vpack.c.bf16 %v447, %v446
      %v476 = vpack.c.bf16 %v449, %v448
      %v477 = vpack.c.bf16 %v451, %v450
      %v478 = vpack.c.bf16 %v453, %v452
      %v479 = vpack.c.bf16 %v455, %v454
      %v480 = vpack.c.bf16 %v457, %v456
      %v481 = vpack.c.bf16 %v459, %v458
      %v482 = vpack.c.bf16 %v461, %v460
      %v483 = vpack.c.bf16 %v463, %v462
      %v484 = vpack.c.bf16 %v465, %v464
      %v485 = vpack.c.bf16 %v467, %v466
      %v486 = vpack.c.bf16 %v469, %v468
      %v487 = vpack.c.bf16 %v471, %v470
      %s488 = scalar_lea.vmem %s1, 4
      %v489 = vld [vmem:[%s488] sm:$0xf]
      %v491 = vsel %vm280, %v472, 0
      %v494 = vsel %vm280, %v473, 0
      %v497 = vsel %vm280, %v474, 0
      %v500 = vsel %vm280, %v475, 0
      %v503 = vsel %vm280, %v476, 0
      %v506 = vsel %vm280, %v477, 0
      %v509 = vsel %vm280, %v478, 0
      %v512 = vsel %vm280, %v479, 0
      %v515 = vsel %vm280, %v480, 0
      %v518 = vsel %vm280, %v481, 0
      %v521 = vsel %vm280, %v482, 0
      %v524 = vsel %vm280, %v483, 0
      %v527 = vsel %vm280, %v484, 0
      %v530 = vsel %vm280, %v485, 0
      %v533 = vsel %vm280, %v486, 0
      %v536 = vsel %vm280, %v487, 0
      %vm538 = vcmask 1043456
      %v540 = vsel %vm538, %v489, 0
      %542 = vmatpush.bf16.msra.mxu0 0
      %543 = vmatpush.bf16.msra.mxu0 0
      %544 = vmatpush.bf16.msra.mxu0 0
      %545 = vmatpush.bf16.msra.mxu0 0
      %546 = vmatpush.bf16.msra.mxu0 0
      %547 = vmatpush.bf16.msra.mxu0 0
      %548 = vmatpush.bf16.msra.mxu0 0
      %549 = vmatpush.bf16.msra.mxu0 %v540
      %550 = vmatmul.bf16.gmra.mxu0 %v491
      %v551 = vpop.f32.mrf.mxu0
      %v552 = vadd.f32 0.0, %v551
      %v553 = vpop.f32.mrf.mxu0
      %v554 = vadd.f32 0.0, %v553
      %555 = vmatmul.bf16.gmra.mxu0 %v494
      %v556 = vpop.f32.mrf.mxu0
      %v557 = vadd.f32 0.0, %v556
      %v558 = vpop.f32.mrf.mxu0
      %v559 = vadd.f32 0.0, %v558
      %560 = vmatmul.bf16.gmra.mxu0 %v497
      %v561 = vpop.f32.mrf.mxu0
      %v562 = vadd.f32 0.0, %v561
      %v563 = vpop.f32.mrf.mxu0
      %v564 = vadd.f32 0.0, %v563
      %565 = vmatmul.bf16.gmra.mxu0 %v500
      %v566 = vpop.f32.mrf.mxu0
      %v567 = vadd.f32 0.0, %v566
      %v568 = vpop.f32.mrf.mxu0
      %v569 = vadd.f32 0.0, %v568
      %570 = vmatmul.bf16.gmra.mxu0 %v503
      %v571 = vpop.f32.mrf.mxu0
      %v572 = vadd.f32 0.0, %v571
      %v573 = vpop.f32.mrf.mxu0
      %v574 = vadd.f32 0.0, %v573
      %575 = vmatmul.bf16.gmra.mxu0 %v506
      %v576 = vpop.f32.mrf.mxu0
      %v577 = vadd.f32 0.0, %v576
      %v578 = vpop.f32.mrf.mxu0
      %v579 = vadd.f32 0.0, %v578
      %580 = vmatmul.bf16.gmra.mxu0 %v509
      %v581 = vpop.f32.mrf.mxu0
      %v582 = vadd.f32 0.0, %v581
      %v583 = vpop.f32.mrf.mxu0
      %v584 = vadd.f32 0.0, %v583
      %585 = vmatmul.bf16.gmra.mxu0 %v512
      %v586 = vpop.f32.mrf.mxu0
      %v587 = vadd.f32 0.0, %v586
      %v588 = vpop.f32.mrf.mxu0
      %v589 = vadd.f32 0.0, %v588
      %590 = vmatmul.bf16.gmra.mxu0 %v515
      %v591 = vpop.f32.mrf.mxu0
      %v592 = vadd.f32 0.0, %v591
      %v593 = vpop.f32.mrf.mxu0
      %v594 = vadd.f32 0.0, %v593
      %595 = vmatmul.bf16.gmra.mxu0 %v518
      %v596 = vpop.f32.mrf.mxu0
      %v597 = vadd.f32 0.0, %v596
      %v598 = vpop.f32.mrf.mxu0
      %v599 = vadd.f32 0.0, %v598
      %600 = vmatmul.bf16.gmra.mxu0 %v521
      %v601 = vpop.f32.mrf.mxu0
      %v602 = vadd.f32 0.0, %v601
      %v603 = vpop.f32.mrf.mxu0
      %v604 = vadd.f32 0.0, %v603
      %605 = vmatmul.bf16.gmra.mxu0 %v524
      %v606 = vpop.f32.mrf.mxu0
      %v607 = vadd.f32 0.0, %v606
      %v608 = vpop.f32.mrf.mxu0
      %v609 = vadd.f32 0.0, %v608
      %610 = vmatmul.bf16.gmra.mxu0 %v527
      %v611 = vpop.f32.mrf.mxu0
      %v612 = vadd.f32 0.0, %v611
      %v613 = vpop.f32.mrf.mxu0
      %v614 = vadd.f32 0.0, %v613
      %615 = vmatmul.bf16.gmra.mxu0 %v530
      %v616 = vpop.f32.mrf.mxu0
      %v617 = vadd.f32 0.0, %v616
      %v618 = vpop.f32.mrf.mxu0
      %v619 = vadd.f32 0.0, %v618
      %620 = vmatmul.bf16.gmra.mxu0 %v533
      %v621 = vpop.f32.mrf.mxu0
      %v622 = vadd.f32 0.0, %v621
      %v623 = vpop.f32.mrf.mxu0
      %v624 = vadd.f32 0.0, %v623
      %625 = vmatmul.bf16.gmra.mxu0 %v536
      %v626 = vpop.f32.mrf.mxu0
      %v627 = vadd.f32 0.0, %v626
      %v628 = vpop.f32.mrf.mxu0
      %v629 = vadd.f32 0.0, %v628
      %630 = vdwg.mxu0
      %v632 = vsel %vm280, %v423, 0
      %v635 = vsel %vm280, %v424, 0
      %v638 = vsel %vm280, %v425, 0
      %v641 = vsel %vm280, %v426, 0
      %v644 = vsel %vm280, %v427, 0
      %v647 = vsel %vm280, %v428, 0
      %v650 = vsel %vm280, %v429, 0
      %v653 = vsel %vm280, %v430, 0
      %v656 = vsel %vm280, %v431, 0
      %v659 = vsel %vm280, %v432, 0
      %v662 = vsel %vm280, %v433, 0
      %v665 = vsel %vm280, %v434, 0
      %v668 = vsel %vm280, %v435, 0
      %v671 = vsel %vm280, %v436, 0
      %v674 = vsel %vm280, %v437, 0
      %v677 = vsel %vm280, %v438, 0
      %v680 = vsel %vm538, %v439, 0
      %682 = vmatpush.bf16.msra.mxu0 0
      %683 = vmatpush.bf16.msra.mxu0 0
      %684 = vmatpush.bf16.msra.mxu0 0
      %685 = vmatpush.bf16.msra.mxu0 0
      %686 = vmatpush.bf16.msra.mxu0 0
      %687 = vmatpush.bf16.msra.mxu0 0
      %688 = vmatpush.bf16.msra.mxu0 0
      %689 = vmatpush.bf16.msra.mxu0 %v680
      %690 = vmatmul.bf16.gmra.mxu0 %v632
      %v691 = vpop.f32.mrf.mxu0
      %v692 = vadd.f32 %v552, %v691
      %v693 = vpop.f32.mrf.mxu0
      %v694 = vadd.f32 %v554, %v693
      %695 = vmatmul.bf16.gmra.mxu0 %v635
      %v696 = vpop.f32.mrf.mxu0
      %v697 = vadd.f32 %v557, %v696
      %v698 = vpop.f32.mrf.mxu0
      %v699 = vadd.f32 %v559, %v698
      %700 = vmatmul.bf16.gmra.mxu0 %v638
      %v701 = vpop.f32.mrf.mxu0
      %v702 = vadd.f32 %v562, %v701
      %v703 = vpop.f32.mrf.mxu0
      %v704 = vadd.f32 %v564, %v703
      %705 = vmatmul.bf16.gmra.mxu0 %v641
      %v706 = vpop.f32.mrf.mxu0
      %v707 = vadd.f32 %v567, %v706
      %v708 = vpop.f32.mrf.mxu0
      %v709 = vadd.f32 %v569, %v708
      %710 = vmatmul.bf16.gmra.mxu0 %v644
      %v711 = vpop.f32.mrf.mxu0
      %v712 = vadd.f32 %v572, %v711
      %v713 = vpop.f32.mrf.mxu0
      %v714 = vadd.f32 %v574, %v713
      %715 = vmatmul.bf16.gmra.mxu0 %v647
      %v716 = vpop.f32.mrf.mxu0
      %v717 = vadd.f32 %v577, %v716
      %v718 = vpop.f32.mrf.mxu0
      %v719 = vadd.f32 %v579, %v718
      %720 = vmatmul.bf16.gmra.mxu0 %v650
      %v721 = vpop.f32.mrf.mxu0
      %v722 = vadd.f32 %v582, %v721
      %v723 = vpop.f32.mrf.mxu0
      %v724 = vadd.f32 %v584, %v723
      %725 = vmatmul.bf16.gmra.mxu0 %v653
      %v726 = vpop.f32.mrf.mxu0
      %v727 = vadd.f32 %v587, %v726
      %v728 = vpop.f32.mrf.mxu0
      %v729 = vadd.f32 %v589, %v728
      %730 = vmatmul.bf16.gmra.mxu0 %v656
      %v731 = vpop.f32.mrf.mxu0
      %v732 = vadd.f32 %v592, %v731
      %v733 = vpop.f32.mrf.mxu0
      %v734 = vadd.f32 %v594, %v733
      %735 = vmatmul.bf16.gmra.mxu0 %v659
      %v736 = vpop.f32.mrf.mxu0
      %v737 = vadd.f32 %v597, %v736
      %v738 = vpop.f32.mrf.mxu0
      %v739 = vadd.f32 %v599, %v738
      %740 = vmatmul.bf16.gmra.mxu0 %v662
      %v741 = vpop.f32.mrf.mxu0
      %v742 = vadd.f32 %v602, %v741
      %v743 = vpop.f32.mrf.mxu0
      %v744 = vadd.f32 %v604, %v743
      %745 = vmatmul.bf16.gmra.mxu0 %v665
      %v746 = vpop.f32.mrf.mxu0
      %v747 = vadd.f32 %v607, %v746
      %v748 = vpop.f32.mrf.mxu0
      %v749 = vadd.f32 %v609, %v748
      %750 = vmatmul.bf16.gmra.mxu0 %v668
      %v751 = vpop.f32.mrf.mxu0
      %v752 = vadd.f32 %v612, %v751
      %v753 = vpop.f32.mrf.mxu0
      %v754 = vadd.f32 %v614, %v753
      %755 = vmatmul.bf16.gmra.mxu0 %v671
      %v756 = vpop.f32.mrf.mxu0
      %v757 = vadd.f32 %v617, %v756
      %v758 = vpop.f32.mrf.mxu0
      %v759 = vadd.f32 %v619, %v758
      %760 = vmatmul.bf16.gmra.mxu0 %v674
      %v761 = vpop.f32.mrf.mxu0
      %v762 = vadd.f32 %v622, %v761
      %v763 = vpop.f32.mrf.mxu0
      %v764 = vadd.f32 %v624, %v763
      %765 = vmatmul.bf16.gmra.mxu0 %v677
      %v766 = vpop.f32.mrf.mxu0
      %v767 = vadd.f32 %v627, %v766
      %v768 = vpop.f32.mrf.mxu0
      %v769 = vadd.f32 %v629, %v768
      %770 = vdwg.mxu0
      %v771 = vld [vmem:[#allocation2 + $0x2] sm:$0xff]
      %v772 = vld [vmem:[#allocation2 + $0xa] sm:$0xff]
      %v773 = vld [vmem:[#allocation2 + $0x1a] sm:$0xff]
      %v774 = vld [vmem:[#allocation2 + $0x22] sm:$0xff]
      %v775 = vld [vmem:[#allocation2 + $0x32] sm:$0xff]
      %v776 = vld [vmem:[#allocation2 + $0x3a] sm:$0xff]
      %v777 = vld [vmem:[#allocation2 + $0x4a] sm:$0xff]
      %v778 = vld [vmem:[#allocation2 + $0x52] sm:$0xff]
      %v779 = vld [vmem:[#allocation2 + $0x62] sm:$0xff]
      %v780 = vld [vmem:[#allocation2 + $0x6a] sm:$0xff]
      %v781 = vld [vmem:[#allocation2 + $0x7a] sm:$0xff]
      %v782 = vld [vmem:[#allocation2 + $0x82] sm:$0xff]
      %v783 = vld [vmem:[#allocation2 + $0x92] sm:$0xff]
      %v784 = vld [vmem:[#allocation2 + $0x9a] sm:$0xff]
      %v785 = vld [vmem:[#allocation2 + $0xaa] sm:$0xff]
      %v786 = vld [vmem:[#allocation2 + $0xb2] sm:$0xff]
      %v787 = vld [vmem:[#allocation2 + $0xc2] sm:$0xff]
      %v788 = vld [vmem:[#allocation2 + $0xca] sm:$0xff]
      %v789 = vld [vmem:[#allocation2 + $0xda] sm:$0xff]
      %v790 = vld [vmem:[#allocation2 + $0xe2] sm:$0xff]
      %v791 = vld [vmem:[#allocation2 + $0xf2] sm:$0xff]
      %v792 = vld [vmem:[#allocation2 + $0xfa] sm:$0xff]
      %v793 = vld [vmem:[#allocation2 + $0x10a] sm:$0xff]
      %v794 = vld [vmem:[#allocation2 + $0x112] sm:$0xff]
      %v795 = vld [vmem:[#allocation2 + $0x122] sm:$0xff]
      %v796 = vld [vmem:[#allocation2 + $0x12a] sm:$0xff]
      %v797 = vld [vmem:[#allocation2 + $0x13a] sm:$0xff]
      %v798 = vld [vmem:[#allocation2 + $0x142] sm:$0xff]
      %v799 = vld [vmem:[#allocation2 + $0x152] sm:$0xff]
      %v800 = vld [vmem:[#allocation2 + $0x15a] sm:$0xff]
      %v801 = vld [vmem:[#allocation2 + $0x16a] sm:$0xff]
      %v802 = vld [vmem:[#allocation2 + $0x172] sm:$0xff]
      %v803 = vpack.c.bf16 %v772, %v771
      %v804 = vpack.c.bf16 %v774, %v773
      %v805 = vpack.c.bf16 %v776, %v775
      %v806 = vpack.c.bf16 %v778, %v777
      %v807 = vpack.c.bf16 %v780, %v779
      %v808 = vpack.c.bf16 %v782, %v781
      %v809 = vpack.c.bf16 %v784, %v783
      %v810 = vpack.c.bf16 %v786, %v785
      %v811 = vpack.c.bf16 %v788, %v787
      %v812 = vpack.c.bf16 %v790, %v789
      %v813 = vpack.c.bf16 %v792, %v791
      %v814 = vpack.c.bf16 %v794, %v793
      %v815 = vpack.c.bf16 %v796, %v795
      %v816 = vpack.c.bf16 %v798, %v797
      %v817 = vpack.c.bf16 %v800, %v799
      %v818 = vpack.c.bf16 %v802, %v801
      %s819 = scalar_lea.vmem %s1, 8
      %v820 = vld [vmem:[%s819] sm:$0xf]
      %v822 = vsel %vm280, %v803, 0
      %v825 = vsel %vm280, %v804, 0
      %v828 = vsel %vm280, %v805, 0
      %v831 = vsel %vm280, %v806, 0
      %v834 = vsel %vm280, %v807, 0
      %v837 = vsel %vm280, %v808, 0
      %v840 = vsel %vm280, %v809, 0
      %v843 = vsel %vm280, %v810, 0
      %v846 = vsel %vm280, %v811, 0
      %v849 = vsel %vm280, %v812, 0
      %v852 = vsel %vm280, %v813, 0
      %v855 = vsel %vm280, %v814, 0
      %v858 = vsel %vm280, %v815, 0
      %v861 = vsel %vm280, %v816, 0
      %v864 = vsel %vm280, %v817, 0
      %v867 = vsel %vm280, %v818, 0
      %v870 = vsel %vm538, %v820, 0
      %872 = vmatpush.bf16.msra.mxu0 0
      %873 = vmatpush.bf16.msra.mxu0 0
      %874 = vmatpush.bf16.msra.mxu0 0
      %875 = vmatpush.bf16.msra.mxu0 0
      %876 = vmatpush.bf16.msra.mxu0 0
      %877 = vmatpush.bf16.msra.mxu0 0
      %878 = vmatpush.bf16.msra.mxu0 0
      %879 = vmatpush.bf16.msra.mxu0 %v870
      %880 = vmatmul.bf16.gmra.mxu0 %v822
      %v881 = vpop.f32.mrf.mxu0
      %v882 = vadd.f32 0.0, %v881
      %v883 = vpop.f32.mrf.mxu0
      %v884 = vadd.f32 0.0, %v883
      %885 = vmatmul.bf16.gmra.mxu0 %v825
      %v886 = vpop.f32.mrf.mxu0
      %v887 = vadd.f32 0.0, %v886
      %v888 = vpop.f32.mrf.mxu0
      %v889 = vadd.f32 0.0, %v888
      %890 = vmatmul.bf16.gmra.mxu0 %v828
      %v891 = vpop.f32.mrf.mxu0
      %v892 = vadd.f32 0.0, %v891
      %v893 = vpop.f32.mrf.mxu0
      %v894 = vadd.f32 0.0, %v893
      %895 = vmatmul.bf16.gmra.mxu0 %v831
      %v896 = vpop.f32.mrf.mxu0
      %v897 = vadd.f32 0.0, %v896
      %v898 = vpop.f32.mrf.mxu0
      %v899 = vadd.f32 0.0, %v898
      %900 = vmatmul.bf16.gmra.mxu0 %v834
      %v901 = vpop.f32.mrf.mxu0
      %v902 = vadd.f32 0.0, %v901
      %v903 = vpop.f32.mrf.mxu0
      %v904 = vadd.f32 0.0, %v903
      %905 = vmatmul.bf16.gmra.mxu0 %v837
      %v906 = vpop.f32.mrf.mxu0
      %v907 = vadd.f32 0.0, %v906
      %v908 = vpop.f32.mrf.mxu0
      %v909 = vadd.f32 0.0, %v908
      %910 = vmatmul.bf16.gmra.mxu0 %v840
      %v911 = vpop.f32.mrf.mxu0
      %v912 = vadd.f32 0.0, %v911
      %v913 = vpop.f32.mrf.mxu0
      %v914 = vadd.f32 0.0, %v913
      %915 = vmatmul.bf16.gmra.mxu0 %v843
      %v916 = vpop.f32.mrf.mxu0
      %v917 = vadd.f32 0.0, %v916
      %v918 = vpop.f32.mrf.mxu0
      %v919 = vadd.f32 0.0, %v918
      %920 = vmatmul.bf16.gmra.mxu0 %v846
      %v921 = vpop.f32.mrf.mxu0
      %v922 = vadd.f32 0.0, %v921
      %v923 = vpop.f32.mrf.mxu0
      %v924 = vadd.f32 0.0, %v923
      %925 = vmatmul.bf16.gmra.mxu0 %v849
      %v926 = vpop.f32.mrf.mxu0
      %v927 = vadd.f32 0.0, %v926
      %v928 = vpop.f32.mrf.mxu0
      %v929 = vadd.f32 0.0, %v928
      %930 = vmatmul.bf16.gmra.mxu0 %v852
      %v931 = vpop.f32.mrf.mxu0
      %v932 = vadd.f32 0.0, %v931
      %v933 = vpop.f32.mrf.mxu0
      %v934 = vadd.f32 0.0, %v933
      %935 = vmatmul.bf16.gmra.mxu0 %v855
      %v936 = vpop.f32.mrf.mxu0
      %v937 = vadd.f32 0.0, %v936
      %v938 = vpop.f32.mrf.mxu0
      %v939 = vadd.f32 0.0, %v938
      %940 = vmatmul.bf16.gmra.mxu0 %v858
      %v941 = vpop.f32.mrf.mxu0
      %v942 = vadd.f32 0.0, %v941
      %v943 = vpop.f32.mrf.mxu0
      %v944 = vadd.f32 0.0, %v943
      %945 = vmatmul.bf16.gmra.mxu0 %v861
      %v946 = vpop.f32.mrf.mxu0
      %v947 = vadd.f32 0.0, %v946
      %v948 = vpop.f32.mrf.mxu0
      %v949 = vadd.f32 0.0, %v948
      %950 = vmatmul.bf16.gmra.mxu0 %v864
      %v951 = vpop.f32.mrf.mxu0
      %v952 = vadd.f32 0.0, %v951
      %v953 = vpop.f32.mrf.mxu0
      %v954 = vadd.f32 0.0, %v953
      %955 = vmatmul.bf16.gmra.mxu0 %v867
      %v956 = vpop.f32.mrf.mxu0
      %v957 = vadd.f32 0.0, %v956
      %v958 = vpop.f32.mrf.mxu0
      %v959 = vadd.f32 0.0, %v958
      %960 = vdwg.mxu0
      %v961 = vadd.f32 %v692, %v882
      %v962 = vadd.f32 %v694, %v884
      %v963 = vadd.f32 %v697, %v887
      %v964 = vadd.f32 %v699, %v889
      %v965 = vadd.f32 %v702, %v892
      %v966 = vadd.f32 %v704, %v894
      %v967 = vadd.f32 %v707, %v897
      %v968 = vadd.f32 %v709, %v899
      %v969 = vadd.f32 %v712, %v902
      %v970 = vadd.f32 %v714, %v904
      %v971 = vadd.f32 %v717, %v907
      %v972 = vadd.f32 %v719, %v909
      %v973 = vadd.f32 %v722, %v912
      %v974 = vadd.f32 %v724, %v914
      %v975 = vadd.f32 %v727, %v917
      %v976 = vadd.f32 %v729, %v919
      %v977 = vadd.f32 %v732, %v922
      %v978 = vadd.f32 %v734, %v924
      %v979 = vadd.f32 %v737, %v927
      %v980 = vadd.f32 %v739, %v929
      %v981 = vadd.f32 %v742, %v932
      %v982 = vadd.f32 %v744, %v934
      %v983 = vadd.f32 %v747, %v937
      %v984 = vadd.f32 %v749, %v939
      %v985 = vadd.f32 %v752, %v942
      %v986 = vadd.f32 %v754, %v944
      %v987 = vadd.f32 %v757, %v947
      %v988 = vadd.f32 %v759, %v949
      %v989 = vadd.f32 %v762, %v952
      %v990 = vadd.f32 %v764, %v954
      %v991 = vadd.f32 %v767, %v957
      %v992 = vadd.f32 %v769, %v959
      %v993 = vld [vmem:[%s358] sm:$0xff]
      %v994 = vld [vmem:[%s358 + $0x8] sm:$0xff]
      %v995 = vld [vmem:[%s358 + $0x18] sm:$0xff]
      %v996 = vld [vmem:[%s358 + $0x20] sm:$0xff]
      %v997 = vld [vmem:[%s358 + $0x30] sm:$0xff]
      %v998 = vld [vmem:[%s358 + $0x38] sm:$0xff]
      %v999 = vld [vmem:[%s358 + $0x48] sm:$0xff]
      %v1000 = vld [vmem:[%s358 + $0x50] sm:$0xff]
      %v1001 = vld [vmem:[%s358 + $0x60] sm:$0xff]
      %v1002 = vld [vmem:[%s358 + $0x68] sm:$0xff]
      %v1003 = vld [vmem:[%s358 + $0x78] sm:$0xff]
      %v1004 = vld [vmem:[%s358 + $0x80] sm:$0xff]
      %v1005 = vld [vmem:[%s358 + $0x90] sm:$0xff]
      %v1006 = vld [vmem:[%s358 + $0x98] sm:$0xff]
      %v1007 = vld [vmem:[%s358 + $0xa8] sm:$0xff]
      %v1008 = vld [vmem:[%s358 + $0xb0] sm:$0xff]
      %v1009 = vld [vmem:[%s358 + $0xc0] sm:$0xff]
      %v1010 = vld [vmem:[%s358 + $0xc8] sm:$0xff]
      %v1011 = vld [vmem:[%s358 + $0xd8] sm:$0xff]
      %v1012 = vld [vmem:[%s358 + $0xe0] sm:$0xff]
      %v1013 = vld [vmem:[%s358 + $0xf0] sm:$0xff]
      %v1014 = vld [vmem:[%s358 + $0xf8] sm:$0xff]
      %v1015 = vld [vmem:[%s358 + $0x108] sm:$0xff]
      %v1016 = vld [vmem:[%s358 + $0x110] sm:$0xff]
      %v1017 = vld [vmem:[%s358 + $0x120] sm:$0xff]
      %v1018 = vld [vmem:[%s358 + $0x128] sm:$0xff]
      %v1019 = vld [vmem:[%s358 + $0x138] sm:$0xff]
      %v1020 = vld [vmem:[%s358 + $0x140] sm:$0xff]
      %v1021 = vld [vmem:[%s358 + $0x150] sm:$0xff]
      %v1022 = vld [vmem:[%s358 + $0x158] sm:$0xff]
      %v1023 = vld [vmem:[%s358 + $0x168] sm:$0xff]
      %v1024 = vld [vmem:[%s358 + $0x170] sm:$0xff]
      %v1025 = vpack.c.bf16 %v994, %v993
      %v1026 = vpack.c.bf16 %v996, %v995
      %v1027 = vpack.c.bf16 %v998, %v997
      %v1028 = vpack.c.bf16 %v1000, %v999
      %v1029 = vpack.c.bf16 %v1002, %v1001
      %v1030 = vpack.c.bf16 %v1004, %v1003
      %v1031 = vpack.c.bf16 %v1006, %v1005
      %v1032 = vpack.c.bf16 %v1008, %v1007
      %v1033 = vpack.c.bf16 %v1010, %v1009
      %v1034 = vpack.c.bf16 %v1012, %v1011
      %v1035 = vpack.c.bf16 %v1014, %v1013
      %v1036 = vpack.c.bf16 %v1016, %v1015
      %v1037 = vpack.c.bf16 %v1018, %v1017
      %v1038 = vpack.c.bf16 %v1020, %v1019
      %v1039 = vpack.c.bf16 %v1022, %v1021
      %v1040 = vpack.c.bf16 %v1024, %v1023
      %s1041 = scalar_lea.vmem %s1, 12
      %v1042 = vld [vmem:[%s1041] sm:$0xf]
      %v1044 = vsel %vm280, %v1025, 0
      %v1047 = vsel %vm280, %v1026, 0
      %v1050 = vsel %vm280, %v1027, 0
      %v1053 = vsel %vm280, %v1028, 0
      %v1056 = vsel %vm280, %v1029, 0
      %v1059 = vsel %vm280, %v1030, 0
      %v1062 = vsel %vm280, %v1031, 0
      %v1065 = vsel %vm280, %v1032, 0
      %v1068 = vsel %vm280, %v1033, 0
      %v1071 = vsel %vm280, %v1034, 0
      %v1074 = vsel %vm280, %v1035, 0
      %v1077 = vsel %vm280, %v1036, 0
      %v1080 = vsel %vm280, %v1037, 0
      %v1083 = vsel %vm280, %v1038, 0
      %v1086 = vsel %vm280, %v1039, 0
      %v1089 = vsel %vm280, %v1040, 0
      %v1092 = vsel %vm538, %v1042, 0
      %1094 = vmatpush.bf16.msra.mxu0 0
      %1095 = vmatpush.bf16.msra.mxu0 0
      %1096 = vmatpush.bf16.msra.mxu0 0
      %1097 = vmatpush.bf16.msra.mxu0 0
      %1098 = vmatpush.bf16.msra.mxu0 0
      %1099 = vmatpush.bf16.msra.mxu0 0
      %1100 = vmatpush.bf16.msra.mxu0 0
      %1101 = vmatpush.bf16.msra.mxu0 %v1092
      %1102 = vmatmul.bf16.gmra.mxu0 %v1044
      %v1103 = vpop.f32.mrf.mxu0
      %v1104 = vadd.f32 0.0, %v1103
      %v1105 = vpop.f32.mrf.mxu0
      %v1106 = vadd.f32 0.0, %v1105
      %1107 = vmatmul.bf16.gmra.mxu0 %v1047
      %v1108 = vpop.f32.mrf.mxu0
      %v1109 = vadd.f32 0.0, %v1108
      %v1110 = vpop.f32.mrf.mxu0
      %v1111 = vadd.f32 0.0, %v1110
      %1112 = vmatmul.bf16.gmra.mxu0 %v1050
      %v1113 = vpop.f32.mrf.mxu0
      %v1114 = vadd.f32 0.0, %v1113
      %v1115 = vpop.f32.mrf.mxu0
      %v1116 = vadd.f32 0.0, %v1115
      %1117 = vmatmul.bf16.gmra.mxu0 %v1053
      %v1118 = vpop.f32.mrf.mxu0
      %v1119 = vadd.f32 0.0, %v1118
      %v1120 = vpop.f32.mrf.mxu0
      %v1121 = vadd.f32 0.0, %v1120
      %1122 = vmatmul.bf16.gmra.mxu0 %v1056
      %v1123 = vpop.f32.mrf.mxu0
      %v1124 = vadd.f32 0.0, %v1123
      %v1125 = vpop.f32.mrf.mxu0
      %v1126 = vadd.f32 0.0, %v1125
      %1127 = vmatmul.bf16.gmra.mxu0 %v1059
      %v1128 = vpop.f32.mrf.mxu0
      %v1129 = vadd.f32 0.0, %v1128
      %v1130 = vpop.f32.mrf.mxu0
      %v1131 = vadd.f32 0.0, %v1130
      %1132 = vmatmul.bf16.gmra.mxu0 %v1062
      %v1133 = vpop.f32.mrf.mxu0
      %v1134 = vadd.f32 0.0, %v1133
      %v1135 = vpop.f32.mrf.mxu0
      %v1136 = vadd.f32 0.0, %v1135
      %1137 = vmatmul.bf16.gmra.mxu0 %v1065
      %v1138 = vpop.f32.mrf.mxu0
      %v1139 = vadd.f32 0.0, %v1138
      %v1140 = vpop.f32.mrf.mxu0
      %v1141 = vadd.f32 0.0, %v1140
      %1142 = vmatmul.bf16.gmra.mxu0 %v1068
      %v1143 = vpop.f32.mrf.mxu0
      %v1144 = vadd.f32 0.0, %v1143
      %v1145 = vpop.f32.mrf.mxu0
      %v1146 = vadd.f32 0.0, %v1145
      %1147 = vmatmul.bf16.gmra.mxu0 %v1071
      %v1148 = vpop.f32.mrf.mxu0
      %v1149 = vadd.f32 0.0, %v1148
      %v1150 = vpop.f32.mrf.mxu0
      %v1151 = vadd.f32 0.0, %v1150
      %1152 = vmatmul.bf16.gmra.mxu0 %v1074
      %v1153 = vpop.f32.mrf.mxu0
      %v1154 = vadd.f32 0.0, %v1153
      %v1155 = vpop.f32.mrf.mxu0
      %v1156 = vadd.f32 0.0, %v1155
      %1157 = vmatmul.bf16.gmra.mxu0 %v1077
      %v1158 = vpop.f32.mrf.mxu0
      %v1159 = vadd.f32 0.0, %v1158
      %v1160 = vpop.f32.mrf.mxu0
      %v1161 = vadd.f32 0.0, %v1160
      %1162 = vmatmul.bf16.gmra.mxu0 %v1080
      %v1163 = vpop.f32.mrf.mxu0
      %v1164 = vadd.f32 0.0, %v1163
      %v1165 = vpop.f32.mrf.mxu0
      %v1166 = vadd.f32 0.0, %v1165
      %1167 = vmatmul.bf16.gmra.mxu0 %v1083
      %v1168 = vpop.f32.mrf.mxu0
      %v1169 = vadd.f32 0.0, %v1168
      %v1170 = vpop.f32.mrf.mxu0
      %v1171 = vadd.f32 0.0, %v1170
      %1172 = vmatmul.bf16.gmra.mxu0 %v1086
      %v1173 = vpop.f32.mrf.mxu0
      %v1174 = vadd.f32 0.0, %v1173
      %v1175 = vpop.f32.mrf.mxu0
      %v1176 = vadd.f32 0.0, %v1175
      %1177 = vmatmul.bf16.gmra.mxu0 %v1089
      %v1178 = vpop.f32.mrf.mxu0
      %v1179 = vadd.f32 0.0, %v1178
      %v1180 = vpop.f32.mrf.mxu0
      %v1181 = vadd.f32 0.0, %v1180
      %1182 = vdwg.mxu0
      %v1183 = vadd.f32 %v961, %v1104
      %v1184 = vadd.f32 %v962, %v1106
      %v1185 = vadd.f32 %v963, %v1109
      %v1186 = vadd.f32 %v964, %v1111
      %v1187 = vadd.f32 %v965, %v1114
      %v1188 = vadd.f32 %v966, %v1116
      %v1189 = vadd.f32 %v967, %v1119
      %v1190 = vadd.f32 %v968, %v1121
      %v1191 = vadd.f32 %v969, %v1124
      %v1192 = vadd.f32 %v970, %v1126
      %v1193 = vadd.f32 %v971, %v1129
      %v1194 = vadd.f32 %v972, %v1131
      %v1195 = vadd.f32 %v973, %v1134
      %v1196 = vadd.f32 %v974, %v1136
      %v1197 = vadd.f32 %v975, %v1139
      %v1198 = vadd.f32 %v976, %v1141
      %v1199 = vadd.f32 %v977, %v1144
      %v1200 = vadd.f32 %v978, %v1146
      %v1201 = vadd.f32 %v979, %v1149
      %v1202 = vadd.f32 %v980, %v1151
      %v1203 = vadd.f32 %v981, %v1154
      %v1204 = vadd.f32 %v982, %v1156
      %v1205 = vadd.f32 %v983, %v1159
      %v1206 = vadd.f32 %v984, %v1161
      %v1207 = vadd.f32 %v985, %v1164
      %v1208 = vadd.f32 %v986, %v1166
      %v1209 = vadd.f32 %v987, %v1169
      %v1210 = vadd.f32 %v988, %v1171
      %v1211 = vadd.f32 %v989, %v1174
      %v1212 = vadd.f32 %v990, %v1176
      %v1213 = vadd.f32 %v991, %v1179
      %v1214 = vadd.f32 %v992, %v1181
      %v1215 = vld [vmem:[%s358 + $0x1] sm:$0xff]
      %v1216 = vld [vmem:[%s358 + $0x9] sm:$0xff]
      %v1217 = vld [vmem:[%s358 + $0x19] sm:$0xff]
      %v1218 = vld [vmem:[%s358 + $0x21] sm:$0xff]
      %v1219 = vld [vmem:[%s358 + $0x31] sm:$0xff]
      %v1220 = vld [vmem:[%s358 + $0x39] sm:$0xff]
      %v1221 = vld [vmem:[%s358 + $0x49] sm:$0xff]
      %v1222 = vld [vmem:[%s358 + $0x51] sm:$0xff]
      %v1223 = vld [vmem:[%s358 + $0x61] sm:$0xff]
      %v1224 = vld [vmem:[%s358 + $0x69] sm:$0xff]
      %v1225 = vld [vmem:[%s358 + $0x79] sm:$0xff]
      %v1226 = vld [vmem:[%s358 + $0x81] sm:$0xff]
      %v1227 = vld [vmem:[%s358 + $0x91] sm:$0xff]
      %v1228 = vld [vmem:[%s358 + $0x99] sm:$0xff]
      %v1229 = vld [vmem:[%s358 + $0xa9] sm:$0xff]
      %v1230 = vld [vmem:[%s358 + $0xb1] sm:$0xff]
      %v1231 = vld [vmem:[%s358 + $0xc1] sm:$0xff]
      %v1232 = vld [vmem:[%s358 + $0xc9] sm:$0xff]
      %v1233 = vld [vmem:[%s358 + $0xd9] sm:$0xff]
      %v1234 = vld [vmem:[%s358 + $0xe1] sm:$0xff]
      %v1235 = vld [vmem:[%s358 + $0xf1] sm:$0xff]
      %v1236 = vld [vmem:[%s358 + $0xf9] sm:$0xff]
      %v1237 = vld [vmem:[%s358 + $0x109] sm:$0xff]
      %v1238 = vld [vmem:[%s358 + $0x111] sm:$0xff]
      %v1239 = vld [vmem:[%s358 + $0x121] sm:$0xff]
      %v1240 = vld [vmem:[%s358 + $0x129] sm:$0xff]
      %v1241 = vld [vmem:[%s358 + $0x139] sm:$0xff]
      %v1242 = vld [vmem:[%s358 + $0x141] sm:$0xff]
      %v1243 = vld [vmem:[%s358 + $0x151] sm:$0xff]
      %v1244 = vld [vmem:[%s358 + $0x159] sm:$0xff]
      %v1245 = vld [vmem:[%s358 + $0x169] sm:$0xff]
      %v1246 = vld [vmem:[%s358 + $0x171] sm:$0xff]
      %v1247 = vpack.c.bf16 %v1216, %v1215
      %v1248 = vpack.c.bf16 %v1218, %v1217
      %v1249 = vpack.c.bf16 %v1220, %v1219
      %v1250 = vpack.c.bf16 %v1222, %v1221
      %v1251 = vpack.c.bf16 %v1224, %v1223
      %v1252 = vpack.c.bf16 %v1226, %v1225
      %v1253 = vpack.c.bf16 %v1228, %v1227
      %v1254 = vpack.c.bf16 %v1230, %v1229
      %v1255 = vpack.c.bf16 %v1232, %v1231
      %v1256 = vpack.c.bf16 %v1234, %v1233
      %v1257 = vpack.c.bf16 %v1236, %v1235
      %v1258 = vpack.c.bf16 %v1238, %v1237
      %v1259 = vpack.c.bf16 %v1240, %v1239
      %v1260 = vpack.c.bf16 %v1242, %v1241
      %v1261 = vpack.c.bf16 %v1244, %v1243
      %v1262 = vpack.c.bf16 %v1246, %v1245
      %s1263 = scalar_lea.vmem %s1, 16
      %v1264 = vld [vmem:[%s1263] sm:$0xf]
      %v1266 = vsel %vm280, %v1247, 0
      %v1269 = vsel %vm280, %v1248, 0
      %v1272 = vsel %vm280, %v1249, 0
      %v1275 = vsel %vm280, %v1250, 0
      %v1278 = vsel %vm280, %v1251, 0
      %v1281 = vsel %vm280, %v1252, 0
      %v1284 = vsel %vm280, %v1253, 0
      %v1287 = vsel %vm280, %v1254, 0
      %v1290 = vsel %vm280, %v1255, 0
      %v1293 = vsel %vm280, %v1256, 0
      %v1296 = vsel %vm280, %v1257, 0
      %v1299 = vsel %vm280, %v1258, 0
      %v1302 = vsel %vm280, %v1259, 0
      %v1305 = vsel %vm280, %v1260, 0
      %v1308 = vsel %vm280, %v1261, 0
      %v1311 = vsel %vm280, %v1262, 0
      %v1314 = vsel %vm538, %v1264, 0
      %1316 = vmatpush.bf16.msra.mxu0 0
      %1317 = vmatpush.bf16.msra.mxu0 0
      %1318 = vmatpush.bf16.msra.mxu0 0
      %1319 = vmatpush.bf16.msra.mxu0 0
      %1320 = vmatpush.bf16.msra.mxu0 0
      %1321 = vmatpush.bf16.msra.mxu0 0
      %1322 = vmatpush.bf16.msra.mxu0 0
      %1323 = vmatpush.bf16.msra.mxu0 %v1314
      %1324 = vmatmul.bf16.gmra.mxu0 %v1266
      %v1325 = vpop.f32.mrf.mxu0
      %v1326 = vadd.f32 0.0, %v1325
      %v1327 = vpop.f32.mrf.mxu0
      %v1328 = vadd.f32 0.0, %v1327
      %1329 = vmatmul.bf16.gmra.mxu0 %v1269
      %v1330 = vpop.f32.mrf.mxu0
      %v1331 = vadd.f32 0.0, %v1330
      %v1332 = vpop.f32.mrf.mxu0
      %v1333 = vadd.f32 0.0, %v1332
      %1334 = vmatmul.bf16.gmra.mxu0 %v1272
      %v1335 = vpop.f32.mrf.mxu0
      %v1336 = vadd.f32 0.0, %v1335
      %v1337 = vpop.f32.mrf.mxu0
      %v1338 = vadd.f32 0.0, %v1337
      %1339 = vmatmul.bf16.gmra.mxu0 %v1275
      %v1340 = vpop.f32.mrf.mxu0
      %v1341 = vadd.f32 0.0, %v1340
      %v1342 = vpop.f32.mrf.mxu0
      %v1343 = vadd.f32 0.0, %v1342
      %1344 = vmatmul.bf16.gmra.mxu0 %v1278
      %v1345 = vpop.f32.mrf.mxu0
      %v1346 = vadd.f32 0.0, %v1345
      %v1347 = vpop.f32.mrf.mxu0
      %v1348 = vadd.f32 0.0, %v1347
      %1349 = vmatmul.bf16.gmra.mxu0 %v1281
      %v1350 = vpop.f32.mrf.mxu0
      %v1351 = vadd.f32 0.0, %v1350
      %v1352 = vpop.f32.mrf.mxu0
      %v1353 = vadd.f32 0.0, %v1352
      %1354 = vmatmul.bf16.gmra.mxu0 %v1284
      %v1355 = vpop.f32.mrf.mxu0
      %v1356 = vadd.f32 0.0, %v1355
      %v1357 = vpop.f32.mrf.mxu0
      %v1358 = vadd.f32 0.0, %v1357
      %1359 = vmatmul.bf16.gmra.mxu0 %v1287
      %v1360 = vpop.f32.mrf.mxu0
      %v1361 = vadd.f32 0.0, %v1360
      %v1362 = vpop.f32.mrf.mxu0
      %v1363 = vadd.f32 0.0, %v1362
      %1364 = vmatmul.bf16.gmra.mxu0 %v1290
      %v1365 = vpop.f32.mrf.mxu0
      %v1366 = vadd.f32 0.0, %v1365
      %v1367 = vpop.f32.mrf.mxu0
      %v1368 = vadd.f32 0.0, %v1367
      %1369 = vmatmul.bf16.gmra.mxu0 %v1293
      %v1370 = vpop.f32.mrf.mxu0
      %v1371 = vadd.f32 0.0, %v1370
      %v1372 = vpop.f32.mrf.mxu0
      %v1373 = vadd.f32 0.0, %v1372
      %1374 = vmatmul.bf16.gmra.mxu0 %v1296
      %v1375 = vpop.f32.mrf.mxu0
      %v1376 = vadd.f32 0.0, %v1375
      %v1377 = vpop.f32.mrf.mxu0
      %v1378 = vadd.f32 0.0, %v1377
      %1379 = vmatmul.bf16.gmra.mxu0 %v1299
      %v1380 = vpop.f32.mrf.mxu0
      %v1381 = vadd.f32 0.0, %v1380
      %v1382 = vpop.f32.mrf.mxu0
      %v1383 = vadd.f32 0.0, %v1382
      %1384 = vmatmul.bf16.gmra.mxu0 %v1302
      %v1385 = vpop.f32.mrf.mxu0
      %v1386 = vadd.f32 0.0, %v1385
      %v1387 = vpop.f32.mrf.mxu0
      %v1388 = vadd.f32 0.0, %v1387
      %1389 = vmatmul.bf16.gmra.mxu0 %v1305
      %v1390 = vpop.f32.mrf.mxu0
      %v1391 = vadd.f32 0.0, %v1390
      %v1392 = vpop.f32.mrf.mxu0
      %v1393 = vadd.f32 0.0, %v1392
      %1394 = vmatmul.bf16.gmra.mxu0 %v1308
      %v1395 = vpop.f32.mrf.mxu0
      %v1396 = vadd.f32 0.0, %v1395
      %v1397 = vpop.f32.mrf.mxu0
      %v1398 = vadd.f32 0.0, %v1397
      %1399 = vmatmul.bf16.gmra.mxu0 %v1311
      %v1400 = vpop.f32.mrf.mxu0
      %v1401 = vadd.f32 0.0, %v1400
      %v1402 = vpop.f32.mrf.mxu0
      %v1403 = vadd.f32 0.0, %v1402
      %1404 = vdwg.mxu0
      %v1405 = vadd.f32 %v1183, %v1326
      %v1406 = vadd.f32 %v1184, %v1328
      %v1407 = vadd.f32 %v1185, %v1331
      %v1408 = vadd.f32 %v1186, %v1333
      %v1409 = vadd.f32 %v1187, %v1336
      %v1410 = vadd.f32 %v1188, %v1338
      %v1411 = vadd.f32 %v1189, %v1341
      %v1412 = vadd.f32 %v1190, %v1343
      %v1413 = vadd.f32 %v1191, %v1346
      %v1414 = vadd.f32 %v1192, %v1348
      %v1415 = vadd.f32 %v1193, %v1351
      %v1416 = vadd.f32 %v1194, %v1353
      %v1417 = vadd.f32 %v1195, %v1356
      %v1418 = vadd.f32 %v1196, %v1358
      %v1419 = vadd.f32 %v1197, %v1361
      %v1420 = vadd.f32 %v1198, %v1363
      %v1421 = vadd.f32 %v1199, %v1366
      %v1422 = vadd.f32 %v1200, %v1368
      %v1423 = vadd.f32 %v1201, %v1371
      %v1424 = vadd.f32 %v1202, %v1373
      %v1425 = vadd.f32 %v1203, %v1376
      %v1426 = vadd.f32 %v1204, %v1378
      %v1427 = vadd.f32 %v1205, %v1381
      %v1428 = vadd.f32 %v1206, %v1383
      %v1429 = vadd.f32 %v1207, %v1386
      %v1430 = vadd.f32 %v1208, %v1388
      %v1431 = vadd.f32 %v1209, %v1391
      %v1432 = vadd.f32 %v1210, %v1393
      %v1433 = vadd.f32 %v1211, %v1396
      %v1434 = vadd.f32 %v1212, %v1398
      %v1435 = vadd.f32 %v1213, %v1401
      %v1436 = vadd.f32 %v1214, %v1403
      %v1437 = vld [vmem:[%s358 + $0x2] sm:$0xff]
      %v1438 = vld [vmem:[%s358 + $0xa] sm:$0xff]
      %v1439 = vld [vmem:[%s358 + $0x1a] sm:$0xff]
      %v1440 = vld [vmem:[%s358 + $0x22] sm:$0xff]
      %v1441 = vld [vmem:[%s358 + $0x32] sm:$0xff]
      %v1442 = vld [vmem:[%s358 + $0x3a] sm:$0xff]
      %v1443 = vld [vmem:[%s358 + $0x4a] sm:$0xff]
      %v1444 = vld [vmem:[%s358 + $0x52] sm:$0xff]
      %v1445 = vld [vmem:[%s358 + $0x62] sm:$0xff]
      %v1446 = vld [vmem:[%s358 + $0x6a] sm:$0xff]
      %v1447 = vld [vmem:[%s358 + $0x7a] sm:$0xff]
      %v1448 = vld [vmem:[%s358 + $0x82] sm:$0xff]
      %v1449 = vld [vmem:[%s358 + $0x92] sm:$0xff]
      %v1450 = vld [vmem:[%s358 + $0x9a] sm:$0xff]
      %v1451 = vld [vmem:[%s358 + $0xaa] sm:$0xff]
      %v1452 = vld [vmem:[%s358 + $0xb2] sm:$0xff]
      %v1453 = vld [vmem:[%s358 + $0xc2] sm:$0xff]
      %v1454 = vld [vmem:[%s358 + $0xca] sm:$0xff]
      %v1455 = vld [vmem:[%s358 + $0xda] sm:$0xff]
      %v1456 = vld [vmem:[%s358 + $0xe2] sm:$0xff]
      %v1457 = vld [vmem:[%s358 + $0xf2] sm:$0xff]
      %v1458 = vld [vmem:[%s358 + $0xfa] sm:$0xff]
      %v1459 = vld [vmem:[%s358 + $0x10a] sm:$0xff]
      %v1460 = vld [vmem:[%s358 + $0x112] sm:$0xff]
      %v1461 = vld [vmem:[%s358 + $0x122] sm:$0xff]
      %v1462 = vld [vmem:[%s358 + $0x12a] sm:$0xff]
      %v1463 = vld [vmem:[%s358 + $0x13a] sm:$0xff]
      %v1464 = vld [vmem:[%s358 + $0x142] sm:$0xff]
      %v1465 = vld [vmem:[%s358 + $0x152] sm:$0xff]
      %v1466 = vld [vmem:[%s358 + $0x15a] sm:$0xff]
      %v1467 = vld [vmem:[%s358 + $0x16a] sm:$0xff]
      %v1468 = vld [vmem:[%s358 + $0x172] sm:$0xff]
      %v1469 = vpack.c.bf16 %v1438, %v1437
      %v1470 = vpack.c.bf16 %v1440, %v1439
      %v1471 = vpack.c.bf16 %v1442, %v1441
      %v1472 = vpack.c.bf16 %v1444, %v1443
      %v1473 = vpack.c.bf16 %v1446, %v1445
      %v1474 = vpack.c.bf16 %v1448, %v1447
      %v1475 = vpack.c.bf16 %v1450, %v1449
      %v1476 = vpack.c.bf16 %v1452, %v1451
      %v1477 = vpack.c.bf16 %v1454, %v1453
      %v1478 = vpack.c.bf16 %v1456, %v1455
      %v1479 = vpack.c.bf16 %v1458, %v1457
      %v1480 = vpack.c.bf16 %v1460, %v1459
      %v1481 = vpack.c.bf16 %v1462, %v1461
      %v1482 = vpack.c.bf16 %v1464, %v1463
      %v1483 = vpack.c.bf16 %v1466, %v1465
      %v1484 = vpack.c.bf16 %v1468, %v1467
      %s1485 = scalar_lea.vmem %s1, 20
      %v1486 = vld [vmem:[%s1485] sm:$0xf]
      %v1488 = vsel %vm280, %v1469, 0
      %v1491 = vsel %vm280, %v1470, 0
      %v1494 = vsel %vm280, %v1471, 0
      %v1497 = vsel %vm280, %v1472, 0
      %v1500 = vsel %vm280, %v1473, 0
      %v1503 = vsel %vm280, %v1474, 0
      %v1506 = vsel %vm280, %v1475, 0
      %v1509 = vsel %vm280, %v1476, 0
      %v1512 = vsel %vm280, %v1477, 0
      %v1515 = vsel %vm280, %v1478, 0
      %v1518 = vsel %vm280, %v1479, 0
      %v1521 = vsel %vm280, %v1480, 0
      %v1524 = vsel %vm280, %v1481, 0
      %v1527 = vsel %vm280, %v1482, 0
      %v1530 = vsel %vm280, %v1483, 0
      %v1533 = vsel %vm280, %v1484, 0
      %v1536 = vsel %vm538, %v1486, 0
      %1538 = vmatpush.bf16.msra.mxu0 0
      %1539 = vmatpush.bf16.msra.mxu0 0
      %1540 = vmatpush.bf16.msra.mxu0 0
      %1541 = vmatpush.bf16.msra.mxu0 0
      %1542 = vmatpush.bf16.msra.mxu0 0
      %1543 = vmatpush.bf16.msra.mxu0 0
      %1544 = vmatpush.bf16.msra.mxu0 0
      %1545 = vmatpush.bf16.msra.mxu0 %v1536
      %1546 = vmatmul.bf16.gmra.mxu0 %v1488
      %v1547 = vpop.f32.mrf.mxu0
      %v1548 = vadd.f32 0.0, %v1547
      %v1549 = vpop.f32.mrf.mxu0
      %v1550 = vadd.f32 0.0, %v1549
      %1551 = vmatmul.bf16.gmra.mxu0 %v1491
      %v1552 = vpop.f32.mrf.mxu0
      %v1553 = vadd.f32 0.0, %v1552
      %v1554 = vpop.f32.mrf.mxu0
      %v1555 = vadd.f32 0.0, %v1554
      %1556 = vmatmul.bf16.gmra.mxu0 %v1494
      %v1557 = vpop.f32.mrf.mxu0
      %v1558 = vadd.f32 0.0, %v1557
      %v1559 = vpop.f32.mrf.mxu0
      %v1560 = vadd.f32 0.0, %v1559
      %1561 = vmatmul.bf16.gmra.mxu0 %v1497
      %v1562 = vpop.f32.mrf.mxu0
      %v1563 = vadd.f32 0.0, %v1562
      %v1564 = vpop.f32.mrf.mxu0
      %v1565 = vadd.f32 0.0, %v1564
      %1566 = vmatmul.bf16.gmra.mxu0 %v1500
      %v1567 = vpop.f32.mrf.mxu0
      %v1568 = vadd.f32 0.0, %v1567
      %v1569 = vpop.f32.mrf.mxu0
      %v1570 = vadd.f32 0.0, %v1569
      %1571 = vmatmul.bf16.gmra.mxu0 %v1503
      %v1572 = vpop.f32.mrf.mxu0
      %v1573 = vadd.f32 0.0, %v1572
      %v1574 = vpop.f32.mrf.mxu0
      %v1575 = vadd.f32 0.0, %v1574
      %1576 = vmatmul.bf16.gmra.mxu0 %v1506
      %v1577 = vpop.f32.mrf.mxu0
      %v1578 = vadd.f32 0.0, %v1577
      %v1579 = vpop.f32.mrf.mxu0
      %v1580 = vadd.f32 0.0, %v1579
      %1581 = vmatmul.bf16.gmra.mxu0 %v1509
      %v1582 = vpop.f32.mrf.mxu0
      %v1583 = vadd.f32 0.0, %v1582
      %v1584 = vpop.f32.mrf.mxu0
      %v1585 = vadd.f32 0.0, %v1584
      %1586 = vmatmul.bf16.gmra.mxu0 %v1512
      %v1587 = vpop.f32.mrf.mxu0
      %v1588 = vadd.f32 0.0, %v1587
      %v1589 = vpop.f32.mrf.mxu0
      %v1590 = vadd.f32 0.0, %v1589
      %1591 = vmatmul.bf16.gmra.mxu0 %v1515
      %v1592 = vpop.f32.mrf.mxu0
      %v1593 = vadd.f32 0.0, %v1592
      %v1594 = vpop.f32.mrf.mxu0
      %v1595 = vadd.f32 0.0, %v1594
      %1596 = vmatmul.bf16.gmra.mxu0 %v1518
      %v1597 = vpop.f32.mrf.mxu0
      %v1598 = vadd.f32 0.0, %v1597
      %v1599 = vpop.f32.mrf.mxu0
      %v1600 = vadd.f32 0.0, %v1599
      %1601 = vmatmul.bf16.gmra.mxu0 %v1521
      %v1602 = vpop.f32.mrf.mxu0
      %v1603 = vadd.f32 0.0, %v1602
      %v1604 = vpop.f32.mrf.mxu0
      %v1605 = vadd.f32 0.0, %v1604
      %1606 = vmatmul.bf16.gmra.mxu0 %v1524
      %v1607 = vpop.f32.mrf.mxu0
      %v1608 = vadd.f32 0.0, %v1607
      %v1609 = vpop.f32.mrf.mxu0
      %v1610 = vadd.f32 0.0, %v1609
      %1611 = vmatmul.bf16.gmra.mxu0 %v1527
      %v1612 = vpop.f32.mrf.mxu0
      %v1613 = vadd.f32 0.0, %v1612
      %v1614 = vpop.f32.mrf.mxu0
      %v1615 = vadd.f32 0.0, %v1614
      %1616 = vmatmul.bf16.gmra.mxu0 %v1530
      %v1617 = vpop.f32.mrf.mxu0
      %v1618 = vadd.f32 0.0, %v1617
      %v1619 = vpop.f32.mrf.mxu0
      %v1620 = vadd.f32 0.0, %v1619
      %1621 = vmatmul.bf16.gmra.mxu0 %v1533
      %v1622 = vpop.f32.mrf.mxu0
      %v1623 = vadd.f32 0.0, %v1622
      %v1624 = vpop.f32.mrf.mxu0
      %v1625 = vadd.f32 0.0, %v1624
      %1626 = vdwg.mxu0
      %v1627 = vadd.f32 %v1405, %v1548
      %v1628 = vadd.f32 %v1406, %v1550
      %v1629 = vadd.f32 %v1407, %v1553
      %v1630 = vadd.f32 %v1408, %v1555
      %v1631 = vadd.f32 %v1409, %v1558
      %v1632 = vadd.f32 %v1410, %v1560
      %v1633 = vadd.f32 %v1411, %v1563
      %v1634 = vadd.f32 %v1412, %v1565
      %v1635 = vadd.f32 %v1413, %v1568
      %v1636 = vadd.f32 %v1414, %v1570
      %v1637 = vadd.f32 %v1415, %v1573
      %v1638 = vadd.f32 %v1416, %v1575
      %v1639 = vadd.f32 %v1417, %v1578
      %v1640 = vadd.f32 %v1418, %v1580
      %v1641 = vadd.f32 %v1419, %v1583
      %v1642 = vadd.f32 %v1420, %v1585
      %v1643 = vadd.f32 %v1421, %v1588
      %v1644 = vadd.f32 %v1422, %v1590
      %v1645 = vadd.f32 %v1423, %v1593
      %v1646 = vadd.f32 %v1424, %v1595
      %v1647 = vadd.f32 %v1425, %v1598
      %v1648 = vadd.f32 %v1426, %v1600
      %v1649 = vadd.f32 %v1427, %v1603
      %v1650 = vadd.f32 %v1428, %v1605
      %v1651 = vadd.f32 %v1429, %v1608
      %v1652 = vadd.f32 %v1430, %v1610
      %v1653 = vadd.f32 %v1431, %v1613
      %v1654 = vadd.f32 %v1432, %v1615
      %v1655 = vadd.f32 %v1433, %v1618
      %v1656 = vadd.f32 %v1434, %v1620
      %v1657 = vadd.f32 %v1435, %v1623
      %v1658 = vadd.f32 %v1436, %v1625
      %s1659 = scalar_lea.vmem [#allocation2], 48
      %v1660 = vld [vmem:[%s1659] sm:$0xff]
      %v1661 = vld [vmem:[%s1659 + $0x8] sm:$0xff]
      %v1662 = vld [vmem:[%s1659 + $0x18] sm:$0xff]
      %v1663 = vld [vmem:[%s1659 + $0x20] sm:$0xff]
      %v1664 = vld [vmem:[%s1659 + $0x30] sm:$0xff]
      %v1665 = vld [vmem:[%s1659 + $0x38] sm:$0xff]
      %v1666 = vld [vmem:[%s1659 + $0x48] sm:$0xff]
      %v1667 = vld [vmem:[%s1659 + $0x50] sm:$0xff]
      %v1668 = vld [vmem:[%s1659 + $0x60] sm:$0xff]
      %v1669 = vld [vmem:[%s1659 + $0x68] sm:$0xff]
      %v1670 = vld [vmem:[%s1659 + $0x78] sm:$0xff]
      %v1671 = vld [vmem:[%s1659 + $0x80] sm:$0xff]
      %v1672 = vld [vmem:[%s1659 + $0x90] sm:$0xff]
      %v1673 = vld [vmem:[%s1659 + $0x98] sm:$0xff]
      %v1674 = vld [vmem:[%s1659 + $0xa8] sm:$0xff]
      %v1675 = vld [vmem:[%s1659 + $0xb0] sm:$0xff]
      %v1676 = vld [vmem:[%s1659 + $0xc0] sm:$0xff]
      %v1677 = vld [vmem:[%s1659 + $0xc8] sm:$0xff]
      %v1678 = vld [vmem:[%s1659 + $0xd8] sm:$0xff]
      %v1679 = vld [vmem:[%s1659 + $0xe0] sm:$0xff]
      %v1680 = vld [vmem:[%s1659 + $0xf0] sm:$0xff]
      %v1681 = vld [vmem:[%s1659 + $0xf8] sm:$0xff]
      %v1682 = vld [vmem:[%s1659 + $0x108] sm:$0xff]
      %v1683 = vld [vmem:[%s1659 + $0x110] sm:$0xff]
      %v1684 = vld [vmem:[%s1659 + $0x120] sm:$0xff]
      %v1685 = vld [vmem:[%s1659 + $0x128] sm:$0xff]
      %v1686 = vld [vmem:[%s1659 + $0x138] sm:$0xff]
      %v1687 = vld [vmem:[%s1659 + $0x140] sm:$0xff]
      %v1688 = vld [vmem:[%s1659 + $0x150] sm:$0xff]
      %v1689 = vld [vmem:[%s1659 + $0x158] sm:$0xff]
      %v1690 = vld [vmem:[%s1659 + $0x168] sm:$0xff]
      %v1691 = vld [vmem:[%s1659 + $0x170] sm:$0xff]
      %v1692 = vpack.c.bf16 %v1661, %v1660
      %v1693 = vpack.c.bf16 %v1663, %v1662
      %v1694 = vpack.c.bf16 %v1665, %v1664
      %v1695 = vpack.c.bf16 %v1667, %v1666
      %v1696 = vpack.c.bf16 %v1669, %v1668
      %v1697 = vpack.c.bf16 %v1671, %v1670
      %v1698 = vpack.c.bf16 %v1673, %v1672
      %v1699 = vpack.c.bf16 %v1675, %v1674
      %v1700 = vpack.c.bf16 %v1677, %v1676
      %v1701 = vpack.c.bf16 %v1679, %v1678
      %v1702 = vpack.c.bf16 %v1681, %v1680
      %v1703 = vpack.c.bf16 %v1683, %v1682
      %v1704 = vpack.c.bf16 %v1685, %v1684
      %v1705 = vpack.c.bf16 %v1687, %v1686
      %v1706 = vpack.c.bf16 %v1689, %v1688
      %v1707 = vpack.c.bf16 %v1691, %v1690
      %s1708 = scalar_lea.vmem %s1, 24
      %v1709 = vld [vmem:[%s1708] sm:$0xf]
      %v1711 = vsel %vm280, %v1692, 0
      %v1714 = vsel %vm280, %v1693, 0
      %v1717 = vsel %vm280, %v1694, 0
      %v1720 = vsel %vm280, %v1695, 0
      %v1723 = vsel %vm280, %v1696, 0
      %v1726 = vsel %vm280, %v1697, 0
      %v1729 = vsel %vm280, %v1698, 0
      %v1732 = vsel %vm280, %v1699, 0
      %v1735 = vsel %vm280, %v1700, 0
      %v1738 = vsel %vm280, %v1701, 0
      %v1741 = vsel %vm280, %v1702, 0
      %v1744 = vsel %vm280, %v1703, 0
      %v1747 = vsel %vm280, %v1704, 0
      %v1750 = vsel %vm280, %v1705, 0
      %v1753 = vsel %vm280, %v1706, 0
      %v1756 = vsel %vm280, %v1707, 0
      %v1759 = vsel %vm538, %v1709, 0
      %1761 = vmatpush.bf16.msra.mxu0 0
      %1762 = vmatpush.bf16.msra.mxu0 0
      %1763 = vmatpush.bf16.msra.mxu0 0
      %1764 = vmatpush.bf16.msra.mxu0 0
      %1765 = vmatpush.bf16.msra.mxu0 0
      %1766 = vmatpush.bf16.msra.mxu0 0
      %1767 = vmatpush.bf16.msra.mxu0 0
      %1768 = vmatpush.bf16.msra.mxu0 %v1759
      %1769 = vmatmul.bf16.gmra.mxu0 %v1711
      %v1770 = vpop.f32.mrf.mxu0
      %v1771 = vadd.f32 0.0, %v1770
      %v1772 = vpop.f32.mrf.mxu0
      %v1773 = vadd.f32 0.0, %v1772
      %1774 = vmatmul.bf16.gmra.mxu0 %v1714
      %v1775 = vpop.f32.mrf.mxu0
      %v1776 = vadd.f32 0.0, %v1775
      %v1777 = vpop.f32.mrf.mxu0
      %v1778 = vadd.f32 0.0, %v1777
      %1779 = vmatmul.bf16.gmra.mxu0 %v1717
      %v1780 = vpop.f32.mrf.mxu0
      %v1781 = vadd.f32 0.0, %v1780
      %v1782 = vpop.f32.mrf.mxu0
      %v1783 = vadd.f32 0.0, %v1782
      %1784 = vmatmul.bf16.gmra.mxu0 %v1720
      %v1785 = vpop.f32.mrf.mxu0
      %v1786 = vadd.f32 0.0, %v1785
      %v1787 = vpop.f32.mrf.mxu0
      %v1788 = vadd.f32 0.0, %v1787
      %1789 = vmatmul.bf16.gmra.mxu0 %v1723
      %v1790 = vpop.f32.mrf.mxu0
      %v1791 = vadd.f32 0.0, %v1790
      %v1792 = vpop.f32.mrf.mxu0
      %v1793 = vadd.f32 0.0, %v1792
      %1794 = vmatmul.bf16.gmra.mxu0 %v1726
      %v1795 = vpop.f32.mrf.mxu0
      %v1796 = vadd.f32 0.0, %v1795
      %v1797 = vpop.f32.mrf.mxu0
      %v1798 = vadd.f32 0.0, %v1797
      %1799 = vmatmul.bf16.gmra.mxu0 %v1729
      %v1800 = vpop.f32.mrf.mxu0
      %v1801 = vadd.f32 0.0, %v1800
      %v1802 = vpop.f32.mrf.mxu0
      %v1803 = vadd.f32 0.0, %v1802
      %1804 = vmatmul.bf16.gmra.mxu0 %v1732
      %v1805 = vpop.f32.mrf.mxu0
      %v1806 = vadd.f32 0.0, %v1805
      %v1807 = vpop.f32.mrf.mxu0
      %v1808 = vadd.f32 0.0, %v1807
      %1809 = vmatmul.bf16.gmra.mxu0 %v1735
      %v1810 = vpop.f32.mrf.mxu0
      %v1811 = vadd.f32 0.0, %v1810
      %v1812 = vpop.f32.mrf.mxu0
      %v1813 = vadd.f32 0.0, %v1812
      %1814 = vmatmul.bf16.gmra.mxu0 %v1738
      %v1815 = vpop.f32.mrf.mxu0
      %v1816 = vadd.f32 0.0, %v1815
      %v1817 = vpop.f32.mrf.mxu0
      %v1818 = vadd.f32 0.0, %v1817
      %1819 = vmatmul.bf16.gmra.mxu0 %v1741
      %v1820 = vpop.f32.mrf.mxu0
      %v1821 = vadd.f32 0.0, %v1820
      %v1822 = vpop.f32.mrf.mxu0
      %v1823 = vadd.f32 0.0, %v1822
      %1824 = vmatmul.bf16.gmra.mxu0 %v1744
      %v1825 = vpop.f32.mrf.mxu0
      %v1826 = vadd.f32 0.0, %v1825
      %v1827 = vpop.f32.mrf.mxu0
      %v1828 = vadd.f32 0.0, %v1827
      %1829 = vmatmul.bf16.gmra.mxu0 %v1747
      %v1830 = vpop.f32.mrf.mxu0
      %v1831 = vadd.f32 0.0, %v1830
      %v1832 = vpop.f32.mrf.mxu0
      %v1833 = vadd.f32 0.0, %v1832
      %1834 = vmatmul.bf16.gmra.mxu0 %v1750
      %v1835 = vpop.f32.mrf.mxu0
      %v1836 = vadd.f32 0.0, %v1835
      %v1837 = vpop.f32.mrf.mxu0
      %v1838 = vadd.f32 0.0, %v1837
      %1839 = vmatmul.bf16.gmra.mxu0 %v1753
      %v1840 = vpop.f32.mrf.mxu0
      %v1841 = vadd.f32 0.0, %v1840
      %v1842 = vpop.f32.mrf.mxu0
      %v1843 = vadd.f32 0.0, %v1842
      %1844 = vmatmul.bf16.gmra.mxu0 %v1756
      %v1845 = vpop.f32.mrf.mxu0
      %v1846 = vadd.f32 0.0, %v1845
      %v1847 = vpop.f32.mrf.mxu0
      %v1848 = vadd.f32 0.0, %v1847
      %1849 = vdwg.mxu0
      %v1850 = vadd.f32 %v1627, %v1771
      %v1851 = vadd.f32 %v1628, %v1773
      %v1852 = vadd.f32 %v1629, %v1776
      %v1853 = vadd.f32 %v1630, %v1778
      %v1854 = vadd.f32 %v1631, %v1781
      %v1855 = vadd.f32 %v1632, %v1783
      %v1856 = vadd.f32 %v1633, %v1786
      %v1857 = vadd.f32 %v1634, %v1788
      %v1858 = vadd.f32 %v1635, %v1791
      %v1859 = vadd.f32 %v1636, %v1793
      %v1860 = vadd.f32 %v1637, %v1796
      %v1861 = vadd.f32 %v1638, %v1798
      %v1862 = vadd.f32 %v1639, %v1801
      %v1863 = vadd.f32 %v1640, %v1803
      %v1864 = vadd.f32 %v1641, %v1806
      %v1865 = vadd.f32 %v1642, %v1808
      %v1866 = vadd.f32 %v1643, %v1811
      %v1867 = vadd.f32 %v1644, %v1813
      %v1868 = vadd.f32 %v1645, %v1816
      %v1869 = vadd.f32 %v1646, %v1818
      %v1870 = vadd.f32 %v1647, %v1821
      %v1871 = vadd.f32 %v1648, %v1823
      %v1872 = vadd.f32 %v1649, %v1826
      %v1873 = vadd.f32 %v1650, %v1828
      %v1874 = vadd.f32 %v1651, %v1831
      %v1875 = vadd.f32 %v1652, %v1833
      %v1876 = vadd.f32 %v1653, %v1836
      %v1877 = vadd.f32 %v1654, %v1838
      %v1878 = vadd.f32 %v1655, %v1841
      %v1879 = vadd.f32 %v1656, %v1843
      %v1880 = vadd.f32 %v1657, %v1846
      %v1881 = vadd.f32 %v1658, %v1848
      %v1882 = vld [vmem:[%s1659 + $0x1] sm:$0xff]
      %v1883 = vld [vmem:[%s1659 + $0x9] sm:$0xff]
      %v1884 = vld [vmem:[%s1659 + $0x19] sm:$0xff]
      %v1885 = vld [vmem:[%s1659 + $0x21] sm:$0xff]
      %v1886 = vld [vmem:[%s1659 + $0x31] sm:$0xff]
      %v1887 = vld [vmem:[%s1659 + $0x39] sm:$0xff]
      %v1888 = vld [vmem:[%s1659 + $0x49] sm:$0xff]
      %v1889 = vld [vmem:[%s1659 + $0x51] sm:$0xff]
      %v1890 = vld [vmem:[%s1659 + $0x61] sm:$0xff]
      %v1891 = vld [vmem:[%s1659 + $0x69] sm:$0xff]
      %v1892 = vld [vmem:[%s1659 + $0x79] sm:$0xff]
      %v1893 = vld [vmem:[%s1659 + $0x81] sm:$0xff]
      %v1894 = vld [vmem:[%s1659 + $0x91] sm:$0xff]
      %v1895 = vld [vmem:[%s1659 + $0x99] sm:$0xff]
      %v1896 = vld [vmem:[%s1659 + $0xa9] sm:$0xff]
      %v1897 = vld [vmem:[%s1659 + $0xb1] sm:$0xff]
      %v1898 = vld [vmem:[%s1659 + $0xc1] sm:$0xff]
      %v1899 = vld [vmem:[%s1659 + $0xc9] sm:$0xff]
      %v1900 = vld [vmem:[%s1659 + $0xd9] sm:$0xff]
      %v1901 = vld [vmem:[%s1659 + $0xe1] sm:$0xff]
      %v1902 = vld [vmem:[%s1659 + $0xf1] sm:$0xff]
      %v1903 = vld [vmem:[%s1659 + $0xf9] sm:$0xff]
      %v1904 = vld [vmem:[%s1659 + $0x109] sm:$0xff]
      %v1905 = vld [vmem:[%s1659 + $0x111] sm:$0xff]
      %v1906 = vld [vmem:[%s1659 + $0x121] sm:$0xff]
      %v1907 = vld [vmem:[%s1659 + $0x129] sm:$0xff]
      %v1908 = vld [vmem:[%s1659 + $0x139] sm:$0xff]
      %v1909 = vld [vmem:[%s1659 + $0x141] sm:$0xff]
      %v1910 = vld [vmem:[%s1659 + $0x151] sm:$0xff]
      %v1911 = vld [vmem:[%s1659 + $0x159] sm:$0xff]
      %v1912 = vld [vmem:[%s1659 + $0x169] sm:$0xff]
      %v1913 = vld [vmem:[%s1659 + $0x171] sm:$0xff]
      %v1914 = vpack.c.bf16 %v1883, %v1882
      %v1915 = vpack.c.bf16 %v1885, %v1884
      %v1916 = vpack.c.bf16 %v1887, %v1886
      %v1917 = vpack.c.bf16 %v1889, %v1888
      %v1918 = vpack.c.bf16 %v1891, %v1890
      %v1919 = vpack.c.bf16 %v1893, %v1892
      %v1920 = vpack.c.bf16 %v1895, %v1894
      %v1921 = vpack.c.bf16 %v1897, %v1896
      %v1922 = vpack.c.bf16 %v1899, %v1898
      %v1923 = vpack.c.bf16 %v1901, %v1900
      %v1924 = vpack.c.bf16 %v1903, %v1902
      %v1925 = vpack.c.bf16 %v1905, %v1904
      %v1926 = vpack.c.bf16 %v1907, %v1906
      %v1927 = vpack.c.bf16 %v1909, %v1908
      %v1928 = vpack.c.bf16 %v1911, %v1910
      %v1929 = vpack.c.bf16 %v1913, %v1912
      %s1930 = scalar_lea.vmem %s1, 28
      %v1931 = vld [vmem:[%s1930] sm:$0xf]
      %v1933 = vsel %vm280, %v1914, 0
      %v1936 = vsel %vm280, %v1915, 0
      %v1939 = vsel %vm280, %v1916, 0
      %v1942 = vsel %vm280, %v1917, 0
      %v1945 = vsel %vm280, %v1918, 0
      %v1948 = vsel %vm280, %v1919, 0
      %v1951 = vsel %vm280, %v1920, 0
      %v1954 = vsel %vm280, %v1921, 0
      %v1957 = vsel %vm280, %v1922, 0
      %v1960 = vsel %vm280, %v1923, 0
      %v1963 = vsel %vm280, %v1924, 0
      %v1966 = vsel %vm280, %v1925, 0
      %v1969 = vsel %vm280, %v1926, 0
      %v1972 = vsel %vm280, %v1927, 0
      %v1975 = vsel %vm280, %v1928, 0
      %v1978 = vsel %vm280, %v1929, 0
      %v1981 = vsel %vm538, %v1931, 0
      %1983 = vmatpush.bf16.msra.mxu0 0
      %1984 = vmatpush.bf16.msra.mxu0 0
      %1985 = vmatpush.bf16.msra.mxu0 0
      %1986 = vmatpush.bf16.msra.mxu0 0
      %1987 = vmatpush.bf16.msra.mxu0 0
      %1988 = vmatpush.bf16.msra.mxu0 0
      %1989 = vmatpush.bf16.msra.mxu0 0
      %1990 = vmatpush.bf16.msra.mxu0 %v1981
      %1991 = vmatmul.bf16.gmra.mxu0 %v1933
      %v1992 = vpop.f32.mrf.mxu0
      %v1993 = vadd.f32 0.0, %v1992
      %v1994 = vpop.f32.mrf.mxu0
      %v1995 = vadd.f32 0.0, %v1994
      %1996 = vmatmul.bf16.gmra.mxu0 %v1936
      %v1997 = vpop.f32.mrf.mxu0
      %v1998 = vadd.f32 0.0, %v1997
      %v1999 = vpop.f32.mrf.mxu0
      %v2000 = vadd.f32 0.0, %v1999
      %2001 = vmatmul.bf16.gmra.mxu0 %v1939
      %v2002 = vpop.f32.mrf.mxu0
      %v2003 = vadd.f32 0.0, %v2002
      %v2004 = vpop.f32.mrf.mxu0
      %v2005 = vadd.f32 0.0, %v2004
      %2006 = vmatmul.bf16.gmra.mxu0 %v1942
      %v2007 = vpop.f32.mrf.mxu0
      %v2008 = vadd.f32 0.0, %v2007
      %v2009 = vpop.f32.mrf.mxu0
      %v2010 = vadd.f32 0.0, %v2009
      %2011 = vmatmul.bf16.gmra.mxu0 %v1945
      %v2012 = vpop.f32.mrf.mxu0
      %v2013 = vadd.f32 0.0, %v2012
      %v2014 = vpop.f32.mrf.mxu0
      %v2015 = vadd.f32 0.0, %v2014
      %2016 = vmatmul.bf16.gmra.mxu0 %v1948
      %v2017 = vpop.f32.mrf.mxu0
      %v2018 = vadd.f32 0.0, %v2017
      %v2019 = vpop.f32.mrf.mxu0
      %v2020 = vadd.f32 0.0, %v2019
      %2021 = vmatmul.bf16.gmra.mxu0 %v1951
      %v2022 = vpop.f32.mrf.mxu0
      %v2023 = vadd.f32 0.0, %v2022
      %v2024 = vpop.f32.mrf.mxu0
      %v2025 = vadd.f32 0.0, %v2024
      %2026 = vmatmul.bf16.gmra.mxu0 %v1954
      %v2027 = vpop.f32.mrf.mxu0
      %v2028 = vadd.f32 0.0, %v2027
      %v2029 = vpop.f32.mrf.mxu0
      %v2030 = vadd.f32 0.0, %v2029
      %2031 = vmatmul.bf16.gmra.mxu0 %v1957
      %v2032 = vpop.f32.mrf.mxu0
      %v2033 = vadd.f32 0.0, %v2032
      %v2034 = vpop.f32.mrf.mxu0
      %v2035 = vadd.f32 0.0, %v2034
      %2036 = vmatmul.bf16.gmra.mxu0 %v1960
      %v2037 = vpop.f32.mrf.mxu0
      %v2038 = vadd.f32 0.0, %v2037
      %v2039 = vpop.f32.mrf.mxu0
      %v2040 = vadd.f32 0.0, %v2039
      %2041 = vmatmul.bf16.gmra.mxu0 %v1963
      %v2042 = vpop.f32.mrf.mxu0
      %v2043 = vadd.f32 0.0, %v2042
      %v2044 = vpop.f32.mrf.mxu0
      %v2045 = vadd.f32 0.0, %v2044
      %2046 = vmatmul.bf16.gmra.mxu0 %v1966
      %v2047 = vpop.f32.mrf.mxu0
      %v2048 = vadd.f32 0.0, %v2047
      %v2049 = vpop.f32.mrf.mxu0
      %v2050 = vadd.f32 0.0, %v2049
      %2051 = vmatmul.bf16.gmra.mxu0 %v1969
      %v2052 = vpop.f32.mrf.mxu0
      %v2053 = vadd.f32 0.0, %v2052
      %v2054 = vpop.f32.mrf.mxu0
      %v2055 = vadd.f32 0.0, %v2054
      %2056 = vmatmul.bf16.gmra.mxu0 %v1972
      %v2057 = vpop.f32.mrf.mxu0
      %v2058 = vadd.f32 0.0, %v2057
      %v2059 = vpop.f32.mrf.mxu0
      %v2060 = vadd.f32 0.0, %v2059
      %2061 = vmatmul.bf16.gmra.mxu0 %v1975
      %v2062 = vpop.f32.mrf.mxu0
      %v2063 = vadd.f32 0.0, %v2062
      %v2064 = vpop.f32.mrf.mxu0
      %v2065 = vadd.f32 0.0, %v2064
      %2066 = vmatmul.bf16.gmra.mxu0 %v1978
      %v2067 = vpop.f32.mrf.mxu0
      %v2068 = vadd.f32 0.0, %v2067
      %v2069 = vpop.f32.mrf.mxu0
      %v2070 = vadd.f32 0.0, %v2069
      %2071 = vdwg.mxu0
      %v2072 = vadd.f32 %v1850, %v1993
      %v2073 = vadd.f32 %v1851, %v1995
      %v2074 = vadd.f32 %v1852, %v1998
      %v2075 = vadd.f32 %v1853, %v2000
      %v2076 = vadd.f32 %v1854, %v2003
      %v2077 = vadd.f32 %v1855, %v2005
      %v2078 = vadd.f32 %v1856, %v2008
      %v2079 = vadd.f32 %v1857, %v2010
      %v2080 = vadd.f32 %v1858, %v2013
      %v2081 = vadd.f32 %v1859, %v2015
      %v2082 = vadd.f32 %v1860, %v2018
      %v2083 = vadd.f32 %v1861, %v2020
      %v2084 = vadd.f32 %v1862, %v2023
      %v2085 = vadd.f32 %v1863, %v2025
      %v2086 = vadd.f32 %v1864, %v2028
      %v2087 = vadd.f32 %v1865, %v2030
      %v2088 = vadd.f32 %v1866, %v2033
      %v2089 = vadd.f32 %v1867, %v2035
      %v2090 = vadd.f32 %v1868, %v2038
      %v2091 = vadd.f32 %v1869, %v2040
      %v2092 = vadd.f32 %v1870, %v2043
      %v2093 = vadd.f32 %v1871, %v2045
      %v2094 = vadd.f32 %v1872, %v2048
      %v2095 = vadd.f32 %v1873, %v2050
      %v2096 = vadd.f32 %v1874, %v2053
      %v2097 = vadd.f32 %v1875, %v2055
      %v2098 = vadd.f32 %v1876, %v2058
      %v2099 = vadd.f32 %v1877, %v2060
      %v2100 = vadd.f32 %v1878, %v2063
      %v2101 = vadd.f32 %v1879, %v2065
      %v2102 = vadd.f32 %v1880, %v2068
      %v2103 = vadd.f32 %v1881, %v2070
      %v2104 = vld [vmem:[%s1659 + $0x2] sm:$0xff]
      %v2105 = vld [vmem:[%s1659 + $0xa] sm:$0xff]
      %v2106 = vld [vmem:[%s1659 + $0x1a] sm:$0xff]
      %v2107 = vld [vmem:[%s1659 + $0x22] sm:$0xff]
      %v2108 = vld [vmem:[%s1659 + $0x32] sm:$0xff]
      %v2109 = vld [vmem:[%s1659 + $0x3a] sm:$0xff]
      %v2110 = vld [vmem:[%s1659 + $0x4a] sm:$0xff]
      %v2111 = vld [vmem:[%s1659 + $0x52] sm:$0xff]
      %v2112 = vld [vmem:[%s1659 + $0x62] sm:$0xff]
      %v2113 = vld [vmem:[%s1659 + $0x6a] sm:$0xff]
      %v2114 = vld [vmem:[%s1659 + $0x7a] sm:$0xff]
      %v2115 = vld [vmem:[%s1659 + $0x82] sm:$0xff]
      %v2116 = vld [vmem:[%s1659 + $0x92] sm:$0xff]
      %v2117 = vld [vmem:[%s1659 + $0x9a] sm:$0xff]
      %v2118 = vld [vmem:[%s1659 + $0xaa] sm:$0xff]
      %v2119 = vld [vmem:[%s1659 + $0xb2] sm:$0xff]
      %v2120 = vld [vmem:[%s1659 + $0xc2] sm:$0xff]
      %v2121 = vld [vmem:[%s1659 + $0xca] sm:$0xff]
      %v2122 = vld [vmem:[%s1659 + $0xda] sm:$0xff]
      %v2123 = vld [vmem:[%s1659 + $0xe2] sm:$0xff]
      %v2124 = vld [vmem:[%s1659 + $0xf2] sm:$0xff]
      %v2125 = vld [vmem:[%s1659 + $0xfa] sm:$0xff]
      %v2126 = vld [vmem:[%s1659 + $0x10a] sm:$0xff]
      %v2127 = vld [vmem:[%s1659 + $0x112] sm:$0xff]
      %v2128 = vld [vmem:[%s1659 + $0x122] sm:$0xff]
      %v2129 = vld [vmem:[%s1659 + $0x12a] sm:$0xff]
      %v2130 = vld [vmem:[%s1659 + $0x13a] sm:$0xff]
      %v2131 = vld [vmem:[%s1659 + $0x142] sm:$0xff]
      %v2132 = vld [vmem:[%s1659 + $0x152] sm:$0xff]
      %v2133 = vld [vmem:[%s1659 + $0x15a] sm:$0xff]
      %v2134 = vld [vmem:[%s1659 + $0x16a] sm:$0xff]
      %v2135 = vld [vmem:[%s1659 + $0x172] sm:$0xff]
      %v2136 = vpack.c.bf16 %v2105, %v2104
      %v2137 = vpack.c.bf16 %v2107, %v2106
      %v2138 = vpack.c.bf16 %v2109, %v2108
      %v2139 = vpack.c.bf16 %v2111, %v2110
      %v2140 = vpack.c.bf16 %v2113, %v2112
      %v2141 = vpack.c.bf16 %v2115, %v2114
      %v2142 = vpack.c.bf16 %v2117, %v2116
      %v2143 = vpack.c.bf16 %v2119, %v2118
      %v2144 = vpack.c.bf16 %v2121, %v2120
      %v2145 = vpack.c.bf16 %v2123, %v2122
      %v2146 = vpack.c.bf16 %v2125, %v2124
      %v2147 = vpack.c.bf16 %v2127, %v2126
      %v2148 = vpack.c.bf16 %v2129, %v2128
      %v2149 = vpack.c.bf16 %v2131, %v2130
      %v2150 = vpack.c.bf16 %v2133, %v2132
      %v2151 = vpack.c.bf16 %v2135, %v2134
      %s2152 = scalar_lea.vmem %s1, 32
      %v2153 = vld [vmem:[%s2152] sm:$0xf]
      %v2155 = vsel %vm280, %v2136, 0
      %v2158 = vsel %vm280, %v2137, 0
      %v2161 = vsel %vm280, %v2138, 0
      %v2164 = vsel %vm280, %v2139, 0
      %v2167 = vsel %vm280, %v2140, 0
      %v2170 = vsel %vm280, %v2141, 0
      %v2173 = vsel %vm280, %v2142, 0
      %v2176 = vsel %vm280, %v2143, 0
      %v2179 = vsel %vm280, %v2144, 0
      %v2182 = vsel %vm280, %v2145, 0
      %v2185 = vsel %vm280, %v2146, 0
      %v2188 = vsel %vm280, %v2147, 0
      %v2191 = vsel %vm280, %v2148, 0
      %v2194 = vsel %vm280, %v2149, 0
      %v2197 = vsel %vm280, %v2150, 0
      %v2200 = vsel %vm280, %v2151, 0
      %v2203 = vsel %vm538, %v2153, 0
      %2205 = vmatpush.bf16.msra.mxu0 0
      %2206 = vmatpush.bf16.msra.mxu0 0
      %2207 = vmatpush.bf16.msra.mxu0 0
      %2208 = vmatpush.bf16.msra.mxu0 0
      %2209 = vmatpush.bf16.msra.mxu0 0
      %2210 = vmatpush.bf16.msra.mxu0 0
      %2211 = vmatpush.bf16.msra.mxu0 0
      %2212 = vmatpush.bf16.msra.mxu0 %v2203
      %2213 = vmatmul.bf16.gmra.mxu0 %v2155
      %v2214 = vpop.f32.mrf.mxu0
      %v2215 = vadd.f32 0.0, %v2214
      %v2216 = vpop.f32.mrf.mxu0
      %v2217 = vadd.f32 0.0, %v2216
      %2218 = vmatmul.bf16.gmra.mxu0 %v2158
      %v2219 = vpop.f32.mrf.mxu0
      %v2220 = vadd.f32 0.0, %v2219
      %v2221 = vpop.f32.mrf.mxu0
      %v2222 = vadd.f32 0.0, %v2221
      %2223 = vmatmul.bf16.gmra.mxu0 %v2161
      %v2224 = vpop.f32.mrf.mxu0
      %v2225 = vadd.f32 0.0, %v2224
      %v2226 = vpop.f32.mrf.mxu0
      %v2227 = vadd.f32 0.0, %v2226
      %2228 = vmatmul.bf16.gmra.mxu0 %v2164
      %v2229 = vpop.f32.mrf.mxu0
      %v2230 = vadd.f32 0.0, %v2229
      %v2231 = vpop.f32.mrf.mxu0
      %v2232 = vadd.f32 0.0, %v2231
      %2233 = vmatmul.bf16.gmra.mxu0 %v2167
      %v2234 = vpop.f32.mrf.mxu0
      %v2235 = vadd.f32 0.0, %v2234
      %v2236 = vpop.f32.mrf.mxu0
      %v2237 = vadd.f32 0.0, %v2236
      %2238 = vmatmul.bf16.gmra.mxu0 %v2170
      %v2239 = vpop.f32.mrf.mxu0
      %v2240 = vadd.f32 0.0, %v2239
      %v2241 = vpop.f32.mrf.mxu0
      %v2242 = vadd.f32 0.0, %v2241
      %2243 = vmatmul.bf16.gmra.mxu0 %v2173
      %v2244 = vpop.f32.mrf.mxu0
      %v2245 = vadd.f32 0.0, %v2244
      %v2246 = vpop.f32.mrf.mxu0
      %v2247 = vadd.f32 0.0, %v2246
      %2248 = vmatmul.bf16.gmra.mxu0 %v2176
      %v2249 = vpop.f32.mrf.mxu0
      %v2250 = vadd.f32 0.0, %v2249
      %v2251 = vpop.f32.mrf.mxu0
      %v2252 = vadd.f32 0.0, %v2251
      %2253 = vmatmul.bf16.gmra.mxu0 %v2179
      %v2254 = vpop.f32.mrf.mxu0
      %v2255 = vadd.f32 0.0, %v2254
      %v2256 = vpop.f32.mrf.mxu0
      %v2257 = vadd.f32 0.0, %v2256
      %2258 = vmatmul.bf16.gmra.mxu0 %v2182
      %v2259 = vpop.f32.mrf.mxu0
      %v2260 = vadd.f32 0.0, %v2259
      %v2261 = vpop.f32.mrf.mxu0
      %v2262 = vadd.f32 0.0, %v2261
      %2263 = vmatmul.bf16.gmra.mxu0 %v2185
      %v2264 = vpop.f32.mrf.mxu0
      %v2265 = vadd.f32 0.0, %v2264
      %v2266 = vpop.f32.mrf.mxu0
      %v2267 = vadd.f32 0.0, %v2266
      %2268 = vmatmul.bf16.gmra.mxu0 %v2188
      %v2269 = vpop.f32.mrf.mxu0
      %v2270 = vadd.f32 0.0, %v2269
      %v2271 = vpop.f32.mrf.mxu0
      %v2272 = vadd.f32 0.0, %v2271
      %2273 = vmatmul.bf16.gmra.mxu0 %v2191
      %v2274 = vpop.f32.mrf.mxu0
      %v2275 = vadd.f32 0.0, %v2274
      %v2276 = vpop.f32.mrf.mxu0
      %v2277 = vadd.f32 0.0, %v2276
      %2278 = vmatmul.bf16.gmra.mxu0 %v2194
      %v2279 = vpop.f32.mrf.mxu0
      %v2280 = vadd.f32 0.0, %v2279
      %v2281 = vpop.f32.mrf.mxu0
      %v2282 = vadd.f32 0.0, %v2281
      %2283 = vmatmul.bf16.gmra.mxu0 %v2197
      %v2284 = vpop.f32.mrf.mxu0
      %v2285 = vadd.f32 0.0, %v2284
      %v2286 = vpop.f32.mrf.mxu0
      %v2287 = vadd.f32 0.0, %v2286
      %2288 = vmatmul.bf16.gmra.mxu0 %v2200
      %v2289 = vpop.f32.mrf.mxu0
      %v2290 = vadd.f32 0.0, %v2289
      %v2291 = vpop.f32.mrf.mxu0
      %v2292 = vadd.f32 0.0, %v2291
      %2293 = vdwg.mxu0
      %v2294 = vadd.f32 %v2072, %v2215
      %v2295 = vadd.f32 %v2073, %v2217
      %v2296 = vadd.f32 %v2074, %v2220
      %v2297 = vadd.f32 %v2075, %v2222
      %v2298 = vadd.f32 %v2076, %v2225
      %v2299 = vadd.f32 %v2077, %v2227
      %v2300 = vadd.f32 %v2078, %v2230
      %v2301 = vadd.f32 %v2079, %v2232
      %v2302 = vadd.f32 %v2080, %v2235
      %v2303 = vadd.f32 %v2081, %v2237
      %v2304 = vadd.f32 %v2082, %v2240
      %v2305 = vadd.f32 %v2083, %v2242
      %v2306 = vadd.f32 %v2084, %v2245
      %v2307 = vadd.f32 %v2085, %v2247
      %v2308 = vadd.f32 %v2086, %v2250
      %v2309 = vadd.f32 %v2087, %v2252
      %v2310 = vadd.f32 %v2088, %v2255
      %v2311 = vadd.f32 %v2089, %v2257
      %v2312 = vadd.f32 %v2090, %v2260
      %v2313 = vadd.f32 %v2091, %v2262
      %v2314 = vadd.f32 %v2092, %v2265
      %v2315 = vadd.f32 %v2093, %v2267
      %v2316 = vadd.f32 %v2094, %v2270
      %v2317 = vadd.f32 %v2095, %v2272
      %v2318 = vadd.f32 %v2096, %v2275
      %v2319 = vadd.f32 %v2097, %v2277
      %v2320 = vadd.f32 %v2098, %v2280
      %v2321 = vadd.f32 %v2099, %v2282
      %v2322 = vadd.f32 %v2100, %v2285
      %v2323 = vadd.f32 %v2101, %v2287
      %v2324 = vadd.f32 %v2102, %v2290
      %v2325 = vadd.f32 %v2103, %v2292
      %v2326 = vld [vmem:[%s2] sm:$0x1]
      %v2328 = vperm.slane %v2326, 0
      %v2330 = vmul.f32 %v2294, %v2328
      %v2331 = vmul.f32 %v2295, %v2328
      %v2332 = vmul.f32 %v2296, %v2328
      %v2333 = vmul.f32 %v2297, %v2328
      %v2334 = vmul.f32 %v2298, %v2328
      %v2335 = vmul.f32 %v2299, %v2328
      %v2336 = vmul.f32 %v2300, %v2328
      %v2337 = vmul.f32 %v2301, %v2328
      %v2338 = vmul.f32 %v2302, %v2328
      %v2339 = vmul.f32 %v2303, %v2328
      %v2340 = vmul.f32 %v2304, %v2328
      %v2341 = vmul.f32 %v2305, %v2328
      %v2342 = vmul.f32 %v2306, %v2328
      %v2343 = vmul.f32 %v2307, %v2328
      %v2344 = vmul.f32 %v2308, %v2328
      %v2345 = vmul.f32 %v2309, %v2328
      %v2346 = vmul.f32 %v2310, %v2328
      %v2347 = vmul.f32 %v2311, %v2328
      %v2348 = vmul.f32 %v2312, %v2328
      %v2349 = vmul.f32 %v2313, %v2328
      %v2350 = vmul.f32 %v2314, %v2328
      %v2351 = vmul.f32 %v2315, %v2328
      %v2352 = vmul.f32 %v2316, %v2328
      %v2353 = vmul.f32 %v2317, %v2328
      %v2354 = vmul.f32 %v2318, %v2328
      %v2355 = vmul.f32 %v2319, %v2328
      %v2356 = vmul.f32 %v2320, %v2328
      %v2357 = vmul.f32 %v2321, %v2328
      %v2358 = vmul.f32 %v2322, %v2328
      %v2359 = vmul.f32 %v2323, %v2328
      %v2360 = vmul.f32 %v2324, %v2328
      %v2361 = vmul.f32 %v2325, %v2328
      %v2362 = vld [vmem:[%s3] sm:$0x1]
      %v2364 = vperm.slane %v2362, 0
      %v2366 = vadd.f32 %v2330, %v2364
      %v2367 = vadd.f32 %v2331, %v2364
      %v2368 = vadd.f32 %v2332, %v2364
      %v2369 = vadd.f32 %v2333, %v2364
      %v2370 = vadd.f32 %v2334, %v2364
      %v2371 = vadd.f32 %v2335, %v2364
      %v2372 = vadd.f32 %v2336, %v2364
      %v2373 = vadd.f32 %v2337, %v2364
      %v2374 = vadd.f32 %v2338, %v2364
      %v2375 = vadd.f32 %v2339, %v2364
      %v2376 = vadd.f32 %v2340, %v2364
      %v2377 = vadd.f32 %v2341, %v2364
      %v2378 = vadd.f32 %v2342, %v2364
      %v2379 = vadd.f32 %v2343, %v2364
      %v2380 = vadd.f32 %v2344, %v2364
      %v2381 = vadd.f32 %v2345, %v2364
      %v2382 = vadd.f32 %v2346, %v2364
      %v2383 = vadd.f32 %v2347, %v2364
      %v2384 = vadd.f32 %v2348, %v2364
      %v2385 = vadd.f32 %v2349, %v2364
      %v2386 = vadd.f32 %v2350, %v2364
      %v2387 = vadd.f32 %v2351, %v2364
      %v2388 = vadd.f32 %v2352, %v2364
      %v2389 = vadd.f32 %v2353, %v2364
      %v2390 = vadd.f32 %v2354, %v2364
      %v2391 = vadd.f32 %v2355, %v2364
      %v2392 = vadd.f32 %v2356, %v2364
      %v2393 = vadd.f32 %v2357, %v2364
      %v2394 = vadd.f32 %v2358, %v2364
      %v2395 = vadd.f32 %v2359, %v2364
      %v2396 = vadd.f32 %v2360, %v2364
      %v2397 = vadd.f32 %v2361, %v2364
      %vm2398 = vcmp.ge.f32.partialorder %v2366, 0.0
      %vm2399 = vcmp.ge.f32.partialorder %v2367, 0.0
      %vm2400 = vcmp.ge.f32.partialorder %v2368, 0.0
      %vm2401 = vcmp.ge.f32.partialorder %v2369, 0.0
      %vm2402 = vcmp.ge.f32.partialorder %v2370, 0.0
      %vm2403 = vcmp.ge.f32.partialorder %v2371, 0.0
      %vm2404 = vcmp.ge.f32.partialorder %v2372, 0.0
      %vm2405 = vcmp.ge.f32.partialorder %v2373, 0.0
      %vm2406 = vcmp.ge.f32.partialorder %v2374, 0.0
      %vm2407 = vcmp.ge.f32.partialorder %v2375, 0.0
      %vm2408 = vcmp.ge.f32.partialorder %v2376, 0.0
      %vm2409 = vcmp.ge.f32.partialorder %v2377, 0.0
      %vm2410 = vcmp.ge.f32.partialorder %v2378, 0.0
      %vm2411 = vcmp.ge.f32.partialorder %v2379, 0.0
      %vm2412 = vcmp.ge.f32.partialorder %v2380, 0.0
      %vm2413 = vcmp.ge.f32.partialorder %v2381, 0.0
      %vm2414 = vcmp.ge.f32.partialorder %v2382, 0.0
      %vm2415 = vcmp.ge.f32.partialorder %v2383, 0.0
      %vm2416 = vcmp.ge.f32.partialorder %v2384, 0.0
      %vm2417 = vcmp.ge.f32.partialorder %v2385, 0.0
      %vm2418 = vcmp.ge.f32.partialorder %v2386, 0.0
      %vm2419 = vcmp.ge.f32.partialorder %v2387, 0.0
      %vm2420 = vcmp.ge.f32.partialorder %v2388, 0.0
      %vm2421 = vcmp.ge.f32.partialorder %v2389, 0.0
      %vm2422 = vcmp.ge.f32.partialorder %v2390, 0.0
      %vm2423 = vcmp.ge.f32.partialorder %v2391, 0.0
      %vm2424 = vcmp.ge.f32.partialorder %v2392, 0.0
      %vm2425 = vcmp.ge.f32.partialorder %v2393, 0.0
      %vm2426 = vcmp.ge.f32.partialorder %v2394, 0.0
      %vm2427 = vcmp.ge.f32.partialorder %v2395, 0.0
      %vm2428 = vcmp.ge.f32.partialorder %v2396, 0.0
      %vm2429 = vcmp.ge.f32.partialorder %v2397, 0.0
      %v2430 = vmul.f32 %v2366, 0.01
      %v2431 = vmul.f32 %v2367, 0.01
      %v2432 = vmul.f32 %v2368, 0.01
      %v2433 = vmul.f32 %v2369, 0.01
      %v2434 = vmul.f32 %v2370, 0.01
      %v2435 = vmul.f32 %v2371, 0.01
      %v2436 = vmul.f32 %v2372, 0.01
      %v2437 = vmul.f32 %v2373, 0.01
      %v2438 = vmul.f32 %v2374, 0.01
      %v2439 = vmul.f32 %v2375, 0.01
      %v2440 = vmul.f32 %v2376, 0.01
      %v2441 = vmul.f32 %v2377, 0.01
      %v2442 = vmul.f32 %v2378, 0.01
      %v2443 = vmul.f32 %v2379, 0.01
      %v2444 = vmul.f32 %v2380, 0.01
      %v2445 = vmul.f32 %v2381, 0.01
      %v2446 = vmul.f32 %v2382, 0.01
      %v2447 = vmul.f32 %v2383, 0.01
      %v2448 = vmul.f32 %v2384, 0.01
      %v2449 = vmul.f32 %v2385, 0.01
      %v2450 = vmul.f32 %v2386, 0.01
      %v2451 = vmul.f32 %v2387, 0.01
      %v2452 = vmul.f32 %v2388, 0.01
      %v2453 = vmul.f32 %v2389, 0.01
      %v2454 = vmul.f32 %v2390, 0.01
      %v2455 = vmul.f32 %v2391, 0.01
      %v2456 = vmul.f32 %v2392, 0.01
      %v2457 = vmul.f32 %v2393, 0.01
      %v2458 = vmul.f32 %v2394, 0.01
      %v2459 = vmul.f32 %v2395, 0.01
      %v2460 = vmul.f32 %v2396, 0.01
      %v2461 = vmul.f32 %v2397, 0.01
      %v2462 = vsel %vm2398, %v2366, %v2430
      %v2463 = vsel %vm2399, %v2367, %v2431
      %v2464 = vsel %vm2400, %v2368, %v2432
      %v2465 = vsel %vm2401, %v2369, %v2433
      %v2466 = vsel %vm2402, %v2370, %v2434
      %v2467 = vsel %vm2403, %v2371, %v2435
      %v2468 = vsel %vm2404, %v2372, %v2436
      %v2469 = vsel %vm2405, %v2373, %v2437
      %v2470 = vsel %vm2406, %v2374, %v2438
      %v2471 = vsel %vm2407, %v2375, %v2439
      %v2472 = vsel %vm2408, %v2376, %v2440
      %v2473 = vsel %vm2409, %v2377, %v2441
      %v2474 = vsel %vm2410, %v2378, %v2442
      %v2475 = vsel %vm2411, %v2379, %v2443
      %v2476 = vsel %vm2412, %v2380, %v2444
      %v2477 = vsel %vm2413, %v2381, %v2445
      %v2478 = vsel %vm2414, %v2382, %v2446
      %v2479 = vsel %vm2415, %v2383, %v2447
      %v2480 = vsel %vm2416, %v2384, %v2448
      %v2481 = vsel %vm2417, %v2385, %v2449
      %v2482 = vsel %vm2418, %v2386, %v2450
      %v2483 = vsel %vm2419, %v2387, %v2451
      %v2484 = vsel %vm2420, %v2388, %v2452
      %v2485 = vsel %vm2421, %v2389, %v2453
      %v2486 = vsel %vm2422, %v2390, %v2454
      %v2487 = vsel %vm2423, %v2391, %v2455
      %v2488 = vsel %vm2424, %v2392, %v2456
      %v2489 = vsel %vm2425, %v2393, %v2457
      %v2490 = vsel %vm2426, %v2394, %v2458
      %v2491 = vsel %vm2427, %v2395, %v2459
      %v2492 = vsel %vm2428, %v2396, %v2460
      %v2493 = vsel %vm2429, %v2397, %v2461
      %2494 = vst.msk [vmem:[%s358 + $0x1] sm:$0xff] %vm280, %v2462
      %2495 = vst.msk [vmem:[%s358 + $0x9] sm:$0xff] %vm280, %v2463
      %2496 = vst.msk [vmem:[%s358 + $0x19] sm:$0xff] %vm280, %v2464
      %2497 = vst.msk [vmem:[%s358 + $0x21] sm:$0xff] %vm280, %v2465
      %2498 = vst.msk [vmem:[%s358 + $0x31] sm:$0xff] %vm280, %v2466
      %2499 = vst.msk [vmem:[%s358 + $0x39] sm:$0xff] %vm280, %v2467
      %2500 = vst.msk [vmem:[%s358 + $0x49] sm:$0xff] %vm280, %v2468
      %2501 = vst.msk [vmem:[%s358 + $0x51] sm:$0xff] %vm280, %v2469
      %2502 = vst.msk [vmem:[%s358 + $0x61] sm:$0xff] %vm280, %v2470
      %2503 = vst.msk [vmem:[%s358 + $0x69] sm:$0xff] %vm280, %v2471
      %2504 = vst.msk [vmem:[%s358 + $0x79] sm:$0xff] %vm280, %v2472
      %2505 = vst.msk [vmem:[%s358 + $0x81] sm:$0xff] %vm280, %v2473
      %2506 = vst.msk [vmem:[%s358 + $0x91] sm:$0xff] %vm280, %v2474
      %2507 = vst.msk [vmem:[%s358 + $0x99] sm:$0xff] %vm280, %v2475
      %2508 = vst.msk [vmem:[%s358 + $0xa9] sm:$0xff] %vm280, %v2476
      %2509 = vst.msk [vmem:[%s358 + $0xb1] sm:$0xff] %vm280, %v2477
      %2510 = vst.msk [vmem:[%s358 + $0xc1] sm:$0xff] %vm280, %v2478
      %2511 = vst.msk [vmem:[%s358 + $0xc9] sm:$0xff] %vm280, %v2479
      %2512 = vst.msk [vmem:[%s358 + $0xd9] sm:$0xff] %vm280, %v2480
      %2513 = vst.msk [vmem:[%s358 + $0xe1] sm:$0xff] %vm280, %v2481
      %2514 = vst.msk [vmem:[%s358 + $0xf1] sm:$0xff] %vm280, %v2482
      %2515 = vst.msk [vmem:[%s358 + $0xf9] sm:$0xff] %vm280, %v2483
      %2516 = vst.msk [vmem:[%s358 + $0x109] sm:$0xff] %vm280, %v2484
      %2517 = vst.msk [vmem:[%s358 + $0x111] sm:$0xff] %vm280, %v2485
      %2518 = vst.msk [vmem:[%s358 + $0x121] sm:$0xff] %vm280, %v2486
      %2519 = vst.msk [vmem:[%s358 + $0x129] sm:$0xff] %vm280, %v2487
      %2520 = vst.msk [vmem:[%s358 + $0x139] sm:$0xff] %vm280, %v2488
      %2521 = vst.msk [vmem:[%s358 + $0x141] sm:$0xff] %vm280, %v2489
      %2522 = vst.msk [vmem:[%s358 + $0x151] sm:$0xff] %vm280, %v2490
      %2523 = vst.msk [vmem:[%s358 + $0x159] sm:$0xff] %vm280, %v2491
      %2524 = vst.msk [vmem:[%s358 + $0x169] sm:$0xff] %vm280, %v2492
      %2525 = vst.msk [vmem:[%s358 + $0x171] sm:$0xff] %vm280, %v2493
      %v2526 = vld [vmem:[#allocation2] sm:$0xff]
      %v2527 = vld [vmem:[#allocation2 + $0x8] sm:$0xff]
      %v2528 = vld [vmem:[#allocation2 + $0x18] sm:$0xff]
      %v2529 = vld [vmem:[#allocation2 + $0x20] sm:$0xff]
      %v2530 = vld [vmem:[#allocation2 + $0x30] sm:$0xff]
      %v2531 = vld [vmem:[#allocation2 + $0x38] sm:$0xff]
      %v2532 = vld [vmem:[#allocation2 + $0x48] sm:$0xff]
      %v2533 = vld [vmem:[#allocation2 + $0x50] sm:$0xff]
      %v2534 = vld [vmem:[#allocation2 + $0x60] sm:$0xff]
      %v2535 = vld [vmem:[#allocation2 + $0x68] sm:$0xff]
      %v2536 = vld [vmem:[#allocation2 + $0x78] sm:$0xff]
      %v2537 = vld [vmem:[#allocation2 + $0x80] sm:$0xff]
      %v2538 = vld [vmem:[#allocation2 + $0x90] sm:$0xff]
      %v2539 = vld [vmem:[#allocation2 + $0x98] sm:$0xff]
      %v2540 = vld [vmem:[#allocation2 + $0xa8] sm:$0xff]
      %v2541 = vld [vmem:[#allocation2 + $0xb0] sm:$0xff]
      %v2542 = vld [vmem:[#allocation2 + $0xc0] sm:$0xff]
      %v2543 = vld [vmem:[#allocation2 + $0xc8] sm:$0xff]
      %v2544 = vld [vmem:[#allocation2 + $0xd8] sm:$0xff]
      %v2545 = vld [vmem:[#allocation2 + $0xe0] sm:$0xff]
      %v2546 = vld [vmem:[#allocation2 + $0xf0] sm:$0xff]
      %v2547 = vld [vmem:[#allocation2 + $0xf8] sm:$0xff]
      %v2548 = vld [vmem:[#allocation2 + $0x108] sm:$0xff]
      %v2549 = vld [vmem:[#allocation2 + $0x110] sm:$0xff]
      %v2550 = vld [vmem:[#allocation2 + $0x120] sm:$0xff]
      %v2551 = vld [vmem:[#allocation2 + $0x128] sm:$0xff]
      %v2552 = vld [vmem:[#allocation2 + $0x138] sm:$0xff]
      %v2553 = vld [vmem:[#allocation2 + $0x140] sm:$0xff]
      %v2554 = vld [vmem:[#allocation2 + $0x150] sm:$0xff]
      %v2555 = vld [vmem:[#allocation2 + $0x158] sm:$0xff]
      %v2556 = vld [vmem:[#allocation2 + $0x168] sm:$0xff]
      %v2557 = vld [vmem:[#allocation2 + $0x170] sm:$0xff]
      %v2558 = vpack.c.bf16 %v2527, %v2526
      %v2559 = vpack.c.bf16 %v2529, %v2528
      %v2560 = vpack.c.bf16 %v2531, %v2530
      %v2561 = vpack.c.bf16 %v2533, %v2532
      %v2562 = vpack.c.bf16 %v2535, %v2534
      %v2563 = vpack.c.bf16 %v2537, %v2536
      %v2564 = vpack.c.bf16 %v2539, %v2538
      %v2565 = vpack.c.bf16 %v2541, %v2540
      %v2566 = vpack.c.bf16 %v2543, %v2542
      %v2567 = vpack.c.bf16 %v2545, %v2544
      %v2568 = vpack.c.bf16 %v2547, %v2546
      %v2569 = vpack.c.bf16 %v2549, %v2548
      %v2570 = vpack.c.bf16 %v2551, %v2550
      %v2571 = vpack.c.bf16 %v2553, %v2552
      %v2572 = vpack.c.bf16 %v2555, %v2554
      %v2573 = vpack.c.bf16 %v2557, %v2556
      %v2574 = vld [vmem:[%s4] sm:$0xf]
      %v2575 = vld [vmem:[#allocation2 + $0x1] sm:$0xff]
      %v2576 = vld [vmem:[#allocation2 + $0x9] sm:$0xff]
      %v2577 = vld [vmem:[#allocation2 + $0x19] sm:$0xff]
      %v2578 = vld [vmem:[#allocation2 + $0x21] sm:$0xff]
      %v2579 = vld [vmem:[#allocation2 + $0x31] sm:$0xff]
      %v2580 = vld [vmem:[#allocation2 + $0x39] sm:$0xff]
      %v2581 = vld [vmem:[#allocation2 + $0x49] sm:$0xff]
      %v2582 = vld [vmem:[#allocation2 + $0x51] sm:$0xff]
      %v2583 = vld [vmem:[#allocation2 + $0x61] sm:$0xff]
      %v2584 = vld [vmem:[#allocation2 + $0x69] sm:$0xff]
      %v2585 = vld [vmem:[#allocation2 + $0x79] sm:$0xff]
      %v2586 = vld [vmem:[#allocation2 + $0x81] sm:$0xff]
      %v2587 = vld [vmem:[#allocation2 + $0x91] sm:$0xff]
      %v2588 = vld [vmem:[#allocation2 + $0x99] sm:$0xff]
      %v2589 = vld [vmem:[#allocation2 + $0xa9] sm:$0xff]
      %v2590 = vld [vmem:[#allocation2 + $0xb1] sm:$0xff]
      %v2591 = vld [vmem:[#allocation2 + $0xc1] sm:$0xff]
      %v2592 = vld [vmem:[#allocation2 + $0xc9] sm:$0xff]
      %v2593 = vld [vmem:[#allocation2 + $0xd9] sm:$0xff]
      %v2594 = vld [vmem:[#allocation2 + $0xe1] sm:$0xff]
      %v2595 = vld [vmem:[#allocation2 + $0xf1] sm:$0xff]
      %v2596 = vld [vmem:[#allocation2 + $0xf9] sm:$0xff]
      %v2597 = vld [vmem:[#allocation2 + $0x109] sm:$0xff]
      %v2598 = vld [vmem:[#allocation2 + $0x111] sm:$0xff]
      %v2599 = vld [vmem:[#allocation2 + $0x121] sm:$0xff]
      %v2600 = vld [vmem:[#allocation2 + $0x129] sm:$0xff]
      %v2601 = vld [vmem:[#allocation2 + $0x139] sm:$0xff]
      %v2602 = vld [vmem:[#allocation2 + $0x141] sm:$0xff]
      %v2603 = vld [vmem:[#allocation2 + $0x151] sm:$0xff]
      %v2604 = vld [vmem:[#allocation2 + $0x159] sm:$0xff]
      %v2605 = vld [vmem:[#allocation2 + $0x169] sm:$0xff]
      %v2606 = vld [vmem:[#allocation2 + $0x171] sm:$0xff]
      %v2607 = vpack.c.bf16 %v2576, %v2575
      %v2608 = vpack.c.bf16 %v2578, %v2577
      %v2609 = vpack.c.bf16 %v2580, %v2579
      %v2610 = vpack.c.bf16 %v2582, %v2581
      %v2611 = vpack.c.bf16 %v2584, %v2583
      %v2612 = vpack.c.bf16 %v2586, %v2585
      %v2613 = vpack.c.bf16 %v2588, %v2587
      %v2614 = vpack.c.bf16 %v2590, %v2589
      %v2615 = vpack.c.bf16 %v2592, %v2591
      %v2616 = vpack.c.bf16 %v2594, %v2593
      %v2617 = vpack.c.bf16 %v2596, %v2595
      %v2618 = vpack.c.bf16 %v2598, %v2597
      %v2619 = vpack.c.bf16 %v2600, %v2599
      %v2620 = vpack.c.bf16 %v2602, %v2601
      %v2621 = vpack.c.bf16 %v2604, %v2603
      %v2622 = vpack.c.bf16 %v2606, %v2605
      %s2623 = scalar_lea.vmem %s4, 4
      %v2624 = vld [vmem:[%s2623] sm:$0xf]
      %v2626 = vsel %vm280, %v2607, 0
      %v2629 = vsel %vm280, %v2608, 0
      %v2632 = vsel %vm280, %v2609, 0
      %v2635 = vsel %vm280, %v2610, 0
      %v2638 = vsel %vm280, %v2611, 0
      %v2641 = vsel %vm280, %v2612, 0
      %v2644 = vsel %vm280, %v2613, 0
      %v2647 = vsel %vm280, %v2614, 0
      %v2650 = vsel %vm280, %v2615, 0
      %v2653 = vsel %vm280, %v2616, 0
      %v2656 = vsel %vm280, %v2617, 0
      %v2659 = vsel %vm280, %v2618, 0
      %v2662 = vsel %vm280, %v2619, 0
      %v2665 = vsel %vm280, %v2620, 0
      %v2668 = vsel %vm280, %v2621, 0
      %v2671 = vsel %vm280, %v2622, 0
      %v2674 = vsel %vm538, %v2624, 0
      %2676 = vmatpush.bf16.msra.mxu0 0
      %2677 = vmatpush.bf16.msra.mxu0 0
      %2678 = vmatpush.bf16.msra.mxu0 0
      %2679 = vmatpush.bf16.msra.mxu0 0
      %2680 = vmatpush.bf16.msra.mxu0 0
      %2681 = vmatpush.bf16.msra.mxu0 0
      %2682 = vmatpush.bf16.msra.mxu0 0
      %2683 = vmatpush.bf16.msra.mxu0 %v2674
      %2684 = vmatmul.bf16.gmra.mxu0 %v2626
      %v2685 = vpop.f32.mrf.mxu0
      %v2686 = vadd.f32 0.0, %v2685
      %v2687 = vpop.f32.mrf.mxu0
      %v2688 = vadd.f32 0.0, %v2687
      %2689 = vmatmul.bf16.gmra.mxu0 %v2629
      %v2690 = vpop.f32.mrf.mxu0
      %v2691 = vadd.f32 0.0, %v2690
      %v2692 = vpop.f32.mrf.mxu0
      %v2693 = vadd.f32 0.0, %v2692
      %2694 = vmatmul.bf16.gmra.mxu0 %v2632
      %v2695 = vpop.f32.mrf.mxu0
      %v2696 = vadd.f32 0.0, %v2695
      %v2697 = vpop.f32.mrf.mxu0
      %v2698 = vadd.f32 0.0, %v2697
      %2699 = vmatmul.bf16.gmra.mxu0 %v2635
      %v2700 = vpop.f32.mrf.mxu0
      %v2701 = vadd.f32 0.0, %v2700
      %v2702 = vpop.f32.mrf.mxu0
      %v2703 = vadd.f32 0.0, %v2702
      %2704 = vmatmul.bf16.gmra.mxu0 %v2638
      %v2705 = vpop.f32.mrf.mxu0
      %v2706 = vadd.f32 0.0, %v2705
      %v2707 = vpop.f32.mrf.mxu0
      %v2708 = vadd.f32 0.0, %v2707
      %2709 = vmatmul.bf16.gmra.mxu0 %v2641
      %v2710 = vpop.f32.mrf.mxu0
      %v2711 = vadd.f32 0.0, %v2710
      %v2712 = vpop.f32.mrf.mxu0
      %v2713 = vadd.f32 0.0, %v2712
      %2714 = vmatmul.bf16.gmra.mxu0 %v2644
      %v2715 = vpop.f32.mrf.mxu0
      %v2716 = vadd.f32 0.0, %v2715
      %v2717 = vpop.f32.mrf.mxu0
      %v2718 = vadd.f32 0.0, %v2717
      %2719 = vmatmul.bf16.gmra.mxu0 %v2647
      %v2720 = vpop.f32.mrf.mxu0
      %v2721 = vadd.f32 0.0, %v2720
      %v2722 = vpop.f32.mrf.mxu0
      %v2723 = vadd.f32 0.0, %v2722
      %2724 = vmatmul.bf16.gmra.mxu0 %v2650
      %v2725 = vpop.f32.mrf.mxu0
      %v2726 = vadd.f32 0.0, %v2725
      %v2727 = vpop.f32.mrf.mxu0
      %v2728 = vadd.f32 0.0, %v2727
      %2729 = vmatmul.bf16.gmra.mxu0 %v2653
      %v2730 = vpop.f32.mrf.mxu0
      %v2731 = vadd.f32 0.0, %v2730
      %v2732 = vpop.f32.mrf.mxu0
      %v2733 = vadd.f32 0.0, %v2732
      %2734 = vmatmul.bf16.gmra.mxu0 %v2656
      %v2735 = vpop.f32.mrf.mxu0
      %v2736 = vadd.f32 0.0, %v2735
      %v2737 = vpop.f32.mrf.mxu0
      %v2738 = vadd.f32 0.0, %v2737
      %2739 = vmatmul.bf16.gmra.mxu0 %v2659
      %v2740 = vpop.f32.mrf.mxu0
      %v2741 = vadd.f32 0.0, %v2740
      %v2742 = vpop.f32.mrf.mxu0
      %v2743 = vadd.f32 0.0, %v2742
      %2744 = vmatmul.bf16.gmra.mxu0 %v2662
      %v2745 = vpop.f32.mrf.mxu0
      %v2746 = vadd.f32 0.0, %v2745
      %v2747 = vpop.f32.mrf.mxu0
      %v2748 = vadd.f32 0.0, %v2747
      %2749 = vmatmul.bf16.gmra.mxu0 %v2665
      %v2750 = vpop.f32.mrf.mxu0
      %v2751 = vadd.f32 0.0, %v2750
      %v2752 = vpop.f32.mrf.mxu0
      %v2753 = vadd.f32 0.0, %v2752
      %2754 = vmatmul.bf16.gmra.mxu0 %v2668
      %v2755 = vpop.f32.mrf.mxu0
      %v2756 = vadd.f32 0.0, %v2755
      %v2757 = vpop.f32.mrf.mxu0
      %v2758 = vadd.f32 0.0, %v2757
      %2759 = vmatmul.bf16.gmra.mxu0 %v2671
      %v2760 = vpop.f32.mrf.mxu0
      %v2761 = vadd.f32 0.0, %v2760
      %v2762 = vpop.f32.mrf.mxu0
      %v2763 = vadd.f32 0.0, %v2762
      %2764 = vdwg.mxu0
      %v2766 = vsel %vm280, %v2558, 0
      %v2769 = vsel %vm280, %v2559, 0
      %v2772 = vsel %vm280, %v2560, 0
      %v2775 = vsel %vm280, %v2561, 0
      %v2778 = vsel %vm280, %v2562, 0
      %v2781 = vsel %vm280, %v2563, 0
      %v2784 = vsel %vm280, %v2564, 0
      %v2787 = vsel %vm280, %v2565, 0
      %v2790 = vsel %vm280, %v2566, 0
      %v2793 = vsel %vm280, %v2567, 0
      %v2796 = vsel %vm280, %v2568, 0
      %v2799 = vsel %vm280, %v2569, 0
      %v2802 = vsel %vm280, %v2570, 0
      %v2805 = vsel %vm280, %v2571, 0
      %v2808 = vsel %vm280, %v2572, 0
      %v2811 = vsel %vm280, %v2573, 0
      %v2814 = vsel %vm538, %v2574, 0
      %2816 = vmatpush.bf16.msra.mxu0 0
      %2817 = vmatpush.bf16.msra.mxu0 0
      %2818 = vmatpush.bf16.msra.mxu0 0
      %2819 = vmatpush.bf16.msra.mxu0 0
      %2820 = vmatpush.bf16.msra.mxu0 0
      %2821 = vmatpush.bf16.msra.mxu0 0
      %2822 = vmatpush.bf16.msra.mxu0 0
      %2823 = vmatpush.bf16.msra.mxu0 %v2814
      %2824 = vmatmul.bf16.gmra.mxu0 %v2766
      %v2825 = vpop.f32.mrf.mxu0
      %v2826 = vadd.f32 %v2686, %v2825
      %v2827 = vpop.f32.mrf.mxu0
      %v2828 = vadd.f32 %v2688, %v2827
      %2829 = vmatmul.bf16.gmra.mxu0 %v2769
      %v2830 = vpop.f32.mrf.mxu0
      %v2831 = vadd.f32 %v2691, %v2830
      %v2832 = vpop.f32.mrf.mxu0
      %v2833 = vadd.f32 %v2693, %v2832
      %2834 = vmatmul.bf16.gmra.mxu0 %v2772
      %v2835 = vpop.f32.mrf.mxu0
      %v2836 = vadd.f32 %v2696, %v2835
      %v2837 = vpop.f32.mrf.mxu0
      %v2838 = vadd.f32 %v2698, %v2837
      %2839 = vmatmul.bf16.gmra.mxu0 %v2775
      %v2840 = vpop.f32.mrf.mxu0
      %v2841 = vadd.f32 %v2701, %v2840
      %v2842 = vpop.f32.mrf.mxu0
      %v2843 = vadd.f32 %v2703, %v2842
      %2844 = vmatmul.bf16.gmra.mxu0 %v2778
      %v2845 = vpop.f32.mrf.mxu0
      %v2846 = vadd.f32 %v2706, %v2845
      %v2847 = vpop.f32.mrf.mxu0
      %v2848 = vadd.f32 %v2708, %v2847
      %2849 = vmatmul.bf16.gmra.mxu0 %v2781
      %v2850 = vpop.f32.mrf.mxu0
      %v2851 = vadd.f32 %v2711, %v2850
      %v2852 = vpop.f32.mrf.mxu0
      %v2853 = vadd.f32 %v2713, %v2852
      %2854 = vmatmul.bf16.gmra.mxu0 %v2784
      %v2855 = vpop.f32.mrf.mxu0
      %v2856 = vadd.f32 %v2716, %v2855
      %v2857 = vpop.f32.mrf.mxu0
      %v2858 = vadd.f32 %v2718, %v2857
      %2859 = vmatmul.bf16.gmra.mxu0 %v2787
      %v2860 = vpop.f32.mrf.mxu0
      %v2861 = vadd.f32 %v2721, %v2860
      %v2862 = vpop.f32.mrf.mxu0
      %v2863 = vadd.f32 %v2723, %v2862
      %2864 = vmatmul.bf16.gmra.mxu0 %v2790
      %v2865 = vpop.f32.mrf.mxu0
      %v2866 = vadd.f32 %v2726, %v2865
      %v2867 = vpop.f32.mrf.mxu0
      %v2868 = vadd.f32 %v2728, %v2867
      %2869 = vmatmul.bf16.gmra.mxu0 %v2793
      %v2870 = vpop.f32.mrf.mxu0
      %v2871 = vadd.f32 %v2731, %v2870
      %v2872 = vpop.f32.mrf.mxu0
      %v2873 = vadd.f32 %v2733, %v2872
      %2874 = vmatmul.bf16.gmra.mxu0 %v2796
      %v2875 = vpop.f32.mrf.mxu0
      %v2876 = vadd.f32 %v2736, %v2875
      %v2877 = vpop.f32.mrf.mxu0
      %v2878 = vadd.f32 %v2738, %v2877
      %2879 = vmatmul.bf16.gmra.mxu0 %v2799
      %v2880 = vpop.f32.mrf.mxu0
      %v2881 = vadd.f32 %v2741, %v2880
      %v2882 = vpop.f32.mrf.mxu0
      %v2883 = vadd.f32 %v2743, %v2882
      %2884 = vmatmul.bf16.gmra.mxu0 %v2802
      %v2885 = vpop.f32.mrf.mxu0
      %v2886 = vadd.f32 %v2746, %v2885
      %v2887 = vpop.f32.mrf.mxu0
      %v2888 = vadd.f32 %v2748, %v2887
      %2889 = vmatmul.bf16.gmra.mxu0 %v2805
      %v2890 = vpop.f32.mrf.mxu0
      %v2891 = vadd.f32 %v2751, %v2890
      %v2892 = vpop.f32.mrf.mxu0
      %v2893 = vadd.f32 %v2753, %v2892
      %2894 = vmatmul.bf16.gmra.mxu0 %v2808
      %v2895 = vpop.f32.mrf.mxu0
      %v2896 = vadd.f32 %v2756, %v2895
      %v2897 = vpop.f32.mrf.mxu0
      %v2898 = vadd.f32 %v2758, %v2897
      %2899 = vmatmul.bf16.gmra.mxu0 %v2811
      %v2900 = vpop.f32.mrf.mxu0
      %v2901 = vadd.f32 %v2761, %v2900
      %v2902 = vpop.f32.mrf.mxu0
      %v2903 = vadd.f32 %v2763, %v2902
      %2904 = vdwg.mxu0
      %v2905 = vld [vmem:[#allocation2 + $0x2] sm:$0xff]
      %v2906 = vld [vmem:[#allocation2 + $0xa] sm:$0xff]
      %v2907 = vld [vmem:[#allocation2 + $0x1a] sm:$0xff]
      %v2908 = vld [vmem:[#allocation2 + $0x22] sm:$0xff]
      %v2909 = vld [vmem:[#allocation2 + $0x32] sm:$0xff]
      %v2910 = vld [vmem:[#allocation2 + $0x3a] sm:$0xff]
      %v2911 = vld [vmem:[#allocation2 + $0x4a] sm:$0xff]
      %v2912 = vld [vmem:[#allocation2 + $0x52] sm:$0xff]
      %v2913 = vld [vmem:[#allocation2 + $0x62] sm:$0xff]
      %v2914 = vld [vmem:[#allocation2 + $0x6a] sm:$0xff]
      %v2915 = vld [vmem:[#allocation2 + $0x7a] sm:$0xff]
      %v2916 = vld [vmem:[#allocation2 + $0x82] sm:$0xff]
      %v2917 = vld [vmem:[#allocation2 + $0x92] sm:$0xff]
      %v2918 = vld [vmem:[#allocation2 + $0x9a] sm:$0xff]
      %v2919 = vld [vmem:[#allocation2 + $0xaa] sm:$0xff]
      %v2920 = vld [vmem:[#allocation2 + $0xb2] sm:$0xff]
      %v2921 = vld [vmem:[#allocation2 + $0xc2] sm:$0xff]
      %v2922 = vld [vmem:[#allocation2 + $0xca] sm:$0xff]
      %v2923 = vld [vmem:[#allocation2 + $0xda] sm:$0xff]
      %v2924 = vld [vmem:[#allocation2 + $0xe2] sm:$0xff]
      %v2925 = vld [vmem:[#allocation2 + $0xf2] sm:$0xff]
      %v2926 = vld [vmem:[#allocation2 + $0xfa] sm:$0xff]
      %v2927 = vld [vmem:[#allocation2 + $0x10a] sm:$0xff]
      %v2928 = vld [vmem:[#allocation2 + $0x112] sm:$0xff]
      %v2929 = vld [vmem:[#allocation2 + $0x122] sm:$0xff]
      %v2930 = vld [vmem:[#allocation2 + $0x12a] sm:$0xff]
      %v2931 = vld [vmem:[#allocation2 + $0x13a] sm:$0xff]
      %v2932 = vld [vmem:[#allocation2 + $0x142] sm:$0xff]
      %v2933 = vld [vmem:[#allocation2 + $0x152] sm:$0xff]
      %v2934 = vld [vmem:[#allocation2 + $0x15a] sm:$0xff]
      %v2935 = vld [vmem:[#allocation2 + $0x16a] sm:$0xff]
      %v2936 = vld [vmem:[#allocation2 + $0x172] sm:$0xff]
      %v2937 = vpack.c.bf16 %v2906, %v2905
      %v2938 = vpack.c.bf16 %v2908, %v2907
      %v2939 = vpack.c.bf16 %v2910, %v2909
      %v2940 = vpack.c.bf16 %v2912, %v2911
      %v2941 = vpack.c.bf16 %v2914, %v2913
      %v2942 = vpack.c.bf16 %v2916, %v2915
      %v2943 = vpack.c.bf16 %v2918, %v2917
      %v2944 = vpack.c.bf16 %v2920, %v2919
      %v2945 = vpack.c.bf16 %v2922, %v2921
      %v2946 = vpack.c.bf16 %v2924, %v2923
      %v2947 = vpack.c.bf16 %v2926, %v2925
      %v2948 = vpack.c.bf16 %v2928, %v2927
      %v2949 = vpack.c.bf16 %v2930, %v2929
      %v2950 = vpack.c.bf16 %v2932, %v2931
      %v2951 = vpack.c.bf16 %v2934, %v2933
      %v2952 = vpack.c.bf16 %v2936, %v2935
      %s2953 = scalar_lea.vmem %s4, 8
      %v2954 = vld [vmem:[%s2953] sm:$0xf]
      %v2956 = vsel %vm280, %v2937, 0
      %v2959 = vsel %vm280, %v2938, 0
      %v2962 = vsel %vm280, %v2939, 0
      %v2965 = vsel %vm280, %v2940, 0
      %v2968 = vsel %vm280, %v2941, 0
      %v2971 = vsel %vm280, %v2942, 0
      %v2974 = vsel %vm280, %v2943, 0
      %v2977 = vsel %vm280, %v2944, 0
      %v2980 = vsel %vm280, %v2945, 0
      %v2983 = vsel %vm280, %v2946, 0
      %v2986 = vsel %vm280, %v2947, 0
      %v2989 = vsel %vm280, %v2948, 0
      %v2992 = vsel %vm280, %v2949, 0
      %v2995 = vsel %vm280, %v2950, 0
      %v2998 = vsel %vm280, %v2951, 0
      %v3001 = vsel %vm280, %v2952, 0
      %v3004 = vsel %vm538, %v2954, 0
      %3006 = vmatpush.bf16.msra.mxu0 0
      %3007 = vmatpush.bf16.msra.mxu0 0
      %3008 = vmatpush.bf16.msra.mxu0 0
      %3009 = vmatpush.bf16.msra.mxu0 0
      %3010 = vmatpush.bf16.msra.mxu0 0
      %3011 = vmatpush.bf16.msra.mxu0 0
      %3012 = vmatpush.bf16.msra.mxu0 0
      %3013 = vmatpush.bf16.msra.mxu0 %v3004
      %3014 = vmatmul.bf16.gmra.mxu0 %v2956
      %v3015 = vpop.f32.mrf.mxu0
      %v3016 = vadd.f32 0.0, %v3015
      %v3017 = vpop.f32.mrf.mxu0
      %v3018 = vadd.f32 0.0, %v3017
      %3019 = vmatmul.bf16.gmra.mxu0 %v2959
      %v3020 = vpop.f32.mrf.mxu0
      %v3021 = vadd.f32 0.0, %v3020
      %v3022 = vpop.f32.mrf.mxu0
      %v3023 = vadd.f32 0.0, %v3022
      %3024 = vmatmul.bf16.gmra.mxu0 %v2962
      %v3025 = vpop.f32.mrf.mxu0
      %v3026 = vadd.f32 0.0, %v3025
      %v3027 = vpop.f32.mrf.mxu0
      %v3028 = vadd.f32 0.0, %v3027
      %3029 = vmatmul.bf16.gmra.mxu0 %v2965
      %v3030 = vpop.f32.mrf.mxu0
      %v3031 = vadd.f32 0.0, %v3030
      %v3032 = vpop.f32.mrf.mxu0
      %v3033 = vadd.f32 0.0, %v3032
      %3034 = vmatmul.bf16.gmra.mxu0 %v2968
      %v3035 = vpop.f32.mrf.mxu0
      %v3036 = vadd.f32 0.0, %v3035
      %v3037 = vpop.f32.mrf.mxu0
      %v3038 = vadd.f32 0.0, %v3037
      %3039 = vmatmul.bf16.gmra.mxu0 %v2971
      %v3040 = vpop.f32.mrf.mxu0
      %v3041 = vadd.f32 0.0, %v3040
      %v3042 = vpop.f32.mrf.mxu0
      %v3043 = vadd.f32 0.0, %v3042
      %3044 = vmatmul.bf16.gmra.mxu0 %v2974
      %v3045 = vpop.f32.mrf.mxu0
      %v3046 = vadd.f32 0.0, %v3045
      %v3047 = vpop.f32.mrf.mxu0
      %v3048 = vadd.f32 0.0, %v3047
      %3049 = vmatmul.bf16.gmra.mxu0 %v2977
      %v3050 = vpop.f32.mrf.mxu0
      %v3051 = vadd.f32 0.0, %v3050
      %v3052 = vpop.f32.mrf.mxu0
      %v3053 = vadd.f32 0.0, %v3052
      %3054 = vmatmul.bf16.gmra.mxu0 %v2980
      %v3055 = vpop.f32.mrf.mxu0
      %v3056 = vadd.f32 0.0, %v3055
      %v3057 = vpop.f32.mrf.mxu0
      %v3058 = vadd.f32 0.0, %v3057
      %3059 = vmatmul.bf16.gmra.mxu0 %v2983
      %v3060 = vpop.f32.mrf.mxu0
      %v3061 = vadd.f32 0.0, %v3060
      %v3062 = vpop.f32.mrf.mxu0
      %v3063 = vadd.f32 0.0, %v3062
      %3064 = vmatmul.bf16.gmra.mxu0 %v2986
      %v3065 = vpop.f32.mrf.mxu0
      %v3066 = vadd.f32 0.0, %v3065
      %v3067 = vpop.f32.mrf.mxu0
      %v3068 = vadd.f32 0.0, %v3067
      %3069 = vmatmul.bf16.gmra.mxu0 %v2989
      %v3070 = vpop.f32.mrf.mxu0
      %v3071 = vadd.f32 0.0, %v3070
      %v3072 = vpop.f32.mrf.mxu0
      %v3073 = vadd.f32 0.0, %v3072
      %3074 = vmatmul.bf16.gmra.mxu0 %v2992
      %v3075 = vpop.f32.mrf.mxu0
      %v3076 = vadd.f32 0.0, %v3075
      %v3077 = vpop.f32.mrf.mxu0
      %v3078 = vadd.f32 0.0, %v3077
      %3079 = vmatmul.bf16.gmra.mxu0 %v2995
      %v3080 = vpop.f32.mrf.mxu0
      %v3081 = vadd.f32 0.0, %v3080
      %v3082 = vpop.f32.mrf.mxu0
      %v3083 = vadd.f32 0.0, %v3082
      %3084 = vmatmul.bf16.gmra.mxu0 %v2998
      %v3085 = vpop.f32.mrf.mxu0
      %v3086 = vadd.f32 0.0, %v3085
      %v3087 = vpop.f32.mrf.mxu0
      %v3088 = vadd.f32 0.0, %v3087
      %3089 = vmatmul.bf16.gmra.mxu0 %v3001
      %v3090 = vpop.f32.mrf.mxu0
      %v3091 = vadd.f32 0.0, %v3090
      %v3092 = vpop.f32.mrf.mxu0
      %v3093 = vadd.f32 0.0, %v3092
      %3094 = vdwg.mxu0
      %v3095 = vadd.f32 %v2826, %v3016
      %v3096 = vadd.f32 %v2828, %v3018
      %v3097 = vadd.f32 %v2831, %v3021
      %v3098 = vadd.f32 %v2833, %v3023
      %v3099 = vadd.f32 %v2836, %v3026
      %v3100 = vadd.f32 %v2838, %v3028
      %v3101 = vadd.f32 %v2841, %v3031
      %v3102 = vadd.f32 %v2843, %v3033
      %v3103 = vadd.f32 %v2846, %v3036
      %v3104 = vadd.f32 %v2848, %v3038
      %v3105 = vadd.f32 %v2851, %v3041
      %v3106 = vadd.f32 %v2853, %v3043
      %v3107 = vadd.f32 %v2856, %v3046
      %v3108 = vadd.f32 %v2858, %v3048
      %v3109 = vadd.f32 %v2861, %v3051
      %v3110 = vadd.f32 %v2863, %v3053
      %v3111 = vadd.f32 %v2866, %v3056
      %v3112 = vadd.f32 %v2868, %v3058
      %v3113 = vadd.f32 %v2871, %v3061
      %v3114 = vadd.f32 %v2873, %v3063
      %v3115 = vadd.f32 %v2876, %v3066
      %v3116 = vadd.f32 %v2878, %v3068
      %v3117 = vadd.f32 %v2881, %v3071
      %v3118 = vadd.f32 %v2883, %v3073
      %v3119 = vadd.f32 %v2886, %v3076
      %v3120 = vadd.f32 %v2888, %v3078
      %v3121 = vadd.f32 %v2891, %v3081
      %v3122 = vadd.f32 %v2893, %v3083
      %v3123 = vadd.f32 %v2896, %v3086
      %v3124 = vadd.f32 %v2898, %v3088
      %v3125 = vadd.f32 %v2901, %v3091
      %v3126 = vadd.f32 %v2903, %v3093
      %v3127 = vld [vmem:[%s358] sm:$0xff]
      %v3128 = vld [vmem:[%s358 + $0x8] sm:$0xff]
      %v3129 = vld [vmem:[%s358 + $0x18] sm:$0xff]
      %v3130 = vld [vmem:[%s358 + $0x20] sm:$0xff]
      %v3131 = vld [vmem:[%s358 + $0x30] sm:$0xff]
      %v3132 = vld [vmem:[%s358 + $0x38] sm:$0xff]
      %v3133 = vld [vmem:[%s358 + $0x48] sm:$0xff]
      %v3134 = vld [vmem:[%s358 + $0x50] sm:$0xff]
      %v3135 = vld [vmem:[%s358 + $0x60] sm:$0xff]
      %v3136 = vld [vmem:[%s358 + $0x68] sm:$0xff]
      %v3137 = vld [vmem:[%s358 + $0x78] sm:$0xff]
      %v3138 = vld [vmem:[%s358 + $0x80] sm:$0xff]
      %v3139 = vld [vmem:[%s358 + $0x90] sm:$0xff]
      %v3140 = vld [vmem:[%s358 + $0x98] sm:$0xff]
      %v3141 = vld [vmem:[%s358 + $0xa8] sm:$0xff]
      %v3142 = vld [vmem:[%s358 + $0xb0] sm:$0xff]
      %v3143 = vld [vmem:[%s358 + $0xc0] sm:$0xff]
      %v3144 = vld [vmem:[%s358 + $0xc8] sm:$0xff]
      %v3145 = vld [vmem:[%s358 + $0xd8] sm:$0xff]
      %v3146 = vld [vmem:[%s358 + $0xe0] sm:$0xff]
      %v3147 = vld [vmem:[%s358 + $0xf0] sm:$0xff]
      %v3148 = vld [vmem:[%s358 + $0xf8] sm:$0xff]
      %v3149 = vld [vmem:[%s358 + $0x108] sm:$0xff]
      %v3150 = vld [vmem:[%s358 + $0x110] sm:$0xff]
      %v3151 = vld [vmem:[%s358 + $0x120] sm:$0xff]
      %v3152 = vld [vmem:[%s358 + $0x128] sm:$0xff]
      %v3153 = vld [vmem:[%s358 + $0x138] sm:$0xff]
      %v3154 = vld [vmem:[%s358 + $0x140] sm:$0xff]
      %v3155 = vld [vmem:[%s358 + $0x150] sm:$0xff]
      %v3156 = vld [vmem:[%s358 + $0x158] sm:$0xff]
      %v3157 = vld [vmem:[%s358 + $0x168] sm:$0xff]
      %v3158 = vld [vmem:[%s358 + $0x170] sm:$0xff]
      %v3159 = vpack.c.bf16 %v3128, %v3127
      %v3160 = vpack.c.bf16 %v3130, %v3129
      %v3161 = vpack.c.bf16 %v3132, %v3131
      %v3162 = vpack.c.bf16 %v3134, %v3133
      %v3163 = vpack.c.bf16 %v3136, %v3135
      %v3164 = vpack.c.bf16 %v3138, %v3137
      %v3165 = vpack.c.bf16 %v3140, %v3139
      %v3166 = vpack.c.bf16 %v3142, %v3141
      %v3167 = vpack.c.bf16 %v3144, %v3143
      %v3168 = vpack.c.bf16 %v3146, %v3145
      %v3169 = vpack.c.bf16 %v3148, %v3147
      %v3170 = vpack.c.bf16 %v3150, %v3149
      %v3171 = vpack.c.bf16 %v3152, %v3151
      %v3172 = vpack.c.bf16 %v3154, %v3153
      %v3173 = vpack.c.bf16 %v3156, %v3155
      %v3174 = vpack.c.bf16 %v3158, %v3157
      %s3175 = scalar_lea.vmem %s4, 12
      %v3176 = vld [vmem:[%s3175] sm:$0xf]
      %v3178 = vsel %vm280, %v3159, 0
      %v3181 = vsel %vm280, %v3160, 0
      %v3184 = vsel %vm280, %v3161, 0
      %v3187 = vsel %vm280, %v3162, 0
      %v3190 = vsel %vm280, %v3163, 0
      %v3193 = vsel %vm280, %v3164, 0
      %v3196 = vsel %vm280, %v3165, 0
      %v3199 = vsel %vm280, %v3166, 0
      %v3202 = vsel %vm280, %v3167, 0
      %v3205 = vsel %vm280, %v3168, 0
      %v3208 = vsel %vm280, %v3169, 0
      %v3211 = vsel %vm280, %v3170, 0
      %v3214 = vsel %vm280, %v3171, 0
      %v3217 = vsel %vm280, %v3172, 0
      %v3220 = vsel %vm280, %v3173, 0
      %v3223 = vsel %vm280, %v3174, 0
      %v3226 = vsel %vm538, %v3176, 0
      %3228 = vmatpush.bf16.msra.mxu0 0
      %3229 = vmatpush.bf16.msra.mxu0 0
      %3230 = vmatpush.bf16.msra.mxu0 0
      %3231 = vmatpush.bf16.msra.mxu0 0
      %3232 = vmatpush.bf16.msra.mxu0 0
      %3233 = vmatpush.bf16.msra.mxu0 0
      %3234 = vmatpush.bf16.msra.mxu0 0
      %3235 = vmatpush.bf16.msra.mxu0 %v3226
      %3236 = vmatmul.bf16.gmra.mxu0 %v3178
      %v3237 = vpop.f32.mrf.mxu0
      %v3238 = vadd.f32 0.0, %v3237
      %v3239 = vpop.f32.mrf.mxu0
      %v3240 = vadd.f32 0.0, %v3239
      %3241 = vmatmul.bf16.gmra.mxu0 %v3181
      %v3242 = vpop.f32.mrf.mxu0
      %v3243 = vadd.f32 0.0, %v3242
      %v3244 = vpop.f32.mrf.mxu0
      %v3245 = vadd.f32 0.0, %v3244
      %3246 = vmatmul.bf16.gmra.mxu0 %v3184
      %v3247 = vpop.f32.mrf.mxu0
      %v3248 = vadd.f32 0.0, %v3247
      %v3249 = vpop.f32.mrf.mxu0
      %v3250 = vadd.f32 0.0, %v3249
      %3251 = vmatmul.bf16.gmra.mxu0 %v3187
      %v3252 = vpop.f32.mrf.mxu0
      %v3253 = vadd.f32 0.0, %v3252
      %v3254 = vpop.f32.mrf.mxu0
      %v3255 = vadd.f32 0.0, %v3254
      %3256 = vmatmul.bf16.gmra.mxu0 %v3190
      %v3257 = vpop.f32.mrf.mxu0
      %v3258 = vadd.f32 0.0, %v3257
      %v3259 = vpop.f32.mrf.mxu0
      %v3260 = vadd.f32 0.0, %v3259
      %3261 = vmatmul.bf16.gmra.mxu0 %v3193
      %v3262 = vpop.f32.mrf.mxu0
      %v3263 = vadd.f32 0.0, %v3262
      %v3264 = vpop.f32.mrf.mxu0
      %v3265 = vadd.f32 0.0, %v3264
      %3266 = vmatmul.bf16.gmra.mxu0 %v3196
      %v3267 = vpop.f32.mrf.mxu0
      %v3268 = vadd.f32 0.0, %v3267
      %v3269 = vpop.f32.mrf.mxu0
      %v3270 = vadd.f32 0.0, %v3269
      %3271 = vmatmul.bf16.gmra.mxu0 %v3199
      %v3272 = vpop.f32.mrf.mxu0
      %v3273 = vadd.f32 0.0, %v3272
      %v3274 = vpop.f32.mrf.mxu0
      %v3275 = vadd.f32 0.0, %v3274
      %3276 = vmatmul.bf16.gmra.mxu0 %v3202
      %v3277 = vpop.f32.mrf.mxu0
      %v3278 = vadd.f32 0.0, %v3277
      %v3279 = vpop.f32.mrf.mxu0
      %v3280 = vadd.f32 0.0, %v3279
      %3281 = vmatmul.bf16.gmra.mxu0 %v3205
      %v3282 = vpop.f32.mrf.mxu0
      %v3283 = vadd.f32 0.0, %v3282
      %v3284 = vpop.f32.mrf.mxu0
      %v3285 = vadd.f32 0.0, %v3284
      %3286 = vmatmul.bf16.gmra.mxu0 %v3208
      %v3287 = vpop.f32.mrf.mxu0
      %v3288 = vadd.f32 0.0, %v3287
      %v3289 = vpop.f32.mrf.mxu0
      %v3290 = vadd.f32 0.0, %v3289
      %3291 = vmatmul.bf16.gmra.mxu0 %v3211
      %v3292 = vpop.f32.mrf.mxu0
      %v3293 = vadd.f32 0.0, %v3292
      %v3294 = vpop.f32.mrf.mxu0
      %v3295 = vadd.f32 0.0, %v3294
      %3296 = vmatmul.bf16.gmra.mxu0 %v3214
      %v3297 = vpop.f32.mrf.mxu0
      %v3298 = vadd.f32 0.0, %v3297
      %v3299 = vpop.f32.mrf.mxu0
      %v3300 = vadd.f32 0.0, %v3299
      %3301 = vmatmul.bf16.gmra.mxu0 %v3217
      %v3302 = vpop.f32.mrf.mxu0
      %v3303 = vadd.f32 0.0, %v3302
      %v3304 = vpop.f32.mrf.mxu0
      %v3305 = vadd.f32 0.0, %v3304
      %3306 = vmatmul.bf16.gmra.mxu0 %v3220
      %v3307 = vpop.f32.mrf.mxu0
      %v3308 = vadd.f32 0.0, %v3307
      %v3309 = vpop.f32.mrf.mxu0
      %v3310 = vadd.f32 0.0, %v3309
      %3311 = vmatmul.bf16.gmra.mxu0 %v3223
      %v3312 = vpop.f32.mrf.mxu0
      %v3313 = vadd.f32 0.0, %v3312
      %v3314 = vpop.f32.mrf.mxu0
      %v3315 = vadd.f32 0.0, %v3314
      %3316 = vdwg.mxu0
      %v3317 = vadd.f32 %v3095, %v3238
      %v3318 = vadd.f32 %v3096, %v3240
      %v3319 = vadd.f32 %v3097, %v3243
      %v3320 = vadd.f32 %v3098, %v3245
      %v3321 = vadd.f32 %v3099, %v3248
      %v3322 = vadd.f32 %v3100, %v3250
      %v3323 = vadd.f32 %v3101, %v3253
      %v3324 = vadd.f32 %v3102, %v3255
      %v3325 = vadd.f32 %v3103, %v3258
      %v3326 = vadd.f32 %v3104, %v3260
      %v3327 = vadd.f32 %v3105, %v3263
      %v3328 = vadd.f32 %v3106, %v3265
      %v3329 = vadd.f32 %v3107, %v3268
      %v3330 = vadd.f32 %v3108, %v3270
      %v3331 = vadd.f32 %v3109, %v3273
      %v3332 = vadd.f32 %v3110, %v3275
      %v3333 = vadd.f32 %v3111, %v3278
      %v3334 = vadd.f32 %v3112, %v3280
      %v3335 = vadd.f32 %v3113, %v3283
      %v3336 = vadd.f32 %v3114, %v3285
      %v3337 = vadd.f32 %v3115, %v3288
      %v3338 = vadd.f32 %v3116, %v3290
      %v3339 = vadd.f32 %v3117, %v3293
      %v3340 = vadd.f32 %v3118, %v3295
      %v3341 = vadd.f32 %v3119, %v3298
      %v3342 = vadd.f32 %v3120, %v3300
      %v3343 = vadd.f32 %v3121, %v3303
      %v3344 = vadd.f32 %v3122, %v3305
      %v3345 = vadd.f32 %v3123, %v3308
      %v3346 = vadd.f32 %v3124, %v3310
      %v3347 = vadd.f32 %v3125, %v3313
      %v3348 = vadd.f32 %v3126, %v3315
      %v3349 = vld [vmem:[%s358 + $0x1] sm:$0xff]
      %v3350 = vld [vmem:[%s358 + $0x9] sm:$0xff]
      %v3351 = vld [vmem:[%s358 + $0x19] sm:$0xff]
      %v3352 = vld [vmem:[%s358 + $0x21] sm:$0xff]
      %v3353 = vld [vmem:[%s358 + $0x31] sm:$0xff]
      %v3354 = vld [vmem:[%s358 + $0x39] sm:$0xff]
      %v3355 = vld [vmem:[%s358 + $0x49] sm:$0xff]
      %v3356 = vld [vmem:[%s358 + $0x51] sm:$0xff]
      %v3357 = vld [vmem:[%s358 + $0x61] sm:$0xff]
      %v3358 = vld [vmem:[%s358 + $0x69] sm:$0xff]
      %v3359 = vld [vmem:[%s358 + $0x79] sm:$0xff]
      %v3360 = vld [vmem:[%s358 + $0x81] sm:$0xff]
      %v3361 = vld [vmem:[%s358 + $0x91] sm:$0xff]
      %v3362 = vld [vmem:[%s358 + $0x99] sm:$0xff]
      %v3363 = vld [vmem:[%s358 + $0xa9] sm:$0xff]
      %v3364 = vld [vmem:[%s358 + $0xb1] sm:$0xff]
      %v3365 = vld [vmem:[%s358 + $0xc1] sm:$0xff]
      %v3366 = vld [vmem:[%s358 + $0xc9] sm:$0xff]
      %v3367 = vld [vmem:[%s358 + $0xd9] sm:$0xff]
      %v3368 = vld [vmem:[%s358 + $0xe1] sm:$0xff]
      %v3369 = vld [vmem:[%s358 + $0xf1] sm:$0xff]
      %v3370 = vld [vmem:[%s358 + $0xf9] sm:$0xff]
      %v3371 = vld [vmem:[%s358 + $0x109] sm:$0xff]
      %v3372 = vld [vmem:[%s358 + $0x111] sm:$0xff]
      %v3373 = vld [vmem:[%s358 + $0x121] sm:$0xff]
      %v3374 = vld [vmem:[%s358 + $0x129] sm:$0xff]
      %v3375 = vld [vmem:[%s358 + $0x139] sm:$0xff]
      %v3376 = vld [vmem:[%s358 + $0x141] sm:$0xff]
      %v3377 = vld [vmem:[%s358 + $0x151] sm:$0xff]
      %v3378 = vld [vmem:[%s358 + $0x159] sm:$0xff]
      %v3379 = vld [vmem:[%s358 + $0x169] sm:$0xff]
      %v3380 = vld [vmem:[%s358 + $0x171] sm:$0xff]
      %v3381 = vpack.c.bf16 %v3350, %v3349
      %v3382 = vpack.c.bf16 %v3352, %v3351
      %v3383 = vpack.c.bf16 %v3354, %v3353
      %v3384 = vpack.c.bf16 %v3356, %v3355
      %v3385 = vpack.c.bf16 %v3358, %v3357
      %v3386 = vpack.c.bf16 %v3360, %v3359
      %v3387 = vpack.c.bf16 %v3362, %v3361
      %v3388 = vpack.c.bf16 %v3364, %v3363
      %v3389 = vpack.c.bf16 %v3366, %v3365
      %v3390 = vpack.c.bf16 %v3368, %v3367
      %v3391 = vpack.c.bf16 %v3370, %v3369
      %v3392 = vpack.c.bf16 %v3372, %v3371
      %v3393 = vpack.c.bf16 %v3374, %v3373
      %v3394 = vpack.c.bf16 %v3376, %v3375
      %v3395 = vpack.c.bf16 %v3378, %v3377
      %v3396 = vpack.c.bf16 %v3380, %v3379
      %s3397 = scalar_lea.vmem %s4, 16
      %v3398 = vld [vmem:[%s3397] sm:$0xf]
      %v3400 = vsel %vm280, %v3381, 0
      %v3403 = vsel %vm280, %v3382, 0
      %v3406 = vsel %vm280, %v3383, 0
      %v3409 = vsel %vm280, %v3384, 0
      %v3412 = vsel %vm280, %v3385, 0
      %v3415 = vsel %vm280, %v3386, 0
      %v3418 = vsel %vm280, %v3387, 0
      %v3421 = vsel %vm280, %v3388, 0
      %v3424 = vsel %vm280, %v3389, 0
      %v3427 = vsel %vm280, %v3390, 0
      %v3430 = vsel %vm280, %v3391, 0
      %v3433 = vsel %vm280, %v3392, 0
      %v3436 = vsel %vm280, %v3393, 0
      %v3439 = vsel %vm280, %v3394, 0
      %v3442 = vsel %vm280, %v3395, 0
      %v3445 = vsel %vm280, %v3396, 0
      %v3448 = vsel %vm538, %v3398, 0
      %3450 = vmatpush.bf16.msra.mxu0 0
      %3451 = vmatpush.bf16.msra.mxu0 0
      %3452 = vmatpush.bf16.msra.mxu0 0
      %3453 = vmatpush.bf16.msra.mxu0 0
      %3454 = vmatpush.bf16.msra.mxu0 0
      %3455 = vmatpush.bf16.msra.mxu0 0
      %3456 = vmatpush.bf16.msra.mxu0 0
      %3457 = vmatpush.bf16.msra.mxu0 %v3448
      %3458 = vmatmul.bf16.gmra.mxu0 %v3400
      %v3459 = vpop.f32.mrf.mxu0
      %v3460 = vadd.f32 0.0, %v3459
      %v3461 = vpop.f32.mrf.mxu0
      %v3462 = vadd.f32 0.0, %v3461
      %3463 = vmatmul.bf16.gmra.mxu0 %v3403
      %v3464 = vpop.f32.mrf.mxu0
      %v3465 = vadd.f32 0.0, %v3464
      %v3466 = vpop.f32.mrf.mxu0
      %v3467 = vadd.f32 0.0, %v3466
      %3468 = vmatmul.bf16.gmra.mxu0 %v3406
      %v3469 = vpop.f32.mrf.mxu0
      %v3470 = vadd.f32 0.0, %v3469
      %v3471 = vpop.f32.mrf.mxu0
      %v3472 = vadd.f32 0.0, %v3471
      %3473 = vmatmul.bf16.gmra.mxu0 %v3409
      %v3474 = vpop.f32.mrf.mxu0
      %v3475 = vadd.f32 0.0, %v3474
      %v3476 = vpop.f32.mrf.mxu0
      %v3477 = vadd.f32 0.0, %v3476
      %3478 = vmatmul.bf16.gmra.mxu0 %v3412
      %v3479 = vpop.f32.mrf.mxu0
      %v3480 = vadd.f32 0.0, %v3479
      %v3481 = vpop.f32.mrf.mxu0
      %v3482 = vadd.f32 0.0, %v3481
      %3483 = vmatmul.bf16.gmra.mxu0 %v3415
      %v3484 = vpop.f32.mrf.mxu0
      %v3485 = vadd.f32 0.0, %v3484
      %v3486 = vpop.f32.mrf.mxu0
      %v3487 = vadd.f32 0.0, %v3486
      %3488 = vmatmul.bf16.gmra.mxu0 %v3418
      %v3489 = vpop.f32.mrf.mxu0
      %v3490 = vadd.f32 0.0, %v3489
      %v3491 = vpop.f32.mrf.mxu0
      %v3492 = vadd.f32 0.0, %v3491
      %3493 = vmatmul.bf16.gmra.mxu0 %v3421
      %v3494 = vpop.f32.mrf.mxu0
      %v3495 = vadd.f32 0.0, %v3494
      %v3496 = vpop.f32.mrf.mxu0
      %v3497 = vadd.f32 0.0, %v3496
      %3498 = vmatmul.bf16.gmra.mxu0 %v3424
      %v3499 = vpop.f32.mrf.mxu0
      %v3500 = vadd.f32 0.0, %v3499
      %v3501 = vpop.f32.mrf.mxu0
      %v3502 = vadd.f32 0.0, %v3501
      %3503 = vmatmul.bf16.gmra.mxu0 %v3427
      %v3504 = vpop.f32.mrf.mxu0
      %v3505 = vadd.f32 0.0, %v3504
      %v3506 = vpop.f32.mrf.mxu0
      %v3507 = vadd.f32 0.0, %v3506
      %3508 = vmatmul.bf16.gmra.mxu0 %v3430
      %v3509 = vpop.f32.mrf.mxu0
      %v3510 = vadd.f32 0.0, %v3509
      %v3511 = vpop.f32.mrf.mxu0
      %v3512 = vadd.f32 0.0, %v3511
      %3513 = vmatmul.bf16.gmra.mxu0 %v3433
      %v3514 = vpop.f32.mrf.mxu0
      %v3515 = vadd.f32 0.0, %v3514
      %v3516 = vpop.f32.mrf.mxu0
      %v3517 = vadd.f32 0.0, %v3516
      %3518 = vmatmul.bf16.gmra.mxu0 %v3436
      %v3519 = vpop.f32.mrf.mxu0
      %v3520 = vadd.f32 0.0, %v3519
      %v3521 = vpop.f32.mrf.mxu0
      %v3522 = vadd.f32 0.0, %v3521
      %3523 = vmatmul.bf16.gmra.mxu0 %v3439
      %v3524 = vpop.f32.mrf.mxu0
      %v3525 = vadd.f32 0.0, %v3524
      %v3526 = vpop.f32.mrf.mxu0
      %v3527 = vadd.f32 0.0, %v3526
      %3528 = vmatmul.bf16.gmra.mxu0 %v3442
      %v3529 = vpop.f32.mrf.mxu0
      %v3530 = vadd.f32 0.0, %v3529
      %v3531 = vpop.f32.mrf.mxu0
      %v3532 = vadd.f32 0.0, %v3531
      %3533 = vmatmul.bf16.gmra.mxu0 %v3445
      %v3534 = vpop.f32.mrf.mxu0
      %v3535 = vadd.f32 0.0, %v3534
      %v3536 = vpop.f32.mrf.mxu0
      %v3537 = vadd.f32 0.0, %v3536
      %3538 = vdwg.mxu0
      %v3539 = vadd.f32 %v3317, %v3460
      %v3540 = vadd.f32 %v3318, %v3462
      %v3541 = vadd.f32 %v3319, %v3465
      %v3542 = vadd.f32 %v3320, %v3467
      %v3543 = vadd.f32 %v3321, %v3470
      %v3544 = vadd.f32 %v3322, %v3472
      %v3545 = vadd.f32 %v3323, %v3475
      %v3546 = vadd.f32 %v3324, %v3477
      %v3547 = vadd.f32 %v3325, %v3480
      %v3548 = vadd.f32 %v3326, %v3482
      %v3549 = vadd.f32 %v3327, %v3485
      %v3550 = vadd.f32 %v3328, %v3487
      %v3551 = vadd.f32 %v3329, %v3490
      %v3552 = vadd.f32 %v3330, %v3492
      %v3553 = vadd.f32 %v3331, %v3495
      %v3554 = vadd.f32 %v3332, %v3497
      %v3555 = vadd.f32 %v3333, %v3500
      %v3556 = vadd.f32 %v3334, %v3502
      %v3557 = vadd.f32 %v3335, %v3505
      %v3558 = vadd.f32 %v3336, %v3507
      %v3559 = vadd.f32 %v3337, %v3510
      %v3560 = vadd.f32 %v3338, %v3512
      %v3561 = vadd.f32 %v3339, %v3515
      %v3562 = vadd.f32 %v3340, %v3517
      %v3563 = vadd.f32 %v3341, %v3520
      %v3564 = vadd.f32 %v3342, %v3522
      %v3565 = vadd.f32 %v3343, %v3525
      %v3566 = vadd.f32 %v3344, %v3527
      %v3567 = vadd.f32 %v3345, %v3530
      %v3568 = vadd.f32 %v3346, %v3532
      %v3569 = vadd.f32 %v3347, %v3535
      %v3570 = vadd.f32 %v3348, %v3537
      %v3571 = vld [vmem:[%s358 + $0x2] sm:$0xff]
      %v3572 = vld [vmem:[%s358 + $0xa] sm:$0xff]
      %v3573 = vld [vmem:[%s358 + $0x1a] sm:$0xff]
      %v3574 = vld [vmem:[%s358 + $0x22] sm:$0xff]
      %v3575 = vld [vmem:[%s358 + $0x32] sm:$0xff]
      %v3576 = vld [vmem:[%s358 + $0x3a] sm:$0xff]
      %v3577 = vld [vmem:[%s358 + $0x4a] sm:$0xff]
      %v3578 = vld [vmem:[%s358 + $0x52] sm:$0xff]
      %v3579 = vld [vmem:[%s358 + $0x62] sm:$0xff]
      %v3580 = vld [vmem:[%s358 + $0x6a] sm:$0xff]
      %v3581 = vld [vmem:[%s358 + $0x7a] sm:$0xff]
      %v3582 = vld [vmem:[%s358 + $0x82] sm:$0xff]
      %v3583 = vld [vmem:[%s358 + $0x92] sm:$0xff]
      %v3584 = vld [vmem:[%s358 + $0x9a] sm:$0xff]
      %v3585 = vld [vmem:[%s358 + $0xaa] sm:$0xff]
      %v3586 = vld [vmem:[%s358 + $0xb2] sm:$0xff]
      %v3587 = vld [vmem:[%s358 + $0xc2] sm:$0xff]
      %v3588 = vld [vmem:[%s358 + $0xca] sm:$0xff]
      %v3589 = vld [vmem:[%s358 + $0xda] sm:$0xff]
      %v3590 = vld [vmem:[%s358 + $0xe2] sm:$0xff]
      %v3591 = vld [vmem:[%s358 + $0xf2] sm:$0xff]
      %v3592 = vld [vmem:[%s358 + $0xfa] sm:$0xff]
      %v3593 = vld [vmem:[%s358 + $0x10a] sm:$0xff]
      %v3594 = vld [vmem:[%s358 + $0x112] sm:$0xff]
      %v3595 = vld [vmem:[%s358 + $0x122] sm:$0xff]
      %v3596 = vld [vmem:[%s358 + $0x12a] sm:$0xff]
      %v3597 = vld [vmem:[%s358 + $0x13a] sm:$0xff]
      %v3598 = vld [vmem:[%s358 + $0x142] sm:$0xff]
      %v3599 = vld [vmem:[%s358 + $0x152] sm:$0xff]
      %v3600 = vld [vmem:[%s358 + $0x15a] sm:$0xff]
      %v3601 = vld [vmem:[%s358 + $0x16a] sm:$0xff]
      %v3602 = vld [vmem:[%s358 + $0x172] sm:$0xff]
      %v3603 = vpack.c.bf16 %v3572, %v3571
      %v3604 = vpack.c.bf16 %v3574, %v3573
      %v3605 = vpack.c.bf16 %v3576, %v3575
      %v3606 = vpack.c.bf16 %v3578, %v3577
      %v3607 = vpack.c.bf16 %v3580, %v3579
      %v3608 = vpack.c.bf16 %v3582, %v3581
      %v3609 = vpack.c.bf16 %v3584, %v3583
      %v3610 = vpack.c.bf16 %v3586, %v3585
      %v3611 = vpack.c.bf16 %v3588, %v3587
      %v3612 = vpack.c.bf16 %v3590, %v3589
      %v3613 = vpack.c.bf16 %v3592, %v3591
      %v3614 = vpack.c.bf16 %v3594, %v3593
      %v3615 = vpack.c.bf16 %v3596, %v3595
      %v3616 = vpack.c.bf16 %v3598, %v3597
      %v3617 = vpack.c.bf16 %v3600, %v3599
      %v3618 = vpack.c.bf16 %v3602, %v3601
      %s3619 = scalar_lea.vmem %s4, 20
      %v3620 = vld [vmem:[%s3619] sm:$0xf]
      %v3622 = vsel %vm280, %v3603, 0
      %v3625 = vsel %vm280, %v3604, 0
      %v3628 = vsel %vm280, %v3605, 0
      %v3631 = vsel %vm280, %v3606, 0
      %v3634 = vsel %vm280, %v3607, 0
      %v3637 = vsel %vm280, %v3608, 0
      %v3640 = vsel %vm280, %v3609, 0
      %v3643 = vsel %vm280, %v3610, 0
      %v3646 = vsel %vm280, %v3611, 0
      %v3649 = vsel %vm280, %v3612, 0
      %v3652 = vsel %vm280, %v3613, 0
      %v3655 = vsel %vm280, %v3614, 0
      %v3658 = vsel %vm280, %v3615, 0
      %v3661 = vsel %vm280, %v3616, 0
      %v3664 = vsel %vm280, %v3617, 0
      %v3667 = vsel %vm280, %v3618, 0
      %v3670 = vsel %vm538, %v3620, 0
      %3672 = vmatpush.bf16.msra.mxu0 0
      %3673 = vmatpush.bf16.msra.mxu0 0
      %3674 = vmatpush.bf16.msra.mxu0 0
      %3675 = vmatpush.bf16.msra.mxu0 0
      %3676 = vmatpush.bf16.msra.mxu0 0
      %3677 = vmatpush.bf16.msra.mxu0 0
      %3678 = vmatpush.bf16.msra.mxu0 0
      %3679 = vmatpush.bf16.msra.mxu0 %v3670
      %3680 = vmatmul.bf16.gmra.mxu0 %v3622
      %v3681 = vpop.f32.mrf.mxu0
      %v3682 = vadd.f32 0.0, %v3681
      %v3683 = vpop.f32.mrf.mxu0
      %v3684 = vadd.f32 0.0, %v3683
      %3685 = vmatmul.bf16.gmra.mxu0 %v3625
      %v3686 = vpop.f32.mrf.mxu0
      %v3687 = vadd.f32 0.0, %v3686
      %v3688 = vpop.f32.mrf.mxu0
      %v3689 = vadd.f32 0.0, %v3688
      %3690 = vmatmul.bf16.gmra.mxu0 %v3628
      %v3691 = vpop.f32.mrf.mxu0
      %v3692 = vadd.f32 0.0, %v3691
      %v3693 = vpop.f32.mrf.mxu0
      %v3694 = vadd.f32 0.0, %v3693
      %3695 = vmatmul.bf16.gmra.mxu0 %v3631
      %v3696 = vpop.f32.mrf.mxu0
      %v3697 = vadd.f32 0.0, %v3696
      %v3698 = vpop.f32.mrf.mxu0
      %v3699 = vadd.f32 0.0, %v3698
      %3700 = vmatmul.bf16.gmra.mxu0 %v3634
      %v3701 = vpop.f32.mrf.mxu0
      %v3702 = vadd.f32 0.0, %v3701
      %v3703 = vpop.f32.mrf.mxu0
      %v3704 = vadd.f32 0.0, %v3703
      %3705 = vmatmul.bf16.gmra.mxu0 %v3637
      %v3706 = vpop.f32.mrf.mxu0
      %v3707 = vadd.f32 0.0, %v3706
      %v3708 = vpop.f32.mrf.mxu0
      %v3709 = vadd.f32 0.0, %v3708
      %3710 = vmatmul.bf16.gmra.mxu0 %v3640
      %v3711 = vpop.f32.mrf.mxu0
      %v3712 = vadd.f32 0.0, %v3711
      %v3713 = vpop.f32.mrf.mxu0
      %v3714 = vadd.f32 0.0, %v3713
      %3715 = vmatmul.bf16.gmra.mxu0 %v3643
      %v3716 = vpop.f32.mrf.mxu0
      %v3717 = vadd.f32 0.0, %v3716
      %v3718 = vpop.f32.mrf.mxu0
      %v3719 = vadd.f32 0.0, %v3718
      %3720 = vmatmul.bf16.gmra.mxu0 %v3646
      %v3721 = vpop.f32.mrf.mxu0
      %v3722 = vadd.f32 0.0, %v3721
      %v3723 = vpop.f32.mrf.mxu0
      %v3724 = vadd.f32 0.0, %v3723
      %3725 = vmatmul.bf16.gmra.mxu0 %v3649
      %v3726 = vpop.f32.mrf.mxu0
      %v3727 = vadd.f32 0.0, %v3726
      %v3728 = vpop.f32.mrf.mxu0
      %v3729 = vadd.f32 0.0, %v3728
      %3730 = vmatmul.bf16.gmra.mxu0 %v3652
      %v3731 = vpop.f32.mrf.mxu0
      %v3732 = vadd.f32 0.0, %v3731
      %v3733 = vpop.f32.mrf.mxu0
      %v3734 = vadd.f32 0.0, %v3733
      %3735 = vmatmul.bf16.gmra.mxu0 %v3655
      %v3736 = vpop.f32.mrf.mxu0
      %v3737 = vadd.f32 0.0, %v3736
      %v3738 = vpop.f32.mrf.mxu0
      %v3739 = vadd.f32 0.0, %v3738
      %3740 = vmatmul.bf16.gmra.mxu0 %v3658
      %v3741 = vpop.f32.mrf.mxu0
      %v3742 = vadd.f32 0.0, %v3741
      %v3743 = vpop.f32.mrf.mxu0
      %v3744 = vadd.f32 0.0, %v3743
      %3745 = vmatmul.bf16.gmra.mxu0 %v3661
      %v3746 = vpop.f32.mrf.mxu0
      %v3747 = vadd.f32 0.0, %v3746
      %v3748 = vpop.f32.mrf.mxu0
      %v3749 = vadd.f32 0.0, %v3748
      %3750 = vmatmul.bf16.gmra.mxu0 %v3664
      %v3751 = vpop.f32.mrf.mxu0
      %v3752 = vadd.f32 0.0, %v3751
      %v3753 = vpop.f32.mrf.mxu0
      %v3754 = vadd.f32 0.0, %v3753
      %3755 = vmatmul.bf16.gmra.mxu0 %v3667
      %v3756 = vpop.f32.mrf.mxu0
      %v3757 = vadd.f32 0.0, %v3756
      %v3758 = vpop.f32.mrf.mxu0
      %v3759 = vadd.f32 0.0, %v3758
      %3760 = vdwg.mxu0
      %v3761 = vadd.f32 %v3539, %v3682
      %v3762 = vadd.f32 %v3540, %v3684
      %v3763 = vadd.f32 %v3541, %v3687
      %v3764 = vadd.f32 %v3542, %v3689
      %v3765 = vadd.f32 %v3543, %v3692
      %v3766 = vadd.f32 %v3544, %v3694
      %v3767 = vadd.f32 %v3545, %v3697
      %v3768 = vadd.f32 %v3546, %v3699
      %v3769 = vadd.f32 %v3547, %v3702
      %v3770 = vadd.f32 %v3548, %v3704
      %v3771 = vadd.f32 %v3549, %v3707
      %v3772 = vadd.f32 %v3550, %v3709
      %v3773 = vadd.f32 %v3551, %v3712
      %v3774 = vadd.f32 %v3552, %v3714
      %v3775 = vadd.f32 %v3553, %v3717
      %v3776 = vadd.f32 %v3554, %v3719
      %v3777 = vadd.f32 %v3555, %v3722
      %v3778 = vadd.f32 %v3556, %v3724
      %v3779 = vadd.f32 %v3557, %v3727
      %v3780 = vadd.f32 %v3558, %v3729
      %v3781 = vadd.f32 %v3559, %v3732
      %v3782 = vadd.f32 %v3560, %v3734
      %v3783 = vadd.f32 %v3561, %v3737
      %v3784 = vadd.f32 %v3562, %v3739
      %v3785 = vadd.f32 %v3563, %v3742
      %v3786 = vadd.f32 %v3564, %v3744
      %v3787 = vadd.f32 %v3565, %v3747
      %v3788 = vadd.f32 %v3566, %v3749
      %v3789 = vadd.f32 %v3567, %v3752
      %v3790 = vadd.f32 %v3568, %v3754
      %v3791 = vadd.f32 %v3569, %v3757
      %v3792 = vadd.f32 %v3570, %v3759
      %v3793 = vld [vmem:[%s1659] sm:$0xff]
      %v3794 = vld [vmem:[%s1659 + $0x8] sm:$0xff]
      %v3795 = vld [vmem:[%s1659 + $0x18] sm:$0xff]
      %v3796 = vld [vmem:[%s1659 + $0x20] sm:$0xff]
      %v3797 = vld [vmem:[%s1659 + $0x30] sm:$0xff]
      %v3798 = vld [vmem:[%s1659 + $0x38] sm:$0xff]
      %v3799 = vld [vmem:[%s1659 + $0x48] sm:$0xff]
      %v3800 = vld [vmem:[%s1659 + $0x50] sm:$0xff]
      %v3801 = vld [vmem:[%s1659 + $0x60] sm:$0xff]
      %v3802 = vld [vmem:[%s1659 + $0x68] sm:$0xff]
      %v3803 = vld [vmem:[%s1659 + $0x78] sm:$0xff]
      %v3804 = vld [vmem:[%s1659 + $0x80] sm:$0xff]
      %v3805 = vld [vmem:[%s1659 + $0x90] sm:$0xff]
      %v3806 = vld [vmem:[%s1659 + $0x98] sm:$0xff]
      %v3807 = vld [vmem:[%s1659 + $0xa8] sm:$0xff]
      %v3808 = vld [vmem:[%s1659 + $0xb0] sm:$0xff]
      %v3809 = vld [vmem:[%s1659 + $0xc0] sm:$0xff]
      %v3810 = vld [vmem:[%s1659 + $0xc8] sm:$0xff]
      %v3811 = vld [vmem:[%s1659 + $0xd8] sm:$0xff]
      %v3812 = vld [vmem:[%s1659 + $0xe0] sm:$0xff]
      %v3813 = vld [vmem:[%s1659 + $0xf0] sm:$0xff]
      %v3814 = vld [vmem:[%s1659 + $0xf8] sm:$0xff]
      %v3815 = vld [vmem:[%s1659 + $0x108] sm:$0xff]
      %v3816 = vld [vmem:[%s1659 + $0x110] sm:$0xff]
      %v3817 = vld [vmem:[%s1659 + $0x120] sm:$0xff]
      %v3818 = vld [vmem:[%s1659 + $0x128] sm:$0xff]
      %v3819 = vld [vmem:[%s1659 + $0x138] sm:$0xff]
      %v3820 = vld [vmem:[%s1659 + $0x140] sm:$0xff]
      %v3821 = vld [vmem:[%s1659 + $0x150] sm:$0xff]
      %v3822 = vld [vmem:[%s1659 + $0x158] sm:$0xff]
      %v3823 = vld [vmem:[%s1659 + $0x168] sm:$0xff]
      %v3824 = vld [vmem:[%s1659 + $0x170] sm:$0xff]
      %v3825 = vpack.c.bf16 %v3794, %v3793
      %v3826 = vpack.c.bf16 %v3796, %v3795
      %v3827 = vpack.c.bf16 %v3798, %v3797
      %v3828 = vpack.c.bf16 %v3800, %v3799
      %v3829 = vpack.c.bf16 %v3802, %v3801
      %v3830 = vpack.c.bf16 %v3804, %v3803
      %v3831 = vpack.c.bf16 %v3806, %v3805
      %v3832 = vpack.c.bf16 %v3808, %v3807
      %v3833 = vpack.c.bf16 %v3810, %v3809
      %v3834 = vpack.c.bf16 %v3812, %v3811
      %v3835 = vpack.c.bf16 %v3814, %v3813
      %v3836 = vpack.c.bf16 %v3816, %v3815
      %v3837 = vpack.c.bf16 %v3818, %v3817
      %v3838 = vpack.c.bf16 %v3820, %v3819
      %v3839 = vpack.c.bf16 %v3822, %v3821
      %v3840 = vpack.c.bf16 %v3824, %v3823
      %s3841 = scalar_lea.vmem %s4, 24
      %v3842 = vld [vmem:[%s3841] sm:$0xf]
      %v3844 = vsel %vm280, %v3825, 0
      %v3847 = vsel %vm280, %v3826, 0
      %v3850 = vsel %vm280, %v3827, 0
      %v3853 = vsel %vm280, %v3828, 0
      %v3856 = vsel %vm280, %v3829, 0
      %v3859 = vsel %vm280, %v3830, 0
      %v3862 = vsel %vm280, %v3831, 0
      %v3865 = vsel %vm280, %v3832, 0
      %v3868 = vsel %vm280, %v3833, 0
      %v3871 = vsel %vm280, %v3834, 0
      %v3874 = vsel %vm280, %v3835, 0
      %v3877 = vsel %vm280, %v3836, 0
      %v3880 = vsel %vm280, %v3837, 0
      %v3883 = vsel %vm280, %v3838, 0
      %v3886 = vsel %vm280, %v3839, 0
      %v3889 = vsel %vm280, %v3840, 0
      %v3892 = vsel %vm538, %v3842, 0
      %3894 = vmatpush.bf16.msra.mxu0 0
      %3895 = vmatpush.bf16.msra.mxu0 0
      %3896 = vmatpush.bf16.msra.mxu0 0
      %3897 = vmatpush.bf16.msra.mxu0 0
      %3898 = vmatpush.bf16.msra.mxu0 0
      %3899 = vmatpush.bf16.msra.mxu0 0
      %3900 = vmatpush.bf16.msra.mxu0 0
      %3901 = vmatpush.bf16.msra.mxu0 %v3892
      %3902 = vmatmul.bf16.gmra.mxu0 %v3844
      %v3903 = vpop.f32.mrf.mxu0
      %v3904 = vadd.f32 0.0, %v3903
      %v3905 = vpop.f32.mrf.mxu0
      %v3906 = vadd.f32 0.0, %v3905
      %3907 = vmatmul.bf16.gmra.mxu0 %v3847
      %v3908 = vpop.f32.mrf.mxu0
      %v3909 = vadd.f32 0.0, %v3908
      %v3910 = vpop.f32.mrf.mxu0
      %v3911 = vadd.f32 0.0, %v3910
      %3912 = vmatmul.bf16.gmra.mxu0 %v3850
      %v3913 = vpop.f32.mrf.mxu0
      %v3914 = vadd.f32 0.0, %v3913
      %v3915 = vpop.f32.mrf.mxu0
      %v3916 = vadd.f32 0.0, %v3915
      %3917 = vmatmul.bf16.gmra.mxu0 %v3853
      %v3918 = vpop.f32.mrf.mxu0
      %v3919 = vadd.f32 0.0, %v3918
      %v3920 = vpop.f32.mrf.mxu0
      %v3921 = vadd.f32 0.0, %v3920
      %3922 = vmatmul.bf16.gmra.mxu0 %v3856
      %v3923 = vpop.f32.mrf.mxu0
      %v3924 = vadd.f32 0.0, %v3923
      %v3925 = vpop.f32.mrf.mxu0
      %v3926 = vadd.f32 0.0, %v3925
      %3927 = vmatmul.bf16.gmra.mxu0 %v3859
      %v3928 = vpop.f32.mrf.mxu0
      %v3929 = vadd.f32 0.0, %v3928
      %v3930 = vpop.f32.mrf.mxu0
      %v3931 = vadd.f32 0.0, %v3930
      %3932 = vmatmul.bf16.gmra.mxu0 %v3862
      %v3933 = vpop.f32.mrf.mxu0
      %v3934 = vadd.f32 0.0, %v3933
      %v3935 = vpop.f32.mrf.mxu0
      %v3936 = vadd.f32 0.0, %v3935
      %3937 = vmatmul.bf16.gmra.mxu0 %v3865
      %v3938 = vpop.f32.mrf.mxu0
      %v3939 = vadd.f32 0.0, %v3938
      %v3940 = vpop.f32.mrf.mxu0
      %v3941 = vadd.f32 0.0, %v3940
      %3942 = vmatmul.bf16.gmra.mxu0 %v3868
      %v3943 = vpop.f32.mrf.mxu0
      %v3944 = vadd.f32 0.0, %v3943
      %v3945 = vpop.f32.mrf.mxu0
      %v3946 = vadd.f32 0.0, %v3945
      %3947 = vmatmul.bf16.gmra.mxu0 %v3871
      %v3948 = vpop.f32.mrf.mxu0
      %v3949 = vadd.f32 0.0, %v3948
      %v3950 = vpop.f32.mrf.mxu0
      %v3951 = vadd.f32 0.0, %v3950
      %3952 = vmatmul.bf16.gmra.mxu0 %v3874
      %v3953 = vpop.f32.mrf.mxu0
      %v3954 = vadd.f32 0.0, %v3953
      %v3955 = vpop.f32.mrf.mxu0
      %v3956 = vadd.f32 0.0, %v3955
      %3957 = vmatmul.bf16.gmra.mxu0 %v3877
      %v3958 = vpop.f32.mrf.mxu0
      %v3959 = vadd.f32 0.0, %v3958
      %v3960 = vpop.f32.mrf.mxu0
      %v3961 = vadd.f32 0.0, %v3960
      %3962 = vmatmul.bf16.gmra.mxu0 %v3880
      %v3963 = vpop.f32.mrf.mxu0
      %v3964 = vadd.f32 0.0, %v3963
      %v3965 = vpop.f32.mrf.mxu0
      %v3966 = vadd.f32 0.0, %v3965
      %3967 = vmatmul.bf16.gmra.mxu0 %v3883
      %v3968 = vpop.f32.mrf.mxu0
      %v3969 = vadd.f32 0.0, %v3968
      %v3970 = vpop.f32.mrf.mxu0
      %v3971 = vadd.f32 0.0, %v3970
      %3972 = vmatmul.bf16.gmra.mxu0 %v3886
      %v3973 = vpop.f32.mrf.mxu0
      %v3974 = vadd.f32 0.0, %v3973
      %v3975 = vpop.f32.mrf.mxu0
      %v3976 = vadd.f32 0.0, %v3975
      %3977 = vmatmul.bf16.gmra.mxu0 %v3889
      %v3978 = vpop.f32.mrf.mxu0
      %v3979 = vadd.f32 0.0, %v3978
      %v3980 = vpop.f32.mrf.mxu0
      %v3981 = vadd.f32 0.0, %v3980
      %3982 = vdwg.mxu0
      %v3983 = vadd.f32 %v3761, %v3904
      %v3984 = vadd.f32 %v3762, %v3906
      %v3985 = vadd.f32 %v3763, %v3909
      %v3986 = vadd.f32 %v3764, %v3911
      %v3987 = vadd.f32 %v3765, %v3914
      %v3988 = vadd.f32 %v3766, %v3916
      %v3989 = vadd.f32 %v3767, %v3919
      %v3990 = vadd.f32 %v3768, %v3921
      %v3991 = vadd.f32 %v3769, %v3924
      %v3992 = vadd.f32 %v3770, %v3926
      %v3993 = vadd.f32 %v3771, %v3929
      %v3994 = vadd.f32 %v3772, %v3931
      %v3995 = vadd.f32 %v3773, %v3934
      %v3996 = vadd.f32 %v3774, %v3936
      %v3997 = vadd.f32 %v3775, %v3939
      %v3998 = vadd.f32 %v3776, %v3941
      %v3999 = vadd.f32 %v3777, %v3944
      %v4000 = vadd.f32 %v3778, %v3946
      %v4001 = vadd.f32 %v3779, %v3949
      %v4002 = vadd.f32 %v3780, %v3951
      %v4003 = vadd.f32 %v3781, %v3954
      %v4004 = vadd.f32 %v3782, %v3956
      %v4005 = vadd.f32 %v3783, %v3959
      %v4006 = vadd.f32 %v3784, %v3961
      %v4007 = vadd.f32 %v3785, %v3964
      %v4008 = vadd.f32 %v3786, %v3966
      %v4009 = vadd.f32 %v3787, %v3969
      %v4010 = vadd.f32 %v3788, %v3971
      %v4011 = vadd.f32 %v3789, %v3974
      %v4012 = vadd.f32 %v3790, %v3976
      %v4013 = vadd.f32 %v3791, %v3979
      %v4014 = vadd.f32 %v3792, %v3981
      %v4015 = vld [vmem:[%s1659 + $0x1] sm:$0xff]
      %v4016 = vld [vmem:[%s1659 + $0x9] sm:$0xff]
      %v4017 = vld [vmem:[%s1659 + $0x19] sm:$0xff]
      %v4018 = vld [vmem:[%s1659 + $0x21] sm:$0xff]
      %v4019 = vld [vmem:[%s1659 + $0x31] sm:$0xff]
      %v4020 = vld [vmem:[%s1659 + $0x39] sm:$0xff]
      %v4021 = vld [vmem:[%s1659 + $0x49] sm:$0xff]
      %v4022 = vld [vmem:[%s1659 + $0x51] sm:$0xff]
      %v4023 = vld [vmem:[%s1659 + $0x61] sm:$0xff]
      %v4024 = vld [vmem:[%s1659 + $0x69] sm:$0xff]
      %v4025 = vld [vmem:[%s1659 + $0x79] sm:$0xff]
      %v4026 = vld [vmem:[%s1659 + $0x81] sm:$0xff]
      %v4027 = vld [vmem:[%s1659 + $0x91] sm:$0xff]
      %v4028 = vld [vmem:[%s1659 + $0x99] sm:$0xff]
      %v4029 = vld [vmem:[%s1659 + $0xa9] sm:$0xff]
      %v4030 = vld [vmem:[%s1659 + $0xb1] sm:$0xff]
      %v4031 = vld [vmem:[%s1659 + $0xc1] sm:$0xff]
      %v4032 = vld [vmem:[%s1659 + $0xc9] sm:$0xff]
      %v4033 = vld [vmem:[%s1659 + $0xd9] sm:$0xff]
      %v4034 = vld [vmem:[%s1659 + $0xe1] sm:$0xff]
      %v4035 = vld [vmem:[%s1659 + $0xf1] sm:$0xff]
      %v4036 = vld [vmem:[%s1659 + $0xf9] sm:$0xff]
      %v4037 = vld [vmem:[%s1659 + $0x109] sm:$0xff]
      %v4038 = vld [vmem:[%s1659 + $0x111] sm:$0xff]
      %v4039 = vld [vmem:[%s1659 + $0x121] sm:$0xff]
      %v4040 = vld [vmem:[%s1659 + $0x129] sm:$0xff]
      %v4041 = vld [vmem:[%s1659 + $0x139] sm:$0xff]
      %v4042 = vld [vmem:[%s1659 + $0x141] sm:$0xff]
      %v4043 = vld [vmem:[%s1659 + $0x151] sm:$0xff]
      %v4044 = vld [vmem:[%s1659 + $0x159] sm:$0xff]
      %v4045 = vld [vmem:[%s1659 + $0x169] sm:$0xff]
      %v4046 = vld [vmem:[%s1659 + $0x171] sm:$0xff]
      %v4047 = vpack.c.bf16 %v4016, %v4015
      %v4048 = vpack.c.bf16 %v4018, %v4017
      %v4049 = vpack.c.bf16 %v4020, %v4019
      %v4050 = vpack.c.bf16 %v4022, %v4021
      %v4051 = vpack.c.bf16 %v4024, %v4023
      %v4052 = vpack.c.bf16 %v4026, %v4025
      %v4053 = vpack.c.bf16 %v4028, %v4027
      %v4054 = vpack.c.bf16 %v4030, %v4029
      %v4055 = vpack.c.bf16 %v4032, %v4031
      %v4056 = vpack.c.bf16 %v4034, %v4033
      %v4057 = vpack.c.bf16 %v4036, %v4035
      %v4058 = vpack.c.bf16 %v4038, %v4037
      %v4059 = vpack.c.bf16 %v4040, %v4039
      %v4060 = vpack.c.bf16 %v4042, %v4041
      %v4061 = vpack.c.bf16 %v4044, %v4043
      %v4062 = vpack.c.bf16 %v4046, %v4045
      %s4063 = scalar_lea.vmem %s4, 28
      %v4064 = vld [vmem:[%s4063] sm:$0xf]
      %v4066 = vsel %vm280, %v4047, 0
      %v4069 = vsel %vm280, %v4048, 0
      %v4072 = vsel %vm280, %v4049, 0
      %v4075 = vsel %vm280, %v4050, 0
      %v4078 = vsel %vm280, %v4051, 0
      %v4081 = vsel %vm280, %v4052, 0
      %v4084 = vsel %vm280, %v4053, 0
      %v4087 = vsel %vm280, %v4054, 0
      %v4090 = vsel %vm280, %v4055, 0
      %v4093 = vsel %vm280, %v4056, 0
      %v4096 = vsel %vm280, %v4057, 0
      %v4099 = vsel %vm280, %v4058, 0
      %v4102 = vsel %vm280, %v4059, 0
      %v4105 = vsel %vm280, %v4060, 0
      %v4108 = vsel %vm280, %v4061, 0
      %v4111 = vsel %vm280, %v4062, 0
      %v4114 = vsel %vm538, %v4064, 0
      %4116 = vmatpush.bf16.msra.mxu0 0
      %4117 = vmatpush.bf16.msra.mxu0 0
      %4118 = vmatpush.bf16.msra.mxu0 0
      %4119 = vmatpush.bf16.msra.mxu0 0
      %4120 = vmatpush.bf16.msra.mxu0 0
      %4121 = vmatpush.bf16.msra.mxu0 0
      %4122 = vmatpush.bf16.msra.mxu0 0
      %4123 = vmatpush.bf16.msra.mxu0 %v4114
      %4124 = vmatmul.bf16.gmra.mxu0 %v4066
      %v4125 = vpop.f32.mrf.mxu0
      %v4126 = vadd.f32 0.0, %v4125
      %v4127 = vpop.f32.mrf.mxu0
      %v4128 = vadd.f32 0.0, %v4127
      %4129 = vmatmul.bf16.gmra.mxu0 %v4069
      %v4130 = vpop.f32.mrf.mxu0
      %v4131 = vadd.f32 0.0, %v4130
      %v4132 = vpop.f32.mrf.mxu0
      %v4133 = vadd.f32 0.0, %v4132
      %4134 = vmatmul.bf16.gmra.mxu0 %v4072
      %v4135 = vpop.f32.mrf.mxu0
      %v4136 = vadd.f32 0.0, %v4135
      %v4137 = vpop.f32.mrf.mxu0
      %v4138 = vadd.f32 0.0, %v4137
      %4139 = vmatmul.bf16.gmra.mxu0 %v4075
      %v4140 = vpop.f32.mrf.mxu0
      %v4141 = vadd.f32 0.0, %v4140
      %v4142 = vpop.f32.mrf.mxu0
      %v4143 = vadd.f32 0.0, %v4142
      %4144 = vmatmul.bf16.gmra.mxu0 %v4078
      %v4145 = vpop.f32.mrf.mxu0
      %v4146 = vadd.f32 0.0, %v4145
      %v4147 = vpop.f32.mrf.mxu0
      %v4148 = vadd.f32 0.0, %v4147
      %4149 = vmatmul.bf16.gmra.mxu0 %v4081
      %v4150 = vpop.f32.mrf.mxu0
      %v4151 = vadd.f32 0.0, %v4150
      %v4152 = vpop.f32.mrf.mxu0
      %v4153 = vadd.f32 0.0, %v4152
      %4154 = vmatmul.bf16.gmra.mxu0 %v4084
      %v4155 = vpop.f32.mrf.mxu0
      %v4156 = vadd.f32 0.0, %v4155
      %v4157 = vpop.f32.mrf.mxu0
      %v4158 = vadd.f32 0.0, %v4157
      %4159 = vmatmul.bf16.gmra.mxu0 %v4087
      %v4160 = vpop.f32.mrf.mxu0
      %v4161 = vadd.f32 0.0, %v4160
      %v4162 = vpop.f32.mrf.mxu0
      %v4163 = vadd.f32 0.0, %v4162
      %4164 = vmatmul.bf16.gmra.mxu0 %v4090
      %v4165 = vpop.f32.mrf.mxu0
      %v4166 = vadd.f32 0.0, %v4165
      %v4167 = vpop.f32.mrf.mxu0
      %v4168 = vadd.f32 0.0, %v4167
      %4169 = vmatmul.bf16.gmra.mxu0 %v4093
      %v4170 = vpop.f32.mrf.mxu0
      %v4171 = vadd.f32 0.0, %v4170
      %v4172 = vpop.f32.mrf.mxu0
      %v4173 = vadd.f32 0.0, %v4172
      %4174 = vmatmul.bf16.gmra.mxu0 %v4096
      %v4175 = vpop.f32.mrf.mxu0
      %v4176 = vadd.f32 0.0, %v4175
      %v4177 = vpop.f32.mrf.mxu0
      %v4178 = vadd.f32 0.0, %v4177
      %4179 = vmatmul.bf16.gmra.mxu0 %v4099
      %v4180 = vpop.f32.mrf.mxu0
      %v4181 = vadd.f32 0.0, %v4180
      %v4182 = vpop.f32.mrf.mxu0
      %v4183 = vadd.f32 0.0, %v4182
      %4184 = vmatmul.bf16.gmra.mxu0 %v4102
      %v4185 = vpop.f32.mrf.mxu0
      %v4186 = vadd.f32 0.0, %v4185
      %v4187 = vpop.f32.mrf.mxu0
      %v4188 = vadd.f32 0.0, %v4187
      %4189 = vmatmul.bf16.gmra.mxu0 %v4105
      %v4190 = vpop.f32.mrf.mxu0
      %v4191 = vadd.f32 0.0, %v4190
      %v4192 = vpop.f32.mrf.mxu0
      %v4193 = vadd.f32 0.0, %v4192
      %4194 = vmatmul.bf16.gmra.mxu0 %v4108
      %v4195 = vpop.f32.mrf.mxu0
      %v4196 = vadd.f32 0.0, %v4195
      %v4197 = vpop.f32.mrf.mxu0
      %v4198 = vadd.f32 0.0, %v4197
      %4199 = vmatmul.bf16.gmra.mxu0 %v4111
      %v4200 = vpop.f32.mrf.mxu0
      %v4201 = vadd.f32 0.0, %v4200
      %v4202 = vpop.f32.mrf.mxu0
      %v4203 = vadd.f32 0.0, %v4202
      %4204 = vdwg.mxu0
      %v4205 = vadd.f32 %v3983, %v4126
      %v4206 = vadd.f32 %v3984, %v4128
      %v4207 = vadd.f32 %v3985, %v4131
      %v4208 = vadd.f32 %v3986, %v4133
      %v4209 = vadd.f32 %v3987, %v4136
      %v4210 = vadd.f32 %v3988, %v4138
      %v4211 = vadd.f32 %v3989, %v4141
      %v4212 = vadd.f32 %v3990, %v4143
      %v4213 = vadd.f32 %v3991, %v4146
      %v4214 = vadd.f32 %v3992, %v4148
      %v4215 = vadd.f32 %v3993, %v4151
      %v4216 = vadd.f32 %v3994, %v4153
      %v4217 = vadd.f32 %v3995, %v4156
      %v4218 = vadd.f32 %v3996, %v4158
      %v4219 = vadd.f32 %v3997, %v4161
      %v4220 = vadd.f32 %v3998, %v4163
      %v4221 = vadd.f32 %v3999, %v4166
      %v4222 = vadd.f32 %v4000, %v4168
      %v4223 = vadd.f32 %v4001, %v4171
      %v4224 = vadd.f32 %v4002, %v4173
      %v4225 = vadd.f32 %v4003, %v4176
      %v4226 = vadd.f32 %v4004, %v4178
      %v4227 = vadd.f32 %v4005, %v4181
      %v4228 = vadd.f32 %v4006, %v4183
      %v4229 = vadd.f32 %v4007, %v4186
      %v4230 = vadd.f32 %v4008, %v4188
      %v4231 = vadd.f32 %v4009, %v4191
      %v4232 = vadd.f32 %v4010, %v4193
      %v4233 = vadd.f32 %v4011, %v4196
      %v4234 = vadd.f32 %v4012, %v4198
      %v4235 = vadd.f32 %v4013, %v4201
      %v4236 = vadd.f32 %v4014, %v4203
      %v4237 = vld [vmem:[%s1659 + $0x2] sm:$0xff]
      %v4238 = vld [vmem:[%s1659 + $0xa] sm:$0xff]
      %v4239 = vld [vmem:[%s1659 + $0x1a] sm:$0xff]
      %v4240 = vld [vmem:[%s1659 + $0x22] sm:$0xff]
      %v4241 = vld [vmem:[%s1659 + $0x32] sm:$0xff]
      %v4242 = vld [vmem:[%s1659 + $0x3a] sm:$0xff]
      %v4243 = vld [vmem:[%s1659 + $0x4a] sm:$0xff]
      %v4244 = vld [vmem:[%s1659 + $0x52] sm:$0xff]
      %v4245 = vld [vmem:[%s1659 + $0x62] sm:$0xff]
      %v4246 = vld [vmem:[%s1659 + $0x6a] sm:$0xff]
      %v4247 = vld [vmem:[%s1659 + $0x7a] sm:$0xff]
      %v4248 = vld [vmem:[%s1659 + $0x82] sm:$0xff]
      %v4249 = vld [vmem:[%s1659 + $0x92] sm:$0xff]
      %v4250 = vld [vmem:[%s1659 + $0x9a] sm:$0xff]
      %v4251 = vld [vmem:[%s1659 + $0xaa] sm:$0xff]
      %v4252 = vld [vmem:[%s1659 + $0xb2] sm:$0xff]
      %v4253 = vld [vmem:[%s1659 + $0xc2] sm:$0xff]
      %v4254 = vld [vmem:[%s1659 + $0xca] sm:$0xff]
      %v4255 = vld [vmem:[%s1659 + $0xda] sm:$0xff]
      %v4256 = vld [vmem:[%s1659 + $0xe2] sm:$0xff]
      %v4257 = vld [vmem:[%s1659 + $0xf2] sm:$0xff]
      %v4258 = vld [vmem:[%s1659 + $0xfa] sm:$0xff]
      %v4259 = vld [vmem:[%s1659 + $0x10a] sm:$0xff]
      %v4260 = vld [vmem:[%s1659 + $0x112] sm:$0xff]
      %v4261 = vld [vmem:[%s1659 + $0x122] sm:$0xff]
      %v4262 = vld [vmem:[%s1659 + $0x12a] sm:$0xff]
      %v4263 = vld [vmem:[%s1659 + $0x13a] sm:$0xff]
      %v4264 = vld [vmem:[%s1659 + $0x142] sm:$0xff]
      %v4265 = vld [vmem:[%s1659 + $0x152] sm:$0xff]
      %v4266 = vld [vmem:[%s1659 + $0x15a] sm:$0xff]
      %v4267 = vld [vmem:[%s1659 + $0x16a] sm:$0xff]
      %v4268 = vld [vmem:[%s1659 + $0x172] sm:$0xff]
      %v4269 = vpack.c.bf16 %v4238, %v4237
      %v4270 = vpack.c.bf16 %v4240, %v4239
      %v4271 = vpack.c.bf16 %v4242, %v4241
      %v4272 = vpack.c.bf16 %v4244, %v4243
      %v4273 = vpack.c.bf16 %v4246, %v4245
      %v4274 = vpack.c.bf16 %v4248, %v4247
      %v4275 = vpack.c.bf16 %v4250, %v4249
      %v4276 = vpack.c.bf16 %v4252, %v4251
      %v4277 = vpack.c.bf16 %v4254, %v4253
      %v4278 = vpack.c.bf16 %v4256, %v4255
      %v4279 = vpack.c.bf16 %v4258, %v4257
      %v4280 = vpack.c.bf16 %v4260, %v4259
      %v4281 = vpack.c.bf16 %v4262, %v4261
      %v4282 = vpack.c.bf16 %v4264, %v4263
      %v4283 = vpack.c.bf16 %v4266, %v4265
      %v4284 = vpack.c.bf16 %v4268, %v4267
      %s4285 = scalar_lea.vmem %s4, 32
      %v4286 = vld [vmem:[%s4285] sm:$0xf]
      %v4288 = vsel %vm280, %v4269, 0
      %v4291 = vsel %vm280, %v4270, 0
      %v4294 = vsel %vm280, %v4271, 0
      %v4297 = vsel %vm280, %v4272, 0
      %v4300 = vsel %vm280, %v4273, 0
      %v4303 = vsel %vm280, %v4274, 0
      %v4306 = vsel %vm280, %v4275, 0
      %v4309 = vsel %vm280, %v4276, 0
      %v4312 = vsel %vm280, %v4277, 0
      %v4315 = vsel %vm280, %v4278, 0
      %v4318 = vsel %vm280, %v4279, 0
      %v4321 = vsel %vm280, %v4280, 0
      %v4324 = vsel %vm280, %v4281, 0
      %v4327 = vsel %vm280, %v4282, 0
      %v4330 = vsel %vm280, %v4283, 0
      %v4333 = vsel %vm280, %v4284, 0
      %v4336 = vsel %vm538, %v4286, 0
      %4338 = vmatpush.bf16.msra.mxu0 0
      %4339 = vmatpush.bf16.msra.mxu0 0
      %4340 = vmatpush.bf16.msra.mxu0 0
      %4341 = vmatpush.bf16.msra.mxu0 0
      %4342 = vmatpush.bf16.msra.mxu0 0
      %4343 = vmatpush.bf16.msra.mxu0 0
      %4344 = vmatpush.bf16.msra.mxu0 0
      %4345 = vmatpush.bf16.msra.mxu0 %v4336
      %4346 = vmatmul.bf16.gmra.mxu0 %v4288
      %v4347 = vpop.f32.mrf.mxu0
      %v4348 = vadd.f32 0.0, %v4347
      %v4349 = vpop.f32.mrf.mxu0
      %v4350 = vadd.f32 0.0, %v4349
      %4351 = vmatmul.bf16.gmra.mxu0 %v4291
      %v4352 = vpop.f32.mrf.mxu0
      %v4353 = vadd.f32 0.0, %v4352
      %v4354 = vpop.f32.mrf.mxu0
      %v4355 = vadd.f32 0.0, %v4354
      %4356 = vmatmul.bf16.gmra.mxu0 %v4294
      %v4357 = vpop.f32.mrf.mxu0
      %v4358 = vadd.f32 0.0, %v4357
      %v4359 = vpop.f32.mrf.mxu0
      %v4360 = vadd.f32 0.0, %v4359
      %4361 = vmatmul.bf16.gmra.mxu0 %v4297
      %v4362 = vpop.f32.mrf.mxu0
      %v4363 = vadd.f32 0.0, %v4362
      %v4364 = vpop.f32.mrf.mxu0
      %v4365 = vadd.f32 0.0, %v4364
      %4366 = vmatmul.bf16.gmra.mxu0 %v4300
      %v4367 = vpop.f32.mrf.mxu0
      %v4368 = vadd.f32 0.0, %v4367
      %v4369 = vpop.f32.mrf.mxu0
      %v4370 = vadd.f32 0.0, %v4369
      %4371 = vmatmul.bf16.gmra.mxu0 %v4303
      %v4372 = vpop.f32.mrf.mxu0
      %v4373 = vadd.f32 0.0, %v4372
      %v4374 = vpop.f32.mrf.mxu0
      %v4375 = vadd.f32 0.0, %v4374
      %4376 = vmatmul.bf16.gmra.mxu0 %v4306
      %v4377 = vpop.f32.mrf.mxu0
      %v4378 = vadd.f32 0.0, %v4377
      %v4379 = vpop.f32.mrf.mxu0
      %v4380 = vadd.f32 0.0, %v4379
      %4381 = vmatmul.bf16.gmra.mxu0 %v4309
      %v4382 = vpop.f32.mrf.mxu0
      %v4383 = vadd.f32 0.0, %v4382
      %v4384 = vpop.f32.mrf.mxu0
      %v4385 = vadd.f32 0.0, %v4384
      %4386 = vmatmul.bf16.gmra.mxu0 %v4312
      %v4387 = vpop.f32.mrf.mxu0
      %v4388 = vadd.f32 0.0, %v4387
      %v4389 = vpop.f32.mrf.mxu0
      %v4390 = vadd.f32 0.0, %v4389
      %4391 = vmatmul.bf16.gmra.mxu0 %v4315
      %v4392 = vpop.f32.mrf.mxu0
      %v4393 = vadd.f32 0.0, %v4392
      %v4394 = vpop.f32.mrf.mxu0
      %v4395 = vadd.f32 0.0, %v4394
      %4396 = vmatmul.bf16.gmra.mxu0 %v4318
      %v4397 = vpop.f32.mrf.mxu0
      %v4398 = vadd.f32 0.0, %v4397
      %v4399 = vpop.f32.mrf.mxu0
      %v4400 = vadd.f32 0.0, %v4399
      %4401 = vmatmul.bf16.gmra.mxu0 %v4321
      %v4402 = vpop.f32.mrf.mxu0
      %v4403 = vadd.f32 0.0, %v4402
      %v4404 = vpop.f32.mrf.mxu0
      %v4405 = vadd.f32 0.0, %v4404
      %4406 = vmatmul.bf16.gmra.mxu0 %v4324
      %v4407 = vpop.f32.mrf.mxu0
      %v4408 = vadd.f32 0.0, %v4407
      %v4409 = vpop.f32.mrf.mxu0
      %v4410 = vadd.f32 0.0, %v4409
      %4411 = vmatmul.bf16.gmra.mxu0 %v4327
      %v4412 = vpop.f32.mrf.mxu0
      %v4413 = vadd.f32 0.0, %v4412
      %v4414 = vpop.f32.mrf.mxu0
      %v4415 = vadd.f32 0.0, %v4414
      %4416 = vmatmul.bf16.gmra.mxu0 %v4330
      %v4417 = vpop.f32.mrf.mxu0
      %v4418 = vadd.f32 0.0, %v4417
      %v4419 = vpop.f32.mrf.mxu0
      %v4420 = vadd.f32 0.0, %v4419
      %4421 = vmatmul.bf16.gmra.mxu0 %v4333
      %v4422 = vpop.f32.mrf.mxu0
      %v4423 = vadd.f32 0.0, %v4422
      %v4424 = vpop.f32.mrf.mxu0
      %v4425 = vadd.f32 0.0, %v4424
      %4426 = vdwg.mxu0
      %v4427 = vadd.f32 %v4205, %v4348
      %v4428 = vadd.f32 %v4206, %v4350
      %v4429 = vadd.f32 %v4207, %v4353
      %v4430 = vadd.f32 %v4208, %v4355
      %v4431 = vadd.f32 %v4209, %v4358
      %v4432 = vadd.f32 %v4210, %v4360
      %v4433 = vadd.f32 %v4211, %v4363
      %v4434 = vadd.f32 %v4212, %v4365
      %v4435 = vadd.f32 %v4213, %v4368
      %v4436 = vadd.f32 %v4214, %v4370
      %v4437 = vadd.f32 %v4215, %v4373
      %v4438 = vadd.f32 %v4216, %v4375
      %v4439 = vadd.f32 %v4217, %v4378
      %v4440 = vadd.f32 %v4218, %v4380
      %v4441 = vadd.f32 %v4219, %v4383
      %v4442 = vadd.f32 %v4220, %v4385
      %v4443 = vadd.f32 %v4221, %v4388
      %v4444 = vadd.f32 %v4222, %v4390
      %v4445 = vadd.f32 %v4223, %v4393
      %v4446 = vadd.f32 %v4224, %v4395
      %v4447 = vadd.f32 %v4225, %v4398
      %v4448 = vadd.f32 %v4226, %v4400
      %v4449 = vadd.f32 %v4227, %v4403
      %v4450 = vadd.f32 %v4228, %v4405
      %v4451 = vadd.f32 %v4229, %v4408
      %v4452 = vadd.f32 %v4230, %v4410
      %v4453 = vadd.f32 %v4231, %v4413
      %v4454 = vadd.f32 %v4232, %v4415
      %v4455 = vadd.f32 %v4233, %v4418
      %v4456 = vadd.f32 %v4234, %v4420
      %v4457 = vadd.f32 %v4235, %v4423
      %v4458 = vadd.f32 %v4236, %v4425
      %v4459 = vld [vmem:[%s5] sm:$0x1]
      %v4461 = vperm.slane %v4459, 0
      %v4463 = vmul.f32 %v4427, %v4461
      %v4464 = vmul.f32 %v4428, %v4461
      %v4465 = vmul.f32 %v4429, %v4461
      %v4466 = vmul.f32 %v4430, %v4461
      %v4467 = vmul.f32 %v4431, %v4461
      %v4468 = vmul.f32 %v4432, %v4461
      %v4469 = vmul.f32 %v4433, %v4461
      %v4470 = vmul.f32 %v4434, %v4461
      %v4471 = vmul.f32 %v4435, %v4461
      %v4472 = vmul.f32 %v4436, %v4461
      %v4473 = vmul.f32 %v4437, %v4461
      %v4474 = vmul.f32 %v4438, %v4461
      %v4475 = vmul.f32 %v4439, %v4461
      %v4476 = vmul.f32 %v4440, %v4461
      %v4477 = vmul.f32 %v4441, %v4461
      %v4478 = vmul.f32 %v4442, %v4461
      %v4479 = vmul.f32 %v4443, %v4461
      %v4480 = vmul.f32 %v4444, %v4461
      %v4481 = vmul.f32 %v4445, %v4461
      %v4482 = vmul.f32 %v4446, %v4461
      %v4483 = vmul.f32 %v4447, %v4461
      %v4484 = vmul.f32 %v4448, %v4461
      %v4485 = vmul.f32 %v4449, %v4461
      %v4486 = vmul.f32 %v4450, %v4461
      %v4487 = vmul.f32 %v4451, %v4461
      %v4488 = vmul.f32 %v4452, %v4461
      %v4489 = vmul.f32 %v4453, %v4461
      %v4490 = vmul.f32 %v4454, %v4461
      %v4491 = vmul.f32 %v4455, %v4461
      %v4492 = vmul.f32 %v4456, %v4461
      %v4493 = vmul.f32 %v4457, %v4461
      %v4494 = vmul.f32 %v4458, %v4461
      %v4495 = vld [vmem:[%s6] sm:$0x1]
      %v4497 = vperm.slane %v4495, 0
      %v4499 = vadd.f32 %v4463, %v4497
      %v4500 = vadd.f32 %v4464, %v4497
      %v4501 = vadd.f32 %v4465, %v4497
      %v4502 = vadd.f32 %v4466, %v4497
      %v4503 = vadd.f32 %v4467, %v4497
      %v4504 = vadd.f32 %v4468, %v4497
      %v4505 = vadd.f32 %v4469, %v4497
      %v4506 = vadd.f32 %v4470, %v4497
      %v4507 = vadd.f32 %v4471, %v4497
      %v4508 = vadd.f32 %v4472, %v4497
      %v4509 = vadd.f32 %v4473, %v4497
      %v4510 = vadd.f32 %v4474, %v4497
      %v4511 = vadd.f32 %v4475, %v4497
      %v4512 = vadd.f32 %v4476, %v4497
      %v4513 = vadd.f32 %v4477, %v4497
      %v4514 = vadd.f32 %v4478, %v4497
      %v4515 = vadd.f32 %v4479, %v4497
      %v4516 = vadd.f32 %v4480, %v4497
      %v4517 = vadd.f32 %v4481, %v4497
      %v4518 = vadd.f32 %v4482, %v4497
      %v4519 = vadd.f32 %v4483, %v4497
      %v4520 = vadd.f32 %v4484, %v4497
      %v4521 = vadd.f32 %v4485, %v4497
      %v4522 = vadd.f32 %v4486, %v4497
      %v4523 = vadd.f32 %v4487, %v4497
      %v4524 = vadd.f32 %v4488, %v4497
      %v4525 = vadd.f32 %v4489, %v4497
      %v4526 = vadd.f32 %v4490, %v4497
      %v4527 = vadd.f32 %v4491, %v4497
      %v4528 = vadd.f32 %v4492, %v4497
      %v4529 = vadd.f32 %v4493, %v4497
      %v4530 = vadd.f32 %v4494, %v4497
      %vm4531 = vcmp.ge.f32.partialorder %v4499, 0.0
      %vm4532 = vcmp.ge.f32.partialorder %v4500, 0.0
      %vm4533 = vcmp.ge.f32.partialorder %v4501, 0.0
      %vm4534 = vcmp.ge.f32.partialorder %v4502, 0.0
      %vm4535 = vcmp.ge.f32.partialorder %v4503, 0.0
      %vm4536 = vcmp.ge.f32.partialorder %v4504, 0.0
      %vm4537 = vcmp.ge.f32.partialorder %v4505, 0.0
      %vm4538 = vcmp.ge.f32.partialorder %v4506, 0.0
      %vm4539 = vcmp.ge.f32.partialorder %v4507, 0.0
      %vm4540 = vcmp.ge.f32.partialorder %v4508, 0.0
      %vm4541 = vcmp.ge.f32.partialorder %v4509, 0.0
      %vm4542 = vcmp.ge.f32.partialorder %v4510, 0.0
      %vm4543 = vcmp.ge.f32.partialorder %v4511, 0.0
      %vm4544 = vcmp.ge.f32.partialorder %v4512, 0.0
      %vm4545 = vcmp.ge.f32.partialorder %v4513, 0.0
      %vm4546 = vcmp.ge.f32.partialorder %v4514, 0.0
      %vm4547 = vcmp.ge.f32.partialorder %v4515, 0.0
      %vm4548 = vcmp.ge.f32.partialorder %v4516, 0.0
      %vm4549 = vcmp.ge.f32.partialorder %v4517, 0.0
      %vm4550 = vcmp.ge.f32.partialorder %v4518, 0.0
      %vm4551 = vcmp.ge.f32.partialorder %v4519, 0.0
      %vm4552 = vcmp.ge.f32.partialorder %v4520, 0.0
      %vm4553 = vcmp.ge.f32.partialorder %v4521, 0.0
      %vm4554 = vcmp.ge.f32.partialorder %v4522, 0.0
      %vm4555 = vcmp.ge.f32.partialorder %v4523, 0.0
      %vm4556 = vcmp.ge.f32.partialorder %v4524, 0.0
      %vm4557 = vcmp.ge.f32.partialorder %v4525, 0.0
      %vm4558 = vcmp.ge.f32.partialorder %v4526, 0.0
      %vm4559 = vcmp.ge.f32.partialorder %v4527, 0.0
      %vm4560 = vcmp.ge.f32.partialorder %v4528, 0.0
      %vm4561 = vcmp.ge.f32.partialorder %v4529, 0.0
      %vm4562 = vcmp.ge.f32.partialorder %v4530, 0.0
      %v4563 = vmul.f32 %v4499, 0.01
      %v4564 = vmul.f32 %v4500, 0.01
      %v4565 = vmul.f32 %v4501, 0.01
      %v4566 = vmul.f32 %v4502, 0.01
      %v4567 = vmul.f32 %v4503, 0.01
      %v4568 = vmul.f32 %v4504, 0.01
      %v4569 = vmul.f32 %v4505, 0.01
      %v4570 = vmul.f32 %v4506, 0.01
      %v4571 = vmul.f32 %v4507, 0.01
      %v4572 = vmul.f32 %v4508, 0.01
      %v4573 = vmul.f32 %v4509, 0.01
      %v4574 = vmul.f32 %v4510, 0.01
      %v4575 = vmul.f32 %v4511, 0.01
      %v4576 = vmul.f32 %v4512, 0.01
      %v4577 = vmul.f32 %v4513, 0.01
      %v4578 = vmul.f32 %v4514, 0.01
      %v4579 = vmul.f32 %v4515, 0.01
      %v4580 = vmul.f32 %v4516, 0.01
      %v4581 = vmul.f32 %v4517, 0.01
      %v4582 = vmul.f32 %v4518, 0.01
      %v4583 = vmul.f32 %v4519, 0.01
      %v4584 = vmul.f32 %v4520, 0.01
      %v4585 = vmul.f32 %v4521, 0.01
      %v4586 = vmul.f32 %v4522, 0.01
      %v4587 = vmul.f32 %v4523, 0.01
      %v4588 = vmul.f32 %v4524, 0.01
      %v4589 = vmul.f32 %v4525, 0.01
      %v4590 = vmul.f32 %v4526, 0.01
      %v4591 = vmul.f32 %v4527, 0.01
      %v4592 = vmul.f32 %v4528, 0.01
      %v4593 = vmul.f32 %v4529, 0.01
      %v4594 = vmul.f32 %v4530, 0.01
      %v4595 = vsel %vm4531, %v4499, %v4563
      %v4596 = vsel %vm4532, %v4500, %v4564
      %v4597 = vsel %vm4533, %v4501, %v4565
      %v4598 = vsel %vm4534, %v4502, %v4566
      %v4599 = vsel %vm4535, %v4503, %v4567
      %v4600 = vsel %vm4536, %v4504, %v4568
      %v4601 = vsel %vm4537, %v4505, %v4569
      %v4602 = vsel %vm4538, %v4506, %v4570
      %v4603 = vsel %vm4539, %v4507, %v4571
      %v4604 = vsel %vm4540, %v4508, %v4572
      %v4605 = vsel %vm4541, %v4509, %v4573
      %v4606 = vsel %vm4542, %v4510, %v4574
      %v4607 = vsel %vm4543, %v4511, %v4575
      %v4608 = vsel %vm4544, %v4512, %v4576
      %v4609 = vsel %vm4545, %v4513, %v4577
      %v4610 = vsel %vm4546, %v4514, %v4578
      %v4611 = vsel %vm4547, %v4515, %v4579
      %v4612 = vsel %vm4548, %v4516, %v4580
      %v4613 = vsel %vm4549, %v4517, %v4581
      %v4614 = vsel %vm4550, %v4518, %v4582
      %v4615 = vsel %vm4551, %v4519, %v4583
      %v4616 = vsel %vm4552, %v4520, %v4584
      %v4617 = vsel %vm4553, %v4521, %v4585
      %v4618 = vsel %vm4554, %v4522, %v4586
      %v4619 = vsel %vm4555, %v4523, %v4587
      %v4620 = vsel %vm4556, %v4524, %v4588
      %v4621 = vsel %vm4557, %v4525, %v4589
      %v4622 = vsel %vm4558, %v4526, %v4590
      %v4623 = vsel %vm4559, %v4527, %v4591
      %v4624 = vsel %vm4560, %v4528, %v4592
      %v4625 = vsel %vm4561, %v4529, %v4593
      %v4626 = vsel %vm4562, %v4530, %v4594
      %4627 = vst.msk [vmem:[%s278] sm:$0xff] %vm280, %v4595
      %4628 = vst.msk [vmem:[%s278 + $0x8] sm:$0xff] %vm280, %v4596
      %4629 = vst.msk [vmem:[%s278 + $0x10] sm:$0xff] %vm280, %v4597
      %4630 = vst.msk [vmem:[%s278 + $0x18] sm:$0xff] %vm280, %v4598
      %4631 = vst.msk [vmem:[%s278 + $0x20] sm:$0xff] %vm280, %v4599
      %4632 = vst.msk [vmem:[%s278 + $0x28] sm:$0xff] %vm280, %v4600
      %4633 = vst.msk [vmem:[%s278 + $0x30] sm:$0xff] %vm280, %v4601
      %4634 = vst.msk [vmem:[%s278 + $0x38] sm:$0xff] %vm280, %v4602
      %4635 = vst.msk [vmem:[%s278 + $0x40] sm:$0xff] %vm280, %v4603
      %4636 = vst.msk [vmem:[%s278 + $0x48] sm:$0xff] %vm280, %v4604
      %4637 = vst.msk [vmem:[%s278 + $0x50] sm:$0xff] %vm280, %v4605
      %4638 = vst.msk [vmem:[%s278 + $0x58] sm:$0xff] %vm280, %v4606
      %4639 = vst.msk [vmem:[%s278 + $0x60] sm:$0xff] %vm280, %v4607
      %4640 = vst.msk [vmem:[%s278 + $0x68] sm:$0xff] %vm280, %v4608
      %4641 = vst.msk [vmem:[%s278 + $0x70] sm:$0xff] %vm280, %v4609
      %4642 = vst.msk [vmem:[%s278 + $0x78] sm:$0xff] %vm280, %v4610
      %4643 = vst.msk [vmem:[%s278 + $0x80] sm:$0xff] %vm280, %v4611
      %4644 = vst.msk [vmem:[%s278 + $0x88] sm:$0xff] %vm280, %v4612
      %4645 = vst.msk [vmem:[%s278 + $0x90] sm:$0xff] %vm280, %v4613
      %4646 = vst.msk [vmem:[%s278 + $0x98] sm:$0xff] %vm280, %v4614
      %4647 = vst.msk [vmem:[%s278 + $0xa0] sm:$0xff] %vm280, %v4615
      %4648 = vst.msk [vmem:[%s278 + $0xa8] sm:$0xff] %vm280, %v4616
      %4649 = vst.msk [vmem:[%s278 + $0xb0] sm:$0xff] %vm280, %v4617
      %4650 = vst.msk [vmem:[%s278 + $0xb8] sm:$0xff] %vm280, %v4618
      %4651 = vst.msk [vmem:[%s278 + $0xc0] sm:$0xff] %vm280, %v4619
      %4652 = vst.msk [vmem:[%s278 + $0xc8] sm:$0xff] %vm280, %v4620
      %4653 = vst.msk [vmem:[%s278 + $0xd0] sm:$0xff] %vm280, %v4621
      %4654 = vst.msk [vmem:[%s278 + $0xd8] sm:$0xff] %vm280, %v4622
      %4655 = vst.msk [vmem:[%s278 + $0xe0] sm:$0xff] %vm280, %v4623
      %4656 = vst.msk [vmem:[%s278 + $0xe8] sm:$0xff] %vm280, %v4624
      %4657 = vst.msk [vmem:[%s278 + $0xf0] sm:$0xff] %vm280, %v4625
      %4658 = vst.msk [vmem:[%s278 + $0xf8] sm:$0xff] %vm280, %v4626
      %p4659 = scmp.lt.s32.totalorder %s18, 1
      %s4660 = scalar_select %p4659, %s18, 1
      %s4661 = smul.addr %s4660, 32
      %s4662 = smul.addr %s4661, 8
      %s4663 = scalar_lea.vmem %s7, %s4662
      // Predicated region
      $region49: #{tpu_custom_call.1} parent=47 // pred_check
        %p4664 = pneg %p188
      $region50: #{tpu_custom_call.1} parent=47 // pred_check_branch
        %4666 = sbr.rel (%p4664) target = $region52
      $region51: #{tpu_custom_call.1} parent=47 // pred_region
        _
      $region52: #{tpu_custom_call.1} parent=47 // pred_fallthru
        _
    $region48: #{tpu_custom_call.1} parent=5 // pred_fallthru
      _
    %p4667 = scmp.le.s32.totalorder 2, %s13
    // Predicated region
    $region53: #{tpu_custom_call.1} parent=5 // pred_check
      %p4668 = pneg %p4667
    $region54: #{tpu_custom_call.1} parent=5 // pred_check_branch
      %4670 = sbr.rel (%p4668) target = $region56
    $region55: #{tpu_custom_call.1} parent=5 // pred_region
      %s4671 = ssub.s32 %s13, 2
      // Predicated region
      $region57: #{tpu_custom_call.1} parent=55 // pred_check
        %p4672 = pneg %p194
      $region58: #{tpu_custom_call.1} parent=55 // pred_check_branch
        %4674 = sbr.rel (%p4672) target = $region60
      $region59: #{tpu_custom_call.1} parent=55 // pred_region
        %p4675 = scmp.lt.s32.totalorder %s19, 1
        %s4676 = scalar_select %p4675, %s19, 1
        %s4677 = smul.addr %s4676, 32
        %s4678 = smul.addr %s4677, 8
        %s4679 = scalar_lea.vmem %s7, %s4678
      $region60: #{tpu_custom_call.1} parent=55 // pred_fallthru
        _
    $region56: #{tpu_custom_call.1} parent=5 // pred_fallthru
      _
  $region6: #{tpu_custom_call.1} parent=0 // loop_footer
    %s17 = sadd.s32 1, %s13
  $region7: #{tpu_custom_call.1} parent=0 // loop_footer_branch
    %12 = sbr.rel target = $region3
  $region8: #{tpu_custom_call.1} parent=0 // loop_exit
    _

</llo_original>
